<compile_context>
chip_gen: v5e
topology: v5e:2x2
jax: 0.10.0
libtpu: 0.0.40
codegen_flags: <defaults>
</compile_context>

<pallas_src>
import jax
import jax.numpy as jnp
from jax import lax
from jax.experimental import pallas as pl
from jax.experimental.pallas import tpu as pltpu

H = W = 16          # spatial
C = 32              # n_feats (must be >= reduction so C // 16 >= 1)
RED = 16            # CALayer reduction
CR = C // RED       # squeezed channels in CALayer (= 2)
K = 3               # kernel_size (3x3 conv, padding=1 -> "same")
HW = H * W
RES_SCALE = 1.0     # module default res_scale
HIGH = lax.Precision.HIGHEST   # reference only


def _boundary_masks(bt):
    """(9, bt*HW) f32 {0,1}: validity of the source pixel for each tap at each packed
    position.  Periodic in HW, so one mask serves every image in the tile and also prevents
    cross-image leakage when bt images share the packed spatial axis."""
    p = jnp.arange(bt * HW, dtype=jnp.int32) % HW
    h = p // W
    w = p % W
    rows = []
    for kh in range(K):
        for kw in range(K):
            dh, dw = kh - 1, kw - 1
            valid = (h + dh >= 0) & (h + dh < H) & (w + dw >= 0) & (w + dw < W)
            rows.append(valid.astype(jnp.float32))
    return jnp.stack(rows, axis=0)


def _pool_expand(bt):
    """P (n, bt): block-diagonal 1/HW per-image mean-pool matrix.
       E (bt, n): block one-hot matrix broadcasting a per-image scalar back over its pixels."""
    n = bt * HW
    img = jnp.arange(n, dtype=jnp.int32) // HW
    onehot = (img[:, None] == jnp.arange(bt, dtype=jnp.int32)[None, :]).astype(jnp.float32)
    return onehot / float(HW), onehot.T


def _make_kernel(bt, bf16_taps):
    n = bt * HW  # packed (lane) width of one grid step

    def kernel(x_ref, m_ref, p_ref, e_ref, w1_ref, b1_ref, w2_ref, b2_ref,
               caw1_ref, cab1_ref, caw2_ref, cab2_ref, o_ref, cols_ref):
        x = x_ref[...]                                        # (C, n) f32

        def fill_cols(v):
            # Write the 9 shifted+masked taps of v into the shared cols scratch (9*C, n) bf16.
            for kh in range(K):
                for kw in range(K):
                    t = kh * K + kw
                    d = (kh - 1) * W + (kw - 1)
                    shifted = pltpu.roll(v, shift=(-d) % n, axis=1) if d != 0 else v  # XLU
                    if bf16_taps:
                        tap = shifted.astype(jnp.bfloat16)
                        if d != 0:                      # bf16 VALU mask-mul (v6e/v7x)
                            tap = tap * m_ref[t:t + 1, :].astype(jnp.bfloat16)
                    else:
                        if d != 0:                      # f32 VALU mask-mul (v5e: no bf16 VPU)
                            shifted = shifted * m_ref[t:t + 1, :]
                        tap = shifted.astype(jnp.bfloat16)
                    cols_ref[t * C:(t + 1) * C, :] = tap

        def conv3x3(v, w_ref, b_ref):
            fill_cols(v)
            # single K=288 bf16 matmul, f32 accumulation
            return jnp.dot(w_ref[...], cols_ref[...],
                           preferred_element_type=jnp.float32) + b_ref[...]

        h1 = jnp.maximum(conv3x3(x, w1_ref, b1_ref), 0.0)     # conv -> ReLU
        h2 = conv3x3(h1, w2_ref, b2_ref)                      # conv

        # CALayer, all images at once: per-image mean pool via block-diagonal P (n, bt).
        y = jnp.dot(h2, p_ref[...], preferred_element_type=jnp.float32)          # (C, bt)
        z = jnp.maximum(jnp.dot(caw1_ref[...], y, preferred_element_type=jnp.float32)
                        + cab1_ref[...], 0.0)                                     # (CR, bt)
        s = jax.nn.sigmoid(jnp.dot(caw2_ref[...], z, preferred_element_type=jnp.float32)
                           + cab2_ref[...])                                       # (C, bt)
        if RES_SCALE != 1.0:
            s = s * RES_SCALE          # fold res_scale while still (C, bt); dropped when 1.0
        # broadcast per-image channel scales back to (C, n) with the block one-hot E (bt, n)
        sx = jnp.dot(s, e_ref[...], preferred_element_type=jnp.float32)           # (C, n)

        o_ref[...] = (h2 * sx + x).astype(o_ref.dtype)        # single lane-dense store

    return kernel


def _choose_tiling(batch, device_kind):
    """(grid_b, bt): one step on 1-TC chips; only shard across v7x's two TensorCores when
    each core still gets >= 2048 packed lanes; cap bt so the step fits VMEM comfortably."""
    max_bt = 64 if ("v6" in device_kind or "v7" in device_kind) else 32
    grid_b = 1
    while batch % grid_b != 0 or batch // grid_b > max_bt:
        grid_b += 1
    if ("v7" in device_kind and grid_b == 1 and batch % 2 == 0
            and (batch // 2) * HW >= 2048):
        grid_b = 2
    return grid_b, batch // grid_b


def res_attention_block(x_nchw, params):
    B = x_nchw.shape[0]
    try:
        kind = jax.devices()[0].device_kind.lower()
    except Exception:
        kind = ""
    bf16_taps = ("v6" in kind) or ("v7" in kind)        # bf16 VALU available
    grid_b, bt = _choose_tiling(B, kind)
    n = bt * HW

    # NCHW -> (C, B*HW), images contiguous along the packed (lane) axis.
    x = jnp.transpose(x_nchw, (1, 0, 2, 3)).reshape(C, B * HW).astype(jnp.float32)
    masks = _boundary_masks(bt)                          # (9, n) f32
    pool, expand = _pool_expand(bt)                      # (n, bt) / (bt, n) f32

    # conv weights (tap, Cin, Cout) -> im2col matrices (Cout, 9*Cin), bf16 MXU operands.
    w1m = jnp.transpose(params["w1"], (2, 0, 1)).reshape(C, K * K * C).astype(jnp.bfloat16)
    w2m = jnp.transpose(params["w2"], (2, 0, 1)).reshape(C, K * K * C).astype(jnp.bfloat16)
    b1 = params["b1"].reshape(C, 1)
    b2 = params["b2"].reshape(C, 1)
    caw1 = params["caw1"].T              # (CR, C)
    cab1 = params["cab1"].reshape(CR, 1)
    caw2 = params["caw2"].T              # (C, CR)
    cab2 = params["cab2"].reshape(C, 1)

    def full(shape):
        return pl.BlockSpec(shape, lambda g, _n=len(shape): (0,) * _n)

    flops = 2 * (2 * K * K * C) * C * B * HW + 4 * C * B * HW
    cost = pl.CostEstimate(flops=int(flops), transcendentals=int(B * C),
                           bytes_accessed=int(2 * C * B * HW * 4 + 2 * C * K * K * C * 2))
    # Only raise the scoped VMEM limit when the packed tile is big (leave headroom on v7x).
    vmem_limit = 48 * 1024 * 1024 if n >= 8192 else None

    out = pl.pallas_call(
        _make_kernel(bt, bf16_taps),
        out_shape=jax.ShapeDtypeStruct((C, B * HW), jnp.float32),
        grid_spec=pltpu.PrefetchScalarGridSpec(
            num_scalar_prefetch=0,
            grid=(grid_b,),
            in_specs=[
                pl.BlockSpec((C, n), lambda g: (0, g)),      # x (one batch tile per step)
                full((K * K, n)),                            # boundary masks (shared)
                full((n, bt)),                               # pooling matrix P
                full((bt, n)),                               # expand matrix E
                full((C, K * K * C)), full((C, 1)),          # conv1 weight / bias
                full((C, K * K * C)), full((C, 1)),          # conv2 weight / bias
                full((CR, C)), full((CR, 1)),                # CALayer squeeze
                full((C, CR)), full((C, 1)),                 # CALayer excite
            ],
            out_specs=pl.BlockSpec((C, n), lambda g: (0, g)),
            scratch_shapes=[pltpu.VMEM((K * K * C, n), jnp.bfloat16)],   # shared im2col cols
        ),
        compiler_params=pltpu.CompilerParams(
            dimension_semantics=("parallel",),
            vmem_limit_bytes=vmem_limit),
        cost_estimate=cost,
    )(x, masks, pool, expand, w1m, b1, w2m, b2, caw1, cab1, caw2, cab2)

    return jnp.transpose(out.reshape(C, B, H, W), (1, 0, 2, 3))


def ref_forward(x_nchw, params):
    """Pure-JAX reference (same semantics as the PyTorch module), f32/HIGHEST."""
    x = jnp.transpose(x_nchw, (0, 2, 3, 1))  # NHWC

    def conv3x3(inp, w9, b):
        xp = jnp.pad(inp, ((0, 0), (1, 1), (1, 1), (0, 0)))
        out = jnp.zeros_like(inp)
        for kh in range(K):
            for kw in range(K):
                out = out + jnp.einsum('bhwc,cd->bhwd',
                                       xp[:, kh:kh + H, kw:kw + W, :],
                                       w9[kh * K + kw], precision=HIGH)
        return out + b

    h1 = jax.nn.relu(conv3x3(x, params["w1"], params["b1"]))
    h2 = conv3x3(h1, params["w2"], params["b2"])
    y = jnp.mean(h2, axis=(1, 2), keepdims=True)                        # (B,1,1,C)
    z = jax.nn.relu(jnp.einsum('bijc,cd->bijd', y, params["caw1"],
                               precision=HIGH) + params["cab1"])
    s = jax.nn.sigmoid(jnp.einsum('bijd,dc->bijc', z, params["caw2"],
                                  precision=HIGH) + params["cab2"])
    res = h2 * s * RES_SCALE + x
    return jnp.transpose(res, (0, 3, 1, 2))


def init_params(key):
    ks = jax.random.split(key, 8)

    def w(k, shape, fan_in):
        return jax.random.normal(k, shape, jnp.float32) / jnp.sqrt(float(fan_in))

    return dict(
        w1=w(ks[0], (K * K, C, C), K * K * C),   # conv1 weight, tap-major (9, Cin, Cout)
        b1=w(ks[1], (C,), C),
        b2=w(ks[3], (C,), C),
        w2=w(ks[2], (K * K, C, C), K * K * C),   # conv2 weight
        caw1=w(ks[4], (C, CR), C),               # CALayer 1x1 conv (squeeze)
        cab1=w(ks[5], (CR,), CR),
        caw2=w(ks[6], (CR, C), CR),              # CALayer 1x1 conv (excite)
        cab2=w(ks[7], (C,), C),
    )


if __name__ == "__main__":
    key = jax.random.PRNGKey(0)
    kx, kp = jax.random.split(key)
    B = 2
    x = jax.random.normal(kx, (B, C, H, W), jnp.float32)   # NCHW, like PyTorch
    params = init_params(kp)

    out = jax.block_until_ready(res_attention_block(x, params))
    ref = ref_forward(x, params)

    assert out.shape == x.shape, (out.shape, x.shape)
    err = float(jnp.max(jnp.abs(out - ref)))
    assert jnp.allclose(out, ref, atol=1e-2, rtol=1e-2), f"max abs err {err}"
    print("KERNEL_OK")
</pallas_src>

<mosaic_0001>
module attributes {stable_mosaic.version = 11 : i64} {
  func.func @kernel(%arg0: i32, %arg1: memref<32x512xf32, #tpu.memory_space<vmem>>, %arg2: memref<9x512xf32, #tpu.memory_space<vmem>>, %arg3: memref<512x2xf32, #tpu.memory_space<vmem>>, %arg4: memref<2x512xf32, #tpu.memory_space<vmem>>, %arg5: memref<32x288xbf16, #tpu.memory_space<vmem>>, %arg6: memref<32x1xf32, #tpu.memory_space<vmem>>, %arg7: memref<32x288xbf16, #tpu.memory_space<vmem>>, %arg8: memref<32x1xf32, #tpu.memory_space<vmem>>, %arg9: memref<2x32xf32, #tpu.memory_space<vmem>>, %arg10: memref<2x1xf32, #tpu.memory_space<vmem>>, %arg11: memref<32x2xf32, #tpu.memory_space<vmem>>, %arg12: memref<32x1xf32, #tpu.memory_space<vmem>>, %arg13: memref<32x512xf32, #tpu.memory_space<vmem>>, %arg14: memref<288x512xbf16, #tpu.memory_space<vmem>>) attributes {dimension_semantics = [#tpu.dimension_semantics<parallel>], iteration_bounds = array<i64: 1>, scalar_prefetch = 0 : i64, scratch_operands = 1 : i64, tpu.core_type = #tpu.core_type<tc>, window_params = [{transform_indices = @transform_0, window_bounds = array<i64: 32, 512>}, {pipeline_mode = #tpu.pipeline_mode<synchronous>, transform_indices = @transform_1, window_bounds = array<i64: 9, 512>}, {pipeline_mode = #tpu.pipeline_mode<synchronous>, transform_indices = @transform_2, window_bounds = array<i64: 512, 2>}, {pipeline_mode = #tpu.pipeline_mode<synchronous>, transform_indices = @transform_3, window_bounds = array<i64: 2, 512>}, {pipeline_mode = #tpu.pipeline_mode<synchronous>, transform_indices = @transform_4, window_bounds = array<i64: 32, 288>}, {pipeline_mode = #tpu.pipeline_mode<synchronous>, transform_indices = @transform_5, window_bounds = array<i64: 32, 1>}, {pipeline_mode = #tpu.pipeline_mode<synchronous>, transform_indices = @transform_6, window_bounds = array<i64: 32, 288>}, {pipeline_mode = #tpu.pipeline_mode<synchronous>, transform_indices = @transform_7, window_bounds = array<i64: 32, 1>}, {pipeline_mode = #tpu.pipeline_mode<synchronous>, transform_indices = @transform_8, window_bounds = array<i64: 2, 32>}, {pipeline_mode = #tpu.pipeline_mode<synchronous>, transform_indices = @transform_9, window_bounds = array<i64: 2, 1>}, {pipeline_mode = #tpu.pipeline_mode<synchronous>, transform_indices = @transform_10, window_bounds = array<i64: 32, 2>}, {pipeline_mode = #tpu.pipeline_mode<synchronous>, transform_indices = @transform_11, window_bounds = array<i64: 32, 1>}, {transform_indices = @transform_12, window_bounds = array<i64: 32, 512>}]} {
    %c0 = arith.constant 0 : index
    %c0_0 = arith.constant 0 : index
    %0 = vector.load %arg1[%c0, %c0_0] : memref<32x512xf32, #tpu.memory_space<vmem>>, vector<32x512xf32>
    %c17_i32 = arith.constant 17 : i32
    %1 = tpu.dynamic_rotate %0 by %c17_i32 dim 1 : vector<32x512xf32>, i32 -> vector<32x512xf32>
    %c0_1 = arith.constant 0 : index
    %c0_2 = arith.constant 0 : index
    %2 = vector.load %arg2[%c0_1, %c0_2] : memref<9x512xf32, #tpu.memory_space<vmem>>, vector<1x512xf32>
    %3 = vector.broadcast %2 : vector<1x512xf32> to vector<32x512xf32>
    %4 = arith.mulf %1, %3 : vector<32x512xf32>
    %5 = arith.truncf %4 : vector<32x512xf32> to vector<32x512xbf16>
    %c0_3 = arith.constant 0 : index
    %c0_4 = arith.constant 0 : index
    %6 = vector.load %arg14[%c0_3, %c0_4] : memref<288x512xbf16, #tpu.memory_space<vmem>>, vector<32x512xbf16>
    tpu.vector_store %arg14[%c0_3, %c0_4], %5 {strides = array<i32>} : memref<288x512xbf16, #tpu.memory_space<vmem>>, vector<32x512xbf16>,
    %c16_i32 = arith.constant 16 : i32
    %7 = tpu.dynamic_rotate %0 by %c16_i32 dim 1 : vector<32x512xf32>, i32 -> vector<32x512xf32>
    %c1 = arith.constant 1 : index
    %c0_5 = arith.constant 0 : index
    %8 = vector.load %arg2[%c1, %c0_5] : memref<9x512xf32, #tpu.memory_space<vmem>>, vector<1x512xf32>
    %9 = vector.broadcast %8 : vector<1x512xf32> to vector<32x512xf32>
    %10 = arith.mulf %7, %9 : vector<32x512xf32>
    %11 = arith.truncf %10 : vector<32x512xf32> to vector<32x512xbf16>
    %c32 = arith.constant 32 : index
    %c0_6 = arith.constant 0 : index
    %12 = vector.load %arg14[%c32, %c0_6] : memref<288x512xbf16, #tpu.memory_space<vmem>>, vector<32x512xbf16>
    tpu.vector_store %arg14[%c32, %c0_6], %11 {strides = array<i32>} : memref<288x512xbf16, #tpu.memory_space<vmem>>, vector<32x512xbf16>,
    %c15_i32 = arith.constant 15 : i32
    %13 = tpu.dynamic_rotate %0 by %c15_i32 dim 1 : vector<32x512xf32>, i32 -> vector<32x512xf32>
    %c2 = arith.constant 2 : index
    %c0_7 = arith.constant 0 : index
    %14 = vector.load %arg2[%c2, %c0_7] : memref<9x512xf32, #tpu.memory_space<vmem>>, vector<1x512xf32>
    %15 = vector.broadcast %14 : vector<1x512xf32> to vector<32x512xf32>
    %16 = arith.mulf %13, %15 : vector<32x512xf32>
    %17 = arith.truncf %16 : vector<32x512xf32> to vector<32x512xbf16>
    %c64 = arith.constant 64 : index
    %c0_8 = arith.constant 0 : index
    %18 = vector.load %arg14[%c64, %c0_8] : memref<288x512xbf16, #tpu.memory_space<vmem>>, vector<32x512xbf16>
    tpu.vector_store %arg14[%c64, %c0_8], %17 {strides = array<i32>} : memref<288x512xbf16, #tpu.memory_space<vmem>>, vector<32x512xbf16>,
    %c1_i32 = arith.constant 1 : i32
    %19 = tpu.dynamic_rotate %0 by %c1_i32 dim 1 : vector<32x512xf32>, i32 -> vector<32x512xf32>
    %c3 = arith.constant 3 : index
    %c0_9 = arith.constant 0 : index
    %20 = vector.load %arg2[%c3, %c0_9] : memref<9x512xf32, #tpu.memory_space<vmem>>, vector<1x512xf32>
    %21 = vector.broadcast %20 : vector<1x512xf32> to vector<32x512xf32>
    %22 = arith.mulf %19, %21 : vector<32x512xf32>
    %23 = arith.truncf %22 : vector<32x512xf32> to vector<32x512xbf16>
    %c96 = arith.constant 96 : index
    %c0_10 = arith.constant 0 : index
    %24 = vector.load %arg14[%c96, %c0_10] : memref<288x512xbf16, #tpu.memory_space<vmem>>, vector<32x512xbf16>
    tpu.vector_store %arg14[%c96, %c0_10], %23 {strides = array<i32>} : memref<288x512xbf16, #tpu.memory_space<vmem>>, vector<32x512xbf16>,
    %25 = arith.truncf %0 : vector<32x512xf32> to vector<32x512xbf16>
    %c128 = arith.constant 128 : index
    %c0_11 = arith.constant 0 : index
    %26 = vector.load %arg14[%c128, %c0_11] : memref<288x512xbf16, #tpu.memory_space<vmem>>, vector<32x512xbf16>
    tpu.vector_store %arg14[%c128, %c0_11], %25 {strides = array<i32>} : memref<288x512xbf16, #tpu.memory_space<vmem>>, vector<32x512xbf16>,
    %c511_i32 = arith.constant 511 : i32
    %27 = tpu.dynamic_rotate %0 by %c511_i32 dim 1 : vector<32x512xf32>, i32 -> vector<32x512xf32>
    %c5 = arith.constant 5 : index
    %c0_12 = arith.constant 0 : index
    %28 = vector.load %arg2[%c5, %c0_12] : memref<9x512xf32, #tpu.memory_space<vmem>>, vector<1x512xf32>
    %29 = vector.broadcast %28 : vector<1x512xf32> to vector<32x512xf32>
    %30 = arith.mulf %27, %29 : vector<32x512xf32>
    %31 = arith.truncf %30 : vector<32x512xf32> to vector<32x512xbf16>
    %c160 = arith.constant 160 : index
    %c0_13 = arith.constant 0 : index
    %32 = vector.load %arg14[%c160, %c0_13] : memref<288x512xbf16, #tpu.memory_space<vmem>>, vector<32x512xbf16>
    tpu.vector_store %arg14[%c160, %c0_13], %31 {strides = array<i32>} : memref<288x512xbf16, #tpu.memory_space<vmem>>, vector<32x512xbf16>,
    %c497_i32 = arith.constant 497 : i32
    %33 = tpu.dynamic_rotate %0 by %c497_i32 dim 1 : vector<32x512xf32>, i32 -> vector<32x512xf32>
    %c6 = arith.constant 6 : index
    %c0_14 = arith.constant 0 : index
    %34 = vector.load %arg2[%c6, %c0_14] : memref<9x512xf32, #tpu.memory_space<vmem>>, vector<1x512xf32>
    %35 = vector.broadcast %34 : vector<1x512xf32> to vector<32x512xf32>
    %36 = arith.mulf %33, %35 : vector<32x512xf32>
    %37 = arith.truncf %36 : vector<32x512xf32> to vector<32x512xbf16>
    %c192 = arith.constant 192 : index
    %c0_15 = arith.constant 0 : index
    %38 = vector.load %arg14[%c192, %c0_15] : memref<288x512xbf16, #tpu.memory_space<vmem>>, vector<32x512xbf16>
    tpu.vector_store %arg14[%c192, %c0_15], %37 {strides = array<i32>} : memref<288x512xbf16, #tpu.memory_space<vmem>>, vector<32x512xbf16>,
    %c496_i32 = arith.constant 496 : i32
    %39 = tpu.dynamic_rotate %0 by %c496_i32 dim 1 : vector<32x512xf32>, i32 -> vector<32x512xf32>
    %c7 = arith.constant 7 : index
    %c0_16 = arith.constant 0 : index
    %40 = vector.load %arg2[%c7, %c0_16] : memref<9x512xf32, #tpu.memory_space<vmem>>, vector<1x512xf32>
    %41 = vector.broadcast %40 : vector<1x512xf32> to vector<32x512xf32>
    %42 = arith.mulf %39, %41 : vector<32x512xf32>
    %43 = arith.truncf %42 : vector<32x512xf32> to vector<32x512xbf16>
    %c224 = arith.constant 224 : index
    %c0_17 = arith.constant 0 : index
    %44 = vector.load %arg14[%c224, %c0_17] : memref<288x512xbf16, #tpu.memory_space<vmem>>, vector<32x512xbf16>
    tpu.vector_store %arg14[%c224, %c0_17], %43 {strides = array<i32>} : memref<288x512xbf16, #tpu.memory_space<vmem>>, vector<32x512xbf16>,
    %c495_i32 = arith.constant 495 : i32
    %45 = tpu.dynamic_rotate %0 by %c495_i32 dim 1 : vector<32x512xf32>, i32 -> vector<32x512xf32>
    %c8 = arith.constant 8 : index
    %c0_18 = arith.constant 0 : index
    %46 = vector.load %arg2[%c8, %c0_18] : memref<9x512xf32, #tpu.memory_space<vmem>>, vector<1x512xf32>
    %47 = vector.broadcast %46 : vector<1x512xf32> to vector<32x512xf32>
    %48 = arith.mulf %45, %47 : vector<32x512xf32>
    %49 = arith.truncf %48 : vector<32x512xf32> to vector<32x512xbf16>
    %c256 = arith.constant 256 : index
    %c0_19 = arith.constant 0 : index
    %50 = vector.load %arg14[%c256, %c0_19] : memref<288x512xbf16, #tpu.memory_space<vmem>>, vector<32x512xbf16>
    tpu.vector_store %arg14[%c256, %c0_19], %49 {strides = array<i32>} : memref<288x512xbf16, #tpu.memory_space<vmem>>, vector<32x512xbf16>,
    %c0_20 = arith.constant 0 : index
    %c0_21 = arith.constant 0 : index
    %51 = vector.load %arg5[%c0_20, %c0_21] : memref<32x288xbf16, #tpu.memory_space<vmem>>, vector<32x288xbf16>
    %c0_22 = arith.constant 0 : index
    %c0_23 = arith.constant 0 : index
    %52 = vector.load %arg14[%c0_22, %c0_23] : memref<288x512xbf16, #tpu.memory_space<vmem>>, vector<288x512xbf16>
    %cst = arith.constant dense<0.000000e+00> : vector<32x512xf32>
    %53 = tpu.matmul %51, %52, %cst {dimension_numbers = #tpu.dot_dimension_numbers<[1], [0], [0], [1], [0, 0, 1, 1], [], []>} : vector<32x288xbf16>, vector<288x512xbf16>, vector<32x512xf32> -> vector<32x512xf32>
    %c0_24 = arith.constant 0 : index
    %c0_25 = arith.constant 0 : index
    %54 = vector.load %arg6[%c0_24, %c0_25] : memref<32x1xf32, #tpu.memory_space<vmem>>, vector<32x1xf32>
    %55 = vector.broadcast %54 : vector<32x1xf32> to vector<32x512xf32>
    %56 = arith.addf %53, %55 : vector<32x512xf32>
    %cst_26 = arith.constant 0.000000e+00 : f32
    %57 = vector.broadcast %cst_26 : f32 to vector<32x512xf32>
    %58 = arith.maximumf %56, %57 : vector<32x512xf32>
    %c17_i32_27 = arith.constant 17 : i32
    %59 = tpu.dynamic_rotate %58 by %c17_i32_27 dim 1 : vector<32x512xf32>, i32 -> vector<32x512xf32>
    %c0_28 = arith.constant 0 : index
    %c0_29 = arith.constant 0 : index
    %60 = vector.load %arg2[%c0_28, %c0_29] : memref<9x512xf32, #tpu.memory_space<vmem>>, vector<1x512xf32>
    %61 = vector.broadcast %60 : vector<1x512xf32> to vector<32x512xf32>
    %62 = arith.mulf %59, %61 : vector<32x512xf32>
    %63 = arith.truncf %62 : vector<32x512xf32> to vector<32x512xbf16>
    %c0_30 = arith.constant 0 : index
    %c0_31 = arith.constant 0 : index
    %64 = vector.load %arg14[%c0_30, %c0_31] : memref<288x512xbf16, #tpu.memory_space<vmem>>, vector<32x512xbf16>
    tpu.vector_store %arg14[%c0_30, %c0_31], %63 {strides = array<i32>} : memref<288x512xbf16, #tpu.memory_space<vmem>>, vector<32x512xbf16>,
    %c16_i32_32 = arith.constant 16 : i32
    %65 = tpu.dynamic_rotate %58 by %c16_i32_32 dim 1 : vector<32x512xf32>, i32 -> vector<32x512xf32>
    %c1_33 = arith.constant 1 : index
    %c0_34 = arith.constant 0 : index
    %66 = vector.load %arg2[%c1_33, %c0_34] : memref<9x512xf32, #tpu.memory_space<vmem>>, vector<1x512xf32>
    %67 = vector.broadcast %66 : vector<1x512xf32> to vector<32x512xf32>
    %68 = arith.mulf %65, %67 : vector<32x512xf32>
    %69 = arith.truncf %68 : vector<32x512xf32> to vector<32x512xbf16>
    %c32_35 = arith.constant 32 : index
    %c0_36 = arith.constant 0 : index
    %70 = vector.load %arg14[%c32_35, %c0_36] : memref<288x512xbf16, #tpu.memory_space<vmem>>, vector<32x512xbf16>
    tpu.vector_store %arg14[%c32_35, %c0_36], %69 {strides = array<i32>} : memref<288x512xbf16, #tpu.memory_space<vmem>>, vector<32x512xbf16>,
    %c15_i32_37 = arith.constant 15 : i32
    %71 = tpu.dynamic_rotate %58 by %c15_i32_37 dim 1 : vector<32x512xf32>, i32 -> vector<32x512xf32>
    %c2_38 = arith.constant 2 : index
    %c0_39 = arith.constant 0 : index
    %72 = vector.load %arg2[%c2_38, %c0_39] : memref<9x512xf32, #tpu.memory_space<vmem>>, vector<1x512xf32>
    %73 = vector.broadcast %72 : vector<1x512xf32> to vector<32x512xf32>
    %74 = arith.mulf %71, %73 : vector<32x512xf32>
    %75 = arith.truncf %74 : vector<32x512xf32> to vector<32x512xbf16>
    %c64_40 = arith.constant 64 : index
    %c0_41 = arith.constant 0 : index
    %76 = vector.load %arg14[%c64_40, %c0_41] : memref<288x512xbf16, #tpu.memory_space<vmem>>, vector<32x512xbf16>
    tpu.vector_store %arg14[%c64_40, %c0_41], %75 {strides = array<i32>} : memref<288x512xbf16, #tpu.memory_space<vmem>>, vector<32x512xbf16>,
    %c1_i32_42 = arith.constant 1 : i32
    %77 = tpu.dynamic_rotate %58 by %c1_i32_42 dim 1 : vector<32x512xf32>, i32 -> vector<32x512xf32>
    %c3_43 = arith.constant 3 : index
    %c0_44 = arith.constant 0 : index
    %78 = vector.load %arg2[%c3_43, %c0_44] : memref<9x512xf32, #tpu.memory_space<vmem>>, vector<1x512xf32>
    %79 = vector.broadcast %78 : vector<1x512xf32> to vector<32x512xf32>
    %80 = arith.mulf %77, %79 : vector<32x512xf32>
    %81 = arith.truncf %80 : vector<32x512xf32> to vector<32x512xbf16>
    %c96_45 = arith.constant 96 : index
    %c0_46 = arith.constant 0 : index
    %82 = vector.load %arg14[%c96_45, %c0_46] : memref<288x512xbf16, #tpu.memory_space<vmem>>, vector<32x512xbf16>
    tpu.vector_store %arg14[%c96_45, %c0_46], %81 {strides = array<i32>} : memref<288x512xbf16, #tpu.memory_space<vmem>>, vector<32x512xbf16>,
    %83 = arith.truncf %58 : vector<32x512xf32> to vector<32x512xbf16>
    %c128_47 = arith.constant 128 : index
    %c0_48 = arith.constant 0 : index
    %84 = vector.load %arg14[%c128_47, %c0_48] : memref<288x512xbf16, #tpu.memory_space<vmem>>, vector<32x512xbf16>
    tpu.vector_store %arg14[%c128_47, %c0_48], %83 {strides = array<i32>} : memref<288x512xbf16, #tpu.memory_space<vmem>>, vector<32x512xbf16>,
    %c511_i32_49 = arith.constant 511 : i32
    %85 = tpu.dynamic_rotate %58 by %c511_i32_49 dim 1 : vector<32x512xf32>, i32 -> vector<32x512xf32>
    %c5_50 = arith.constant 5 : index
    %c0_51 = arith.constant 0 : index
    %86 = vector.load %arg2[%c5_50, %c0_51] : memref<9x512xf32, #tpu.memory_space<vmem>>, vector<1x512xf32>
    %87 = vector.broadcast %86 : vector<1x512xf32> to vector<32x512xf32>
    %88 = arith.mulf %85, %87 : vector<32x512xf32>
    %89 = arith.truncf %88 : vector<32x512xf32> to vector<32x512xbf16>
    %c160_52 = arith.constant 160 : index
    %c0_53 = arith.constant 0 : index
    %90 = vector.load %arg14[%c160_52, %c0_53] : memref<288x512xbf16, #tpu.memory_space<vmem>>, vector<32x512xbf16>
    tpu.vector_store %arg14[%c160_52, %c0_53], %89 {strides = array<i32>} : memref<288x512xbf16, #tpu.memory_space<vmem>>, vector<32x512xbf16>,
    %c497_i32_54 = arith.constant 497 : i32
    %91 = tpu.dynamic_rotate %58 by %c497_i32_54 dim 1 : vector<32x512xf32>, i32 -> vector<32x512xf32>
    %c6_55 = arith.constant 6 : index
    %c0_56 = arith.constant 0 : index
    %92 = vector.load %arg2[%c6_55, %c0_56] : memref<9x512xf32, #tpu.memory_space<vmem>>, vector<1x512xf32>
    %93 = vector.broadcast %92 : vector<1x512xf32> to vector<32x512xf32>
    %94 = arith.mulf %91, %93 : vector<32x512xf32>
    %95 = arith.truncf %94 : vector<32x512xf32> to vector<32x512xbf16>
    %c192_57 = arith.constant 192 : index
    %c0_58 = arith.constant 0 : index
    %96 = vector.load %arg14[%c192_57, %c0_58] : memref<288x512xbf16, #tpu.memory_space<vmem>>, vector<32x512xbf16>
    tpu.vector_store %arg14[%c192_57, %c0_58], %95 {strides = array<i32>} : memref<288x512xbf16, #tpu.memory_space<vmem>>, vector<32x512xbf16>,
    %c496_i32_59 = arith.constant 496 : i32
    %97 = tpu.dynamic_rotate %58 by %c496_i32_59 dim 1 : vector<32x512xf32>, i32 -> vector<32x512xf32>
    %c7_60 = arith.constant 7 : index
    %c0_61 = arith.constant 0 : index
    %98 = vector.load %arg2[%c7_60, %c0_61] : memref<9x512xf32, #tpu.memory_space<vmem>>, vector<1x512xf32>
    %99 = vector.broadcast %98 : vector<1x512xf32> to vector<32x512xf32>
    %100 = arith.mulf %97, %99 : vector<32x512xf32>
    %101 = arith.truncf %100 : vector<32x512xf32> to vector<32x512xbf16>
    %c224_62 = arith.constant 224 : index
    %c0_63 = arith.constant 0 : index
    %102 = vector.load %arg14[%c224_62, %c0_63] : memref<288x512xbf16, #tpu.memory_space<vmem>>, vector<32x512xbf16>
    tpu.vector_store %arg14[%c224_62, %c0_63], %101 {strides = array<i32>} : memref<288x512xbf16, #tpu.memory_space<vmem>>, vector<32x512xbf16>,
    %c495_i32_64 = arith.constant 495 : i32
    %103 = tpu.dynamic_rotate %58 by %c495_i32_64 dim 1 : vector<32x512xf32>, i32 -> vector<32x512xf32>
    %c8_65 = arith.constant 8 : index
    %c0_66 = arith.constant 0 : index
    %104 = vector.load %arg2[%c8_65, %c0_66] : memref<9x512xf32, #tpu.memory_space<vmem>>, vector<1x512xf32>
    %105 = vector.broadcast %104 : vector<1x512xf32> to vector<32x512xf32>
    %106 = arith.mulf %103, %105 : vector<32x512xf32>
    %107 = arith.truncf %106 : vector<32x512xf32> to vector<32x512xbf16>
    %c256_67 = arith.constant 256 : index
    %c0_68 = arith.constant 0 : index
    %108 = vector.load %arg14[%c256_67, %c0_68] : memref<288x512xbf16, #tpu.memory_space<vmem>>, vector<32x512xbf16>
    tpu.vector_store %arg14[%c256_67, %c0_68], %107 {strides = array<i32>} : memref<288x512xbf16, #tpu.memory_space<vmem>>, vector<32x512xbf16>,
    %c0_69 = arith.constant 0 : index
    %c0_70 = arith.constant 0 : index
    %109 = vector.load %arg7[%c0_69, %c0_70] : memref<32x288xbf16, #tpu.memory_space<vmem>>, vector<32x288xbf16>
    %c0_71 = arith.constant 0 : index
    %c0_72 = arith.constant 0 : index
    %110 = vector.load %arg14[%c0_71, %c0_72] : memref<288x512xbf16, #tpu.memory_space<vmem>>, vector<288x512xbf16>
    %cst_73 = arith.constant dense<0.000000e+00> : vector<32x512xf32>
    %111 = tpu.matmul %109, %110, %cst_73 {dimension_numbers = #tpu.dot_dimension_numbers<[1], [0], [0], [1], [0, 0, 1, 1], [], []>} : vector<32x288xbf16>, vector<288x512xbf16>, vector<32x512xf32> -> vector<32x512xf32>
    %c0_74 = arith.constant 0 : index
    %c0_75 = arith.constant 0 : index
    %112 = vector.load %arg8[%c0_74, %c0_75] : memref<32x1xf32, #tpu.memory_space<vmem>>, vector<32x1xf32>
    %113 = vector.broadcast %112 : vector<32x1xf32> to vector<32x512xf32>
    %114 = arith.addf %111, %113 : vector<32x512xf32>
    %c0_76 = arith.constant 0 : index
    %c0_77 = arith.constant 0 : index
    %115 = vector.load %arg3[%c0_76, %c0_77] : memref<512x2xf32, #tpu.memory_space<vmem>>, vector<512x2xf32>
    %cst_78 = arith.constant dense<0.000000e+00> : vector<32x2xf32>
    %116 = tpu.matmul %114, %115, %cst_78 {dimension_numbers = #tpu.dot_dimension_numbers<[1], [0], [0], [1], [0, 0, 1, 1], [], []>} : vector<32x512xf32>, vector<512x2xf32>, vector<32x2xf32> -> vector<32x2xf32>
    %c0_79 = arith.constant 0 : index
    %c0_80 = arith.constant 0 : index
    %117 = vector.load %arg9[%c0_79, %c0_80] : memref<2x32xf32, #tpu.memory_space<vmem>>, vector<2x32xf32>
    %cst_81 = arith.constant dense<0.000000e+00> : vector<2x2xf32>
    %118 = tpu.matmul %117, %116, %cst_81 {dimension_numbers = #tpu.dot_dimension_numbers<[1], [0], [0], [1], [0, 0, 1, 1], [], []>} : vector<2x32xf32>, vector<32x2xf32>, vector<2x2xf32> -> vector<2x2xf32>
    %c0_82 = arith.constant 0 : index
    %c0_83 = arith.constant 0 : index
    %119 = vector.load %arg10[%c0_82, %c0_83] : memref<2x1xf32, #tpu.memory_space<vmem>>, vector<2x1xf32>
    %120 = vector.broadcast %119 : vector<2x1xf32> to vector<2x2xf32>
    %121 = arith.addf %118, %120 : vector<2x2xf32>
    %cst_84 = arith.constant 0.000000e+00 : f32
    %122 = vector.broadcast %cst_84 : f32 to vector<2x2xf32>
    %123 = arith.maximumf %121, %122 : vector<2x2xf32>
    %c0_85 = arith.constant 0 : index
    %c0_86 = arith.constant 0 : index
    %124 = vector.load %arg11[%c0_85, %c0_86] : memref<32x2xf32, #tpu.memory_space<vmem>>, vector<32x2xf32>
    %cst_87 = arith.constant dense<0.000000e+00> : vector<32x2xf32>
    %125 = tpu.matmul %124, %123, %cst_87 {dimension_numbers = #tpu.dot_dimension_numbers<[1], [0], [0], [1], [0, 0, 1, 1], [], []>} : vector<32x2xf32>, vector<2x2xf32>, vector<32x2xf32> -> vector<32x2xf32>
    %c0_88 = arith.constant 0 : index
    %c0_89 = arith.constant 0 : index
    %126 = vector.load %arg12[%c0_88, %c0_89] : memref<32x1xf32, #tpu.memory_space<vmem>>, vector<32x1xf32>
    %127 = vector.broadcast %126 : vector<32x1xf32> to vector<32x2xf32>
    %128 = arith.addf %125, %127 : vector<32x2xf32>
    %129 = arith.negf %128 : vector<32x2xf32>
    %130 = math.exp %129 : vector<32x2xf32>
    %cst_90 = arith.constant 1.000000e+00 : f32
    %131 = vector.broadcast %cst_90 : f32 to vector<32x2xf32>
    %132 = arith.addf %131, %130 : vector<32x2xf32>
    %133 = arith.divf %131, %132 : vector<32x2xf32>
    %c0_91 = arith.constant 0 : index
    %c0_92 = arith.constant 0 : index
    %134 = vector.load %arg4[%c0_91, %c0_92] : memref<2x512xf32, #tpu.memory_space<vmem>>, vector<2x512xf32>
    %cst_93 = arith.constant dense<0.000000e+00> : vector<32x512xf32>
    %135 = tpu.matmul %133, %134, %cst_93 {dimension_numbers = #tpu.dot_dimension_numbers<[1], [0], [0], [1], [0, 0, 1, 1], [], []>} : vector<32x2xf32>, vector<2x512xf32>, vector<32x512xf32> -> vector<32x512xf32>
    %136 = arith.mulf %114, %135 : vector<32x512xf32>
    %137 = arith.addf %136, %0 : vector<32x512xf32>
    %c0_94 = arith.constant 0 : index
    %c0_95 = arith.constant 0 : index
    %138 = vector.load %arg13[%c0_94, %c0_95] : memref<32x512xf32, #tpu.memory_space<vmem>>, vector<32x512xf32>
    tpu.vector_store %arg13[%c0_94, %c0_95], %137 {strides = array<i32>} : memref<32x512xf32, #tpu.memory_space<vmem>>, vector<32x512xf32>,
    return
  }
  func.func @transform_0(%arg0: i32) -> (i32, i32) {
    %c0_i32 = arith.constant 0 : i32
    %c0_i32_0 = arith.constant 0 : i32
    return %c0_i32, %arg0 : i32, i32
  }
  func.func @transform_1(%arg0: i32) -> (i32, i32) {
    %c0_i32 = arith.constant 0 : i32
    %c0_i32_0 = arith.constant 0 : i32
    %c0_i32_1 = arith.constant 0 : i32
    return %c0_i32, %c0_i32_0 : i32, i32
  }
  func.func @transform_2(%arg0: i32) -> (i32, i32) {
    %c0_i32 = arith.constant 0 : i32
    %c0_i32_0 = arith.constant 0 : i32
    %c0_i32_1 = arith.constant 0 : i32
    return %c0_i32, %c0_i32_0 : i32, i32
  }
  func.func @transform_3(%arg0: i32) -> (i32, i32) {
    %c0_i32 = arith.constant 0 : i32
    %c0_i32_0 = arith.constant 0 : i32
    %c0_i32_1 = arith.constant 0 : i32
    return %c0_i32, %c0_i32_0 : i32, i32
  }
  func.func @transform_4(%arg0: i32) -> (i32, i32) {
    %c0_i32 = arith.constant 0 : i32
    %c0_i32_0 = arith.constant 0 : i32
    %c0_i32_1 = arith.constant 0 : i32
    return %c0_i32, %c0_i32_0 : i32, i32
  }
  func.func @transform_5(%arg0: i32) -> (i32, i32) {
    %c0_i32 = arith.constant 0 : i32
    %c0_i32_0 = arith.constant 0 : i32
    %c0_i32_1 = arith.constant 0 : i32
    return %c0_i32, %c0_i32_0 : i32, i32
  }
  func.func @transform_6(%arg0: i32) -> (i32, i32) {
    %c0_i32 = arith.constant 0 : i32
    %c0_i32_0 = arith.constant 0 : i32
    %c0_i32_1 = arith.constant 0 : i32
    return %c0_i32, %c0_i32_0 : i32, i32
  }
  func.func @transform_7(%arg0: i32) -> (i32, i32) {
    %c0_i32 = arith.constant 0 : i32
    %c0_i32_0 = arith.constant 0 : i32
    %c0_i32_1 = arith.constant 0 : i32
    return %c0_i32, %c0_i32_0 : i32, i32
  }
  func.func @transform_8(%arg0: i32) -> (i32, i32) {
    %c0_i32 = arith.constant 0 : i32
    %c0_i32_0 = arith.constant 0 : i32
    %c0_i32_1 = arith.constant 0 : i32
    return %c0_i32, %c0_i32_0 : i32, i32
  }
  func.func @transform_9(%arg0: i32) -> (i32, i32) {
    %c0_i32 = arith.constant 0 : i32
    %c0_i32_0 = arith.constant 0 : i32
    %c0_i32_1 = arith.constant 0 : i32
    return %c0_i32, %c0_i32_0 : i32, i32
  }
  func.func @transform_10(%arg0: i32) -> (i32, i32) {
    %c0_i32 = arith.constant 0 : i32
    %c0_i32_0 = arith.constant 0 : i32
    %c0_i32_1 = arith.constant 0 : i32
    return %c0_i32, %c0_i32_0 : i32, i32
  }
  func.func @transform_11(%arg0: i32) -> (i32, i32) {
    %c0_i32 = arith.constant 0 : i32
    %c0_i32_0 = arith.constant 0 : i32
    %c0_i32_1 = arith.constant 0 : i32
    return %c0_i32, %c0_i32_0 : i32, i32
  }
  func.func @transform_12(%arg0: i32) -> (i32, i32) {
    %c0_i32 = arith.constant 0 : i32
    %c0_i32_0 = arith.constant 0 : i32
    return %c0_i32, %arg0 : i32, i32
  }
}

</mosaic_0001>

<llo_original>
// kernel: tpu_custom_call.1
$region0: #{tpu_custom_call.1}
  #allocation0 [shape = 'u32[]', space=smem, size = 0x4, offset = 0x4, fixed_abs, tag = 'smem constant byte address 0x4 - core index']
  #allocation1 [shape = 'u32[72,128]{1,0:T(1,128)}', space=vmem, size = 0x9000, scoped, tag = 'internal scratch']
  #allocation2 [shape = 'bf16[288,512]{1,0:T(8,128)(2,1)}', space=vmem, size = 0x48000, scoped, tag = 'scratch operand']
  %s0 = inlined_call_operand.vmem [shape: f32[32,512], index: 0, kind: input, shape index: {}]
  %s1 = inlined_call_operand.vmem [shape: f32[9,512], index: 1, kind: input, shape index: {}]
  %s2 = inlined_call_operand.vmem [shape: f32[512,2], index: 2, kind: input, shape index: {}]
  %s3 = inlined_call_operand.vmem [shape: f32[2,512], index: 3, kind: input, shape index: {}]
  %s4 = inlined_call_operand.vmem [shape: bf16[32,288], index: 4, kind: input, shape index: {}]
  %s5 = inlined_call_operand.vmem [shape: f32[32,1], index: 5, kind: input, shape index: {}]
  %s6 = inlined_call_operand.vmem [shape: bf16[32,288], index: 6, kind: input, shape index: {}]
  %s7 = inlined_call_operand.vmem [shape: f32[32,1], index: 7, kind: input, shape index: {}]
  %s8 = inlined_call_operand.vmem [shape: f32[2,32], index: 8, kind: input, shape index: {}]
  %s9 = inlined_call_operand.vmem [shape: f32[2,1], index: 9, kind: input, shape index: {}]
  %s10 = inlined_call_operand.vmem [shape: f32[32,2], index: 10, kind: input, shape index: {}]
  %s11 = inlined_call_operand.vmem [shape: f32[32,1], index: 11, kind: input, shape index: {}]
  %s12 = inlined_call_operand.hbm [shape: f32[32,512], index: 12, kind: output, shape index: {}]
  %s13 = sld [smem:[#allocation0]]
  $region58: #{tpu_custom_call.1} parent=0
    _
  %s15 = ssub.s32 1, %s13
  %s16 = scalar_select 0, %s15, %s13
  $region1: #{tpu_custom_call.1} parent=0
    #allocation3 [shape = 'u8[65536]{0}', space=vmem, size = 0x10000, scoped, tag = 'output window, operand 0, single buffered']
    #allocation4 [shape = 's32[1]{0}', space=sflag, size = 0x4, scoped, tag = 'scoped memory for tpu_custom_call.1']
    %17 = vsyncpa [#allocation4], 0
    // Predicated region
    $region2: #{tpu_custom_call.1} parent=1 // pred_check
      _
    $region3: #{tpu_custom_call.1} parent=1 // pred_check_branch
      %19 = sbr.rel (0) target = $region5
    $region4: #{tpu_custom_call.1} parent=1 // pred_region
      _
    $region5: #{tpu_custom_call.1} parent=1 // pred_fallthru
      _
    // Predicated region
    $region6: #{tpu_custom_call.1} parent=1 // pred_check
      _
    $region7: #{tpu_custom_call.1} parent=1 // pred_check_branch
      %21 = sbr.rel (0) target = $region9
    $region8: #{tpu_custom_call.1} parent=1 // pred_region
      _
    $region9: #{tpu_custom_call.1} parent=1 // pred_fallthru
      _
    // Predicated region
    $region10: #{tpu_custom_call.1} parent=1 // pred_check
      _
    $region11: #{tpu_custom_call.1} parent=1 // pred_check_branch
      %23 = sbr.rel (0) target = $region13
    $region12: #{tpu_custom_call.1} parent=1 // pred_region
      _
    $region13: #{tpu_custom_call.1} parent=1 // pred_fallthru
      _
    // Predicated region
    $region14: #{tpu_custom_call.1} parent=1 // pred_check
      _
    $region15: #{tpu_custom_call.1} parent=1 // pred_check_branch
      %25 = sbr.rel (0) target = $region17
    $region16: #{tpu_custom_call.1} parent=1 // pred_region
      _
    $region17: #{tpu_custom_call.1} parent=1 // pred_fallthru
      _
    // Predicated region
    $region18: #{tpu_custom_call.1} parent=1 // pred_check
      _
    $region19: #{tpu_custom_call.1} parent=1 // pred_check_branch
      %27 = sbr.rel (0) target = $region21
    $region20: #{tpu_custom_call.1} parent=1 // pred_region
      _
    $region21: #{tpu_custom_call.1} parent=1 // pred_fallthru
      _
    // Predicated region
    $region22: #{tpu_custom_call.1} parent=1 // pred_check
      _
    $region23: #{tpu_custom_call.1} parent=1 // pred_check_branch
      %29 = sbr.rel (0) target = $region25
    $region24: #{tpu_custom_call.1} parent=1 // pred_region
      _
    $region25: #{tpu_custom_call.1} parent=1 // pred_fallthru
      _
    // Predicated region
    $region26: #{tpu_custom_call.1} parent=1 // pred_check
      _
    $region27: #{tpu_custom_call.1} parent=1 // pred_check_branch
      %31 = sbr.rel (0) target = $region29
    $region28: #{tpu_custom_call.1} parent=1 // pred_region
      _
    $region29: #{tpu_custom_call.1} parent=1 // pred_fallthru
      _
    // Predicated region
    $region30: #{tpu_custom_call.1} parent=1 // pred_check
      _
    $region31: #{tpu_custom_call.1} parent=1 // pred_check_branch
      %33 = sbr.rel (0) target = $region33
    $region32: #{tpu_custom_call.1} parent=1 // pred_region
      _
    $region33: #{tpu_custom_call.1} parent=1 // pred_fallthru
      _
    // Predicated region
    $region34: #{tpu_custom_call.1} parent=1 // pred_check
      _
    $region35: #{tpu_custom_call.1} parent=1 // pred_check_branch
      %35 = sbr.rel (0) target = $region37
    $region36: #{tpu_custom_call.1} parent=1 // pred_region
      _
    $region37: #{tpu_custom_call.1} parent=1 // pred_fallthru
      _
    // Predicated region
    $region38: #{tpu_custom_call.1} parent=1 // pred_check
      _
    $region39: #{tpu_custom_call.1} parent=1 // pred_check_branch
      %37 = sbr.rel (0) target = $region41
    $region40: #{tpu_custom_call.1} parent=1 // pred_region
      _
    $region41: #{tpu_custom_call.1} parent=1 // pred_fallthru
      _
    // Predicated region
    $region42: #{tpu_custom_call.1} parent=1 // pred_check
      _
    $region43: #{tpu_custom_call.1} parent=1 // pred_check_branch
      %39 = sbr.rel (0) target = $region45
    $region44: #{tpu_custom_call.1} parent=1 // pred_region
      _
    $region45: #{tpu_custom_call.1} parent=1 // pred_fallthru
      _
    // Predicated region
    $region46: #{tpu_custom_call.1} parent=1 // pred_check
      _
    $region47: #{tpu_custom_call.1} parent=1 // pred_check_branch
      %41 = sbr.rel (0) target = $region49
    $region48: #{tpu_custom_call.1} parent=1 // pred_region
      _
    $region49: #{tpu_custom_call.1} parent=1 // pred_fallthru
      _
    %v43 = vld [vmem:[%s0] sm:$0xff]
    %v44 = vld [vmem:[%s0 + $0x8] sm:$0xff]
    %v45 = vld [vmem:[%s0 + $0x10] sm:$0xff]
    %v46 = vld [vmem:[%s0 + $0x18] sm:$0xff]
    %v47 = vld [vmem:[%s0 + $0x20] sm:$0xff]
    %v48 = vld [vmem:[%s0 + $0x28] sm:$0xff]
    %v49 = vld [vmem:[%s0 + $0x30] sm:$0xff]
    %v50 = vld [vmem:[%s0 + $0x38] sm:$0xff]
    %v51 = vld [vmem:[%s0 + $0x40] sm:$0xff]
    %v52 = vld [vmem:[%s0 + $0x48] sm:$0xff]
    %v53 = vld [vmem:[%s0 + $0x50] sm:$0xff]
    %v54 = vld [vmem:[%s0 + $0x58] sm:$0xff]
    %v55 = vld [vmem:[%s0 + $0x60] sm:$0xff]
    %v56 = vld [vmem:[%s0 + $0x68] sm:$0xff]
    %v57 = vld [vmem:[%s0 + $0x70] sm:$0xff]
    %v58 = vld [vmem:[%s0 + $0x78] sm:$0xff]
    %59 = vrot.lane.b32.xlu0 %v43, 17
    %v60 = vpop.permute.xlu0 %59
    %61 = vrot.lane.b32.xlu0 %v47, 17
    %v62 = vpop.permute.xlu0 %61
    %63 = vrot.lane.b32.xlu0 %v51, 17
    %v64 = vpop.permute.xlu0 %63
    %65 = vrot.lane.b32.xlu0 %v55, 17
    %v66 = vpop.permute.xlu0 %65
    %67 = vrot.lane.b32.xlu0 %v44, 17
    %v68 = vpop.permute.xlu0 %67
    %69 = vrot.lane.b32.xlu0 %v48, 17
    %v70 = vpop.permute.xlu0 %69
    %71 = vrot.lane.b32.xlu0 %v52, 17
    %v72 = vpop.permute.xlu0 %71
    %73 = vrot.lane.b32.xlu0 %v56, 17
    %v74 = vpop.permute.xlu0 %73
    %75 = vrot.lane.b32.xlu0 %v45, 17
    %v76 = vpop.permute.xlu0 %75
    %77 = vrot.lane.b32.xlu0 %v49, 17
    %v78 = vpop.permute.xlu0 %77
    %79 = vrot.lane.b32.xlu0 %v53, 17
    %v80 = vpop.permute.xlu0 %79
    %81 = vrot.lane.b32.xlu0 %v57, 17
    %v82 = vpop.permute.xlu0 %81
    %83 = vrot.lane.b32.xlu0 %v46, 17
    %v84 = vpop.permute.xlu0 %83
    %85 = vrot.lane.b32.xlu0 %v50, 17
    %v86 = vpop.permute.xlu0 %85
    %87 = vrot.lane.b32.xlu0 %v54, 17
    %v88 = vpop.permute.xlu0 %87
    %89 = vrot.lane.b32.xlu0 %v58, 17
    %v90 = vpop.permute.xlu0 %89
    %v91 = vlaneseq
    %v92 = vand.u32 %v91, 127
    %vm93 = vcmp.lt.s32.totalorder %v92, 17
    %v94 = vsel %vm93, %v76, %v84
    %v95 = vsel %vm93, %v78, %v86
    %v96 = vsel %vm93, %v80, %v88
    %v97 = vsel %vm93, %v82, %v90
    %v98 = vsel %vm93, %v68, %v76
    %v99 = vsel %vm93, %v70, %v78
    %v100 = vsel %vm93, %v72, %v80
    %v101 = vsel %vm93, %v74, %v82
    %v102 = vsel %vm93, %v60, %v68
    %v103 = vsel %vm93, %v62, %v70
    %v104 = vsel %vm93, %v64, %v72
    %v105 = vsel %vm93, %v66, %v74
    %v106 = vsel %vm93, %v84, %v60
    %v107 = vsel %vm93, %v86, %v62
    %v108 = vsel %vm93, %v88, %v64
    %v109 = vsel %vm93, %v90, %v66
    %v110 = vld [vmem:[%s1] ss:$8 sm:$0xf]
    %v112 = vperm.slane %v110, 0
    %v113 = vperm.slane %v110, 1
    %v114 = vperm.slane %v110, 2
    %v115 = vperm.slane %v110, 3
    %v120 = vmul.f32 %v106, %v112
    %v121 = vmul.f32 %v102, %v113
    %v122 = vmul.f32 %v98, %v114
    %v123 = vmul.f32 %v94, %v115
    %v124 = vmul.f32 %v107, %v112
    %v125 = vmul.f32 %v103, %v113
    %v126 = vmul.f32 %v99, %v114
    %v127 = vmul.f32 %v95, %v115
    %v128 = vmul.f32 %v108, %v112
    %v129 = vmul.f32 %v104, %v113
    %v130 = vmul.f32 %v100, %v114
    %v131 = vmul.f32 %v96, %v115
    %v132 = vmul.f32 %v109, %v112
    %v133 = vmul.f32 %v105, %v113
    %v134 = vmul.f32 %v101, %v114
    %v135 = vmul.f32 %v97, %v115
    %v136 = vpack.c.bf16 %v121, %v120
    %v137 = vpack.c.bf16 %v123, %v122
    %v138 = vpack.c.bf16 %v125, %v124
    %v139 = vpack.c.bf16 %v127, %v126
    %v140 = vpack.c.bf16 %v129, %v128
    %v141 = vpack.c.bf16 %v131, %v130
    %v142 = vpack.c.bf16 %v133, %v132
    %v143 = vpack.c.bf16 %v135, %v134
    %144 = vst [vmem:[#allocation2] sm:$0xff] %v136
    %145 = vst [vmem:[#allocation2 + $0x8] sm:$0xff] %v137
    %146 = vst [vmem:[#allocation2 + $0x10] sm:$0xff] %v138
    %147 = vst [vmem:[#allocation2 + $0x18] sm:$0xff] %v139
    %148 = vst [vmem:[#allocation2 + $0x20] sm:$0xff] %v140
    %149 = vst [vmem:[#allocation2 + $0x28] sm:$0xff] %v141
    %150 = vst [vmem:[#allocation2 + $0x30] sm:$0xff] %v142
    %151 = vst [vmem:[#allocation2 + $0x38] sm:$0xff] %v143
    %152 = vrot.lane.b32.xlu0 %v43, 16
    %v153 = vpop.permute.xlu0 %152
    %154 = vrot.lane.b32.xlu0 %v47, 16
    %v155 = vpop.permute.xlu0 %154
    %156 = vrot.lane.b32.xlu0 %v51, 16
    %v157 = vpop.permute.xlu0 %156
    %158 = vrot.lane.b32.xlu0 %v55, 16
    %v159 = vpop.permute.xlu0 %158
    %160 = vrot.lane.b32.xlu0 %v44, 16
    %v161 = vpop.permute.xlu0 %160
    %162 = vrot.lane.b32.xlu0 %v48, 16
    %v163 = vpop.permute.xlu0 %162
    %164 = vrot.lane.b32.xlu0 %v52, 16
    %v165 = vpop.permute.xlu0 %164
    %166 = vrot.lane.b32.xlu0 %v56, 16
    %v167 = vpop.permute.xlu0 %166
    %168 = vrot.lane.b32.xlu0 %v45, 16
    %v169 = vpop.permute.xlu0 %168
    %170 = vrot.lane.b32.xlu0 %v49, 16
    %v171 = vpop.permute.xlu0 %170
    %172 = vrot.lane.b32.xlu0 %v53, 16
    %v173 = vpop.permute.xlu0 %172
    %174 = vrot.lane.b32.xlu0 %v57, 16
    %v175 = vpop.permute.xlu0 %174
    %176 = vrot.lane.b32.xlu0 %v46, 16
    %v177 = vpop.permute.xlu0 %176
    %178 = vrot.lane.b32.xlu0 %v50, 16
    %v179 = vpop.permute.xlu0 %178
    %180 = vrot.lane.b32.xlu0 %v54, 16
    %v181 = vpop.permute.xlu0 %180
    %182 = vrot.lane.b32.xlu0 %v58, 16
    %v183 = vpop.permute.xlu0 %182
    %vm184 = vcmp.lt.s32.totalorder %v92, 16
    %v185 = vsel %vm184, %v169, %v177
    %v186 = vsel %vm184, %v171, %v179
    %v187 = vsel %vm184, %v173, %v181
    %v188 = vsel %vm184, %v175, %v183
    %v189 = vsel %vm184, %v161, %v169
    %v190 = vsel %vm184, %v163, %v171
    %v191 = vsel %vm184, %v165, %v173
    %v192 = vsel %vm184, %v167, %v175
    %v193 = vsel %vm184, %v153, %v161
    %v194 = vsel %vm184, %v155, %v163
    %v195 = vsel %vm184, %v157, %v165
    %v196 = vsel %vm184, %v159, %v167
    %v197 = vsel %vm184, %v177, %v153
    %v198 = vsel %vm184, %v179, %v155
    %v199 = vsel %vm184, %v181, %v157
    %v200 = vsel %vm184, %v183, %v159
    %s201 = scalar_lea.vmem %s1, 1
    %v202 = vld [vmem:[%s201] ss:$8 sm:$0xf]
    %v204 = vperm.slane %v202, 0
    %v205 = vperm.slane %v202, 1
    %v206 = vperm.slane %v202, 2
    %v207 = vperm.slane %v202, 3
    %v212 = vmul.f32 %v197, %v204
    %v213 = vmul.f32 %v193, %v205
    %v214 = vmul.f32 %v189, %v206
    %v215 = vmul.f32 %v185, %v207
    %v216 = vmul.f32 %v198, %v204
    %v217 = vmul.f32 %v194, %v205
    %v218 = vmul.f32 %v190, %v206
    %v219 = vmul.f32 %v186, %v207
    %v220 = vmul.f32 %v199, %v204
    %v221 = vmul.f32 %v195, %v205
    %v222 = vmul.f32 %v191, %v206
    %v223 = vmul.f32 %v187, %v207
    %v224 = vmul.f32 %v200, %v204
    %v225 = vmul.f32 %v196, %v205
    %v226 = vmul.f32 %v192, %v206
    %v227 = vmul.f32 %v188, %v207
    %v228 = vpack.c.bf16 %v213, %v212
    %v229 = vpack.c.bf16 %v215, %v214
    %v230 = vpack.c.bf16 %v217, %v216
    %v231 = vpack.c.bf16 %v219, %v218
    %v232 = vpack.c.bf16 %v221, %v220
    %v233 = vpack.c.bf16 %v223, %v222
    %v234 = vpack.c.bf16 %v225, %v224
    %v235 = vpack.c.bf16 %v227, %v226
    %236 = vst [vmem:[#allocation2 + $0x40] sm:$0xff] %v228
    %237 = vst [vmem:[#allocation2 + $0x48] sm:$0xff] %v229
    %238 = vst [vmem:[#allocation2 + $0x50] sm:$0xff] %v230
    %239 = vst [vmem:[#allocation2 + $0x58] sm:$0xff] %v231
    %240 = vst [vmem:[#allocation2 + $0x60] sm:$0xff] %v232
    %241 = vst [vmem:[#allocation2 + $0x68] sm:$0xff] %v233
    %242 = vst [vmem:[#allocation2 + $0x70] sm:$0xff] %v234
    %243 = vst [vmem:[#allocation2 + $0x78] sm:$0xff] %v235
    %244 = vrot.lane.b32.xlu0 %v43, 15
    %v245 = vpop.permute.xlu0 %244
    %246 = vrot.lane.b32.xlu0 %v47, 15
    %v247 = vpop.permute.xlu0 %246
    %248 = vrot.lane.b32.xlu0 %v51, 15
    %v249 = vpop.permute.xlu0 %248
    %250 = vrot.lane.b32.xlu0 %v55, 15
    %v251 = vpop.permute.xlu0 %250
    %252 = vrot.lane.b32.xlu0 %v44, 15
    %v253 = vpop.permute.xlu0 %252
    %254 = vrot.lane.b32.xlu0 %v48, 15
    %v255 = vpop.permute.xlu0 %254
    %256 = vrot.lane.b32.xlu0 %v52, 15
    %v257 = vpop.permute.xlu0 %256
    %258 = vrot.lane.b32.xlu0 %v56, 15
    %v259 = vpop.permute.xlu0 %258
    %260 = vrot.lane.b32.xlu0 %v45, 15
    %v261 = vpop.permute.xlu0 %260
    %262 = vrot.lane.b32.xlu0 %v49, 15
    %v263 = vpop.permute.xlu0 %262
    %264 = vrot.lane.b32.xlu0 %v53, 15
    %v265 = vpop.permute.xlu0 %264
    %266 = vrot.lane.b32.xlu0 %v57, 15
    %v267 = vpop.permute.xlu0 %266
    %268 = vrot.lane.b32.xlu0 %v46, 15
    %v269 = vpop.permute.xlu0 %268
    %270 = vrot.lane.b32.xlu0 %v50, 15
    %v271 = vpop.permute.xlu0 %270
    %272 = vrot.lane.b32.xlu0 %v54, 15
    %v273 = vpop.permute.xlu0 %272
    %274 = vrot.lane.b32.xlu0 %v58, 15
    %v275 = vpop.permute.xlu0 %274
    %vm276 = vcmp.lt.s32.totalorder %v92, 15
    %v277 = vsel %vm276, %v261, %v269
    %v278 = vsel %vm276, %v263, %v271
    %v279 = vsel %vm276, %v265, %v273
    %v280 = vsel %vm276, %v267, %v275
    %v281 = vsel %vm276, %v253, %v261
    %v282 = vsel %vm276, %v255, %v263
    %v283 = vsel %vm276, %v257, %v265
    %v284 = vsel %vm276, %v259, %v267
    %v285 = vsel %vm276, %v245, %v253
    %v286 = vsel %vm276, %v247, %v255
    %v287 = vsel %vm276, %v249, %v257
    %v288 = vsel %vm276, %v251, %v259
    %v289 = vsel %vm276, %v269, %v245
    %v290 = vsel %vm276, %v271, %v247
    %v291 = vsel %vm276, %v273, %v249
    %v292 = vsel %vm276, %v275, %v251
    %s293 = scalar_lea.vmem %s1, 2
    %v294 = vld [vmem:[%s293] ss:$8 sm:$0xf]
    %v296 = vperm.slane %v294, 0
    %v297 = vperm.slane %v294, 1
    %v298 = vperm.slane %v294, 2
    %v299 = vperm.slane %v294, 3
    %v304 = vmul.f32 %v289, %v296
    %v305 = vmul.f32 %v285, %v297
    %v306 = vmul.f32 %v281, %v298
    %v307 = vmul.f32 %v277, %v299
    %v308 = vmul.f32 %v290, %v296
    %v309 = vmul.f32 %v286, %v297
    %v310 = vmul.f32 %v282, %v298
    %v311 = vmul.f32 %v278, %v299
    %v312 = vmul.f32 %v291, %v296
    %v313 = vmul.f32 %v287, %v297
    %v314 = vmul.f32 %v283, %v298
    %v315 = vmul.f32 %v279, %v299
    %v316 = vmul.f32 %v292, %v296
    %v317 = vmul.f32 %v288, %v297
    %v318 = vmul.f32 %v284, %v298
    %v319 = vmul.f32 %v280, %v299
    %v320 = vpack.c.bf16 %v305, %v304
    %v321 = vpack.c.bf16 %v307, %v306
    %v322 = vpack.c.bf16 %v309, %v308
    %v323 = vpack.c.bf16 %v311, %v310
    %v324 = vpack.c.bf16 %v313, %v312
    %v325 = vpack.c.bf16 %v315, %v314
    %v326 = vpack.c.bf16 %v317, %v316
    %v327 = vpack.c.bf16 %v319, %v318
    %328 = vst [vmem:[#allocation2 + $0x80] sm:$0xff] %v320
    %329 = vst [vmem:[#allocation2 + $0x88] sm:$0xff] %v321
    %330 = vst [vmem:[#allocation2 + $0x90] sm:$0xff] %v322
    %331 = vst [vmem:[#allocation2 + $0x98] sm:$0xff] %v323
    %332 = vst [vmem:[#allocation2 + $0xa0] sm:$0xff] %v324
    %333 = vst [vmem:[#allocation2 + $0xa8] sm:$0xff] %v325
    %334 = vst [vmem:[#allocation2 + $0xb0] sm:$0xff] %v326
    %335 = vst [vmem:[#allocation2 + $0xb8] sm:$0xff] %v327
    %336 = vrot.lane.b32.xlu0 %v43, 1
    %v337 = vpop.permute.xlu0 %336
    %338 = vrot.lane.b32.xlu0 %v47, 1
    %v339 = vpop.permute.xlu0 %338
    %340 = vrot.lane.b32.xlu0 %v51, 1
    %v341 = vpop.permute.xlu0 %340
    %342 = vrot.lane.b32.xlu0 %v55, 1
    %v343 = vpop.permute.xlu0 %342
    %344 = vrot.lane.b32.xlu0 %v44, 1
    %v345 = vpop.permute.xlu0 %344
    %346 = vrot.lane.b32.xlu0 %v48, 1
    %v347 = vpop.permute.xlu0 %346
    %348 = vrot.lane.b32.xlu0 %v52, 1
    %v349 = vpop.permute.xlu0 %348
    %350 = vrot.lane.b32.xlu0 %v56, 1
    %v351 = vpop.permute.xlu0 %350
    %352 = vrot.lane.b32.xlu0 %v45, 1
    %v353 = vpop.permute.xlu0 %352
    %354 = vrot.lane.b32.xlu0 %v49, 1
    %v355 = vpop.permute.xlu0 %354
    %356 = vrot.lane.b32.xlu0 %v53, 1
    %v357 = vpop.permute.xlu0 %356
    %358 = vrot.lane.b32.xlu0 %v57, 1
    %v359 = vpop.permute.xlu0 %358
    %360 = vrot.lane.b32.xlu0 %v46, 1
    %v361 = vpop.permute.xlu0 %360
    %362 = vrot.lane.b32.xlu0 %v50, 1
    %v363 = vpop.permute.xlu0 %362
    %364 = vrot.lane.b32.xlu0 %v54, 1
    %v365 = vpop.permute.xlu0 %364
    %366 = vrot.lane.b32.xlu0 %v58, 1
    %v367 = vpop.permute.xlu0 %366
    %vm368 = vcmp.lt.s32.totalorder %v92, 1
    %v369 = vsel %vm368, %v353, %v361
    %v370 = vsel %vm368, %v355, %v363
    %v371 = vsel %vm368, %v357, %v365
    %v372 = vsel %vm368, %v359, %v367
    %v373 = vsel %vm368, %v345, %v353
    %v374 = vsel %vm368, %v347, %v355
    %v375 = vsel %vm368, %v349, %v357
    %v376 = vsel %vm368, %v351, %v359
    %v377 = vsel %vm368, %v337, %v345
    %v378 = vsel %vm368, %v339, %v347
    %v379 = vsel %vm368, %v341, %v349
    %v380 = vsel %vm368, %v343, %v351
    %v381 = vsel %vm368, %v361, %v337
    %v382 = vsel %vm368, %v363, %v339
    %v383 = vsel %vm368, %v365, %v341
    %v384 = vsel %vm368, %v367, %v343
    %s385 = scalar_lea.vmem %s1, 3
    %v386 = vld [vmem:[%s385] ss:$8 sm:$0xf]
    %v388 = vperm.slane %v386, 0
    %v389 = vperm.slane %v386, 1
    %v390 = vperm.slane %v386, 2
    %v391 = vperm.slane %v386, 3
    %v396 = vmul.f32 %v381, %v388
    %v397 = vmul.f32 %v377, %v389
    %v398 = vmul.f32 %v373, %v390
    %v399 = vmul.f32 %v369, %v391
    %v400 = vmul.f32 %v382, %v388
    %v401 = vmul.f32 %v378, %v389
    %v402 = vmul.f32 %v374, %v390
    %v403 = vmul.f32 %v370, %v391
    %v404 = vmul.f32 %v383, %v388
    %v405 = vmul.f32 %v379, %v389
    %v406 = vmul.f32 %v375, %v390
    %v407 = vmul.f32 %v371, %v391
    %v408 = vmul.f32 %v384, %v388
    %v409 = vmul.f32 %v380, %v389
    %v410 = vmul.f32 %v376, %v390
    %v411 = vmul.f32 %v372, %v391
    %v412 = vpack.c.bf16 %v397, %v396
    %v413 = vpack.c.bf16 %v399, %v398
    %v414 = vpack.c.bf16 %v401, %v400
    %v415 = vpack.c.bf16 %v403, %v402
    %v416 = vpack.c.bf16 %v405, %v404
    %v417 = vpack.c.bf16 %v407, %v406
    %v418 = vpack.c.bf16 %v409, %v408
    %v419 = vpack.c.bf16 %v411, %v410
    %420 = vst [vmem:[#allocation2 + $0xc0] sm:$0xff] %v412
    %421 = vst [vmem:[#allocation2 + $0xc8] sm:$0xff] %v413
    %422 = vst [vmem:[#allocation2 + $0xd0] sm:$0xff] %v414
    %423 = vst [vmem:[#allocation2 + $0xd8] sm:$0xff] %v415
    %424 = vst [vmem:[#allocation2 + $0xe0] sm:$0xff] %v416
    %425 = vst [vmem:[#allocation2 + $0xe8] sm:$0xff] %v417
    %426 = vst [vmem:[#allocation2 + $0xf0] sm:$0xff] %v418
    %427 = vst [vmem:[#allocation2 + $0xf8] sm:$0xff] %v419
    %v428 = vpack.c.bf16 %v44, %v43
    %v429 = vpack.c.bf16 %v46, %v45
    %v430 = vpack.c.bf16 %v48, %v47
    %v431 = vpack.c.bf16 %v50, %v49
    %v432 = vpack.c.bf16 %v52, %v51
    %v433 = vpack.c.bf16 %v54, %v53
    %v434 = vpack.c.bf16 %v56, %v55
    %v435 = vpack.c.bf16 %v58, %v57
    %436 = vst [vmem:[#allocation2 + $0x100] sm:$0xff] %v428
    %437 = vst [vmem:[#allocation2 + $0x108] sm:$0xff] %v429
    %438 = vst [vmem:[#allocation2 + $0x110] sm:$0xff] %v430
    %439 = vst [vmem:[#allocation2 + $0x118] sm:$0xff] %v431
    %440 = vst [vmem:[#allocation2 + $0x120] sm:$0xff] %v432
    %441 = vst [vmem:[#allocation2 + $0x128] sm:$0xff] %v433
    %442 = vst [vmem:[#allocation2 + $0x130] sm:$0xff] %v434
    %443 = vst [vmem:[#allocation2 + $0x138] sm:$0xff] %v435
    %444 = vrot.lane.b32.xlu0 %v43, 127
    %v445 = vpop.permute.xlu0 %444
    %446 = vrot.lane.b32.xlu0 %v47, 127
    %v447 = vpop.permute.xlu0 %446
    %448 = vrot.lane.b32.xlu0 %v51, 127
    %v449 = vpop.permute.xlu0 %448
    %450 = vrot.lane.b32.xlu0 %v55, 127
    %v451 = vpop.permute.xlu0 %450
    %452 = vrot.lane.b32.xlu0 %v44, 127
    %v453 = vpop.permute.xlu0 %452
    %454 = vrot.lane.b32.xlu0 %v48, 127
    %v455 = vpop.permute.xlu0 %454
    %456 = vrot.lane.b32.xlu0 %v52, 127
    %v457 = vpop.permute.xlu0 %456
    %458 = vrot.lane.b32.xlu0 %v56, 127
    %v459 = vpop.permute.xlu0 %458
    %460 = vrot.lane.b32.xlu0 %v45, 127
    %v461 = vpop.permute.xlu0 %460
    %462 = vrot.lane.b32.xlu0 %v49, 127
    %v463 = vpop.permute.xlu0 %462
    %464 = vrot.lane.b32.xlu0 %v53, 127
    %v465 = vpop.permute.xlu0 %464
    %466 = vrot.lane.b32.xlu0 %v57, 127
    %v467 = vpop.permute.xlu0 %466
    %468 = vrot.lane.b32.xlu0 %v46, 127
    %v469 = vpop.permute.xlu0 %468
    %470 = vrot.lane.b32.xlu0 %v50, 127
    %v471 = vpop.permute.xlu0 %470
    %472 = vrot.lane.b32.xlu0 %v54, 127
    %v473 = vpop.permute.xlu0 %472
    %474 = vrot.lane.b32.xlu0 %v58, 127
    %v475 = vpop.permute.xlu0 %474
    %vm476 = vcmp.lt.s32.totalorder %v92, 127
    %v477 = vsel %vm476, %v461, %v469
    %v478 = vsel %vm476, %v463, %v471
    %v479 = vsel %vm476, %v465, %v473
    %v480 = vsel %vm476, %v467, %v475
    %v481 = vsel %vm476, %v453, %v461
    %v482 = vsel %vm476, %v455, %v463
    %v483 = vsel %vm476, %v457, %v465
    %v484 = vsel %vm476, %v459, %v467
    %v485 = vsel %vm476, %v445, %v453
    %v486 = vsel %vm476, %v447, %v455
    %v487 = vsel %vm476, %v449, %v457
    %v488 = vsel %vm476, %v451, %v459
    %v489 = vsel %vm476, %v469, %v445
    %v490 = vsel %vm476, %v471, %v447
    %v491 = vsel %vm476, %v473, %v449
    %v492 = vsel %vm476, %v475, %v451
    %s493 = scalar_lea.vmem %s1, 5
    %v494 = vld [vmem:[%s493] ss:$8 sm:$0xf]
    %v496 = vperm.slane %v494, 0
    %v497 = vperm.slane %v494, 1
    %v498 = vperm.slane %v494, 2
    %v499 = vperm.slane %v494, 3
    %v504 = vmul.f32 %v485, %v496
    %v505 = vmul.f32 %v481, %v497
    %v506 = vmul.f32 %v477, %v498
    %v507 = vmul.f32 %v489, %v499
    %v508 = vmul.f32 %v486, %v496
    %v509 = vmul.f32 %v482, %v497
    %v510 = vmul.f32 %v478, %v498
    %v511 = vmul.f32 %v490, %v499
    %v512 = vmul.f32 %v487, %v496
    %v513 = vmul.f32 %v483, %v497
    %v514 = vmul.f32 %v479, %v498
    %v515 = vmul.f32 %v491, %v499
    %v516 = vmul.f32 %v488, %v496
    %v517 = vmul.f32 %v484, %v497
    %v518 = vmul.f32 %v480, %v498
    %v519 = vmul.f32 %v492, %v499
    %v520 = vpack.c.bf16 %v505, %v504
    %v521 = vpack.c.bf16 %v507, %v506
    %v522 = vpack.c.bf16 %v509, %v508
    %v523 = vpack.c.bf16 %v511, %v510
    %v524 = vpack.c.bf16 %v513, %v512
    %v525 = vpack.c.bf16 %v515, %v514
    %v526 = vpack.c.bf16 %v517, %v516
    %v527 = vpack.c.bf16 %v519, %v518
    %528 = vst [vmem:[#allocation2 + $0x140] sm:$0xff] %v520
    %529 = vst [vmem:[#allocation2 + $0x148] sm:$0xff] %v521
    %530 = vst [vmem:[#allocation2 + $0x150] sm:$0xff] %v522
    %531 = vst [vmem:[#allocation2 + $0x158] sm:$0xff] %v523
    %532 = vst [vmem:[#allocation2 + $0x160] sm:$0xff] %v524
    %533 = vst [vmem:[#allocation2 + $0x168] sm:$0xff] %v525
    %534 = vst [vmem:[#allocation2 + $0x170] sm:$0xff] %v526
    %535 = vst [vmem:[#allocation2 + $0x178] sm:$0xff] %v527
    %536 = vrot.lane.b32.xlu0 %v43, 113
    %v537 = vpop.permute.xlu0 %536
    %538 = vrot.lane.b32.xlu0 %v47, 113
    %v539 = vpop.permute.xlu0 %538
    %540 = vrot.lane.b32.xlu0 %v51, 113
    %v541 = vpop.permute.xlu0 %540
    %542 = vrot.lane.b32.xlu0 %v55, 113
    %v543 = vpop.permute.xlu0 %542
    %544 = vrot.lane.b32.xlu0 %v44, 113
    %v545 = vpop.permute.xlu0 %544
    %546 = vrot.lane.b32.xlu0 %v48, 113
    %v547 = vpop.permute.xlu0 %546
    %548 = vrot.lane.b32.xlu0 %v52, 113
    %v549 = vpop.permute.xlu0 %548
    %550 = vrot.lane.b32.xlu0 %v56, 113
    %v551 = vpop.permute.xlu0 %550
    %552 = vrot.lane.b32.xlu0 %v45, 113
    %v553 = vpop.permute.xlu0 %552
    %554 = vrot.lane.b32.xlu0 %v49, 113
    %v555 = vpop.permute.xlu0 %554
    %556 = vrot.lane.b32.xlu0 %v53, 113
    %v557 = vpop.permute.xlu0 %556
    %558 = vrot.lane.b32.xlu0 %v57, 113
    %v559 = vpop.permute.xlu0 %558
    %560 = vrot.lane.b32.xlu0 %v46, 113
    %v561 = vpop.permute.xlu0 %560
    %562 = vrot.lane.b32.xlu0 %v50, 113
    %v563 = vpop.permute.xlu0 %562
    %564 = vrot.lane.b32.xlu0 %v54, 113
    %v565 = vpop.permute.xlu0 %564
    %566 = vrot.lane.b32.xlu0 %v58, 113
    %v567 = vpop.permute.xlu0 %566
    %vm568 = vcmp.lt.s32.totalorder %v92, 113
    %v569 = vsel %vm568, %v553, %v561
    %v570 = vsel %vm568, %v555, %v563
    %v571 = vsel %vm568, %v557, %v565
    %v572 = vsel %vm568, %v559, %v567
    %v573 = vsel %vm568, %v545, %v553
    %v574 = vsel %vm568, %v547, %v555
    %v575 = vsel %vm568, %v549, %v557
    %v576 = vsel %vm568, %v551, %v559
    %v577 = vsel %vm568, %v537, %v545
    %v578 = vsel %vm568, %v539, %v547
    %v579 = vsel %vm568, %v541, %v549
    %v580 = vsel %vm568, %v543, %v551
    %v581 = vsel %vm568, %v561, %v537
    %v582 = vsel %vm568, %v563, %v539
    %v583 = vsel %vm568, %v565, %v541
    %v584 = vsel %vm568, %v567, %v543
    %s585 = scalar_lea.vmem %s1, 6
    %v586 = vld [vmem:[%s585] ss:$8 sm:$0xf]
    %v588 = vperm.slane %v586, 0
    %v589 = vperm.slane %v586, 1
    %v590 = vperm.slane %v586, 2
    %v591 = vperm.slane %v586, 3
    %v596 = vmul.f32 %v577, %v588
    %v597 = vmul.f32 %v573, %v589
    %v598 = vmul.f32 %v569, %v590
    %v599 = vmul.f32 %v581, %v591
    %v600 = vmul.f32 %v578, %v588
    %v601 = vmul.f32 %v574, %v589
    %v602 = vmul.f32 %v570, %v590
    %v603 = vmul.f32 %v582, %v591
    %v604 = vmul.f32 %v579, %v588
    %v605 = vmul.f32 %v575, %v589
    %v606 = vmul.f32 %v571, %v590
    %v607 = vmul.f32 %v583, %v591
    %v608 = vmul.f32 %v580, %v588
    %v609 = vmul.f32 %v576, %v589
    %v610 = vmul.f32 %v572, %v590
    %v611 = vmul.f32 %v584, %v591
    %v612 = vpack.c.bf16 %v597, %v596
    %v613 = vpack.c.bf16 %v599, %v598
    %v614 = vpack.c.bf16 %v601, %v600
    %v615 = vpack.c.bf16 %v603, %v602
    %v616 = vpack.c.bf16 %v605, %v604
    %v617 = vpack.c.bf16 %v607, %v606
    %v618 = vpack.c.bf16 %v609, %v608
    %v619 = vpack.c.bf16 %v611, %v610
    %620 = vst [vmem:[#allocation2 + $0x180] sm:$0xff] %v612
    %621 = vst [vmem:[#allocation2 + $0x188] sm:$0xff] %v613
    %622 = vst [vmem:[#allocation2 + $0x190] sm:$0xff] %v614
    %623 = vst [vmem:[#allocation2 + $0x198] sm:$0xff] %v615
    %624 = vst [vmem:[#allocation2 + $0x1a0] sm:$0xff] %v616
    %625 = vst [vmem:[#allocation2 + $0x1a8] sm:$0xff] %v617
    %626 = vst [vmem:[#allocation2 + $0x1b0] sm:$0xff] %v618
    %627 = vst [vmem:[#allocation2 + $0x1b8] sm:$0xff] %v619
    %628 = vrot.lane.b32.xlu0 %v43, 112
    %v629 = vpop.permute.xlu0 %628
    %630 = vrot.lane.b32.xlu0 %v47, 112
    %v631 = vpop.permute.xlu0 %630
    %632 = vrot.lane.b32.xlu0 %v51, 112
    %v633 = vpop.permute.xlu0 %632
    %634 = vrot.lane.b32.xlu0 %v55, 112
    %v635 = vpop.permute.xlu0 %634
    %636 = vrot.lane.b32.xlu0 %v44, 112
    %v637 = vpop.permute.xlu0 %636
    %638 = vrot.lane.b32.xlu0 %v48, 112
    %v639 = vpop.permute.xlu0 %638
    %640 = vrot.lane.b32.xlu0 %v52, 112
    %v641 = vpop.permute.xlu0 %640
    %642 = vrot.lane.b32.xlu0 %v56, 112
    %v643 = vpop.permute.xlu0 %642
    %644 = vrot.lane.b32.xlu0 %v45, 112
    %v645 = vpop.permute.xlu0 %644
    %646 = vrot.lane.b32.xlu0 %v49, 112
    %v647 = vpop.permute.xlu0 %646
    %648 = vrot.lane.b32.xlu0 %v53, 112
    %v649 = vpop.permute.xlu0 %648
    %650 = vrot.lane.b32.xlu0 %v57, 112
    %v651 = vpop.permute.xlu0 %650
    %652 = vrot.lane.b32.xlu0 %v46, 112
    %v653 = vpop.permute.xlu0 %652
    %654 = vrot.lane.b32.xlu0 %v50, 112
    %v655 = vpop.permute.xlu0 %654
    %656 = vrot.lane.b32.xlu0 %v54, 112
    %v657 = vpop.permute.xlu0 %656
    %658 = vrot.lane.b32.xlu0 %v58, 112
    %v659 = vpop.permute.xlu0 %658
    %vm660 = vcmp.lt.s32.totalorder %v92, 112
    %v661 = vsel %vm660, %v645, %v653
    %v662 = vsel %vm660, %v647, %v655
    %v663 = vsel %vm660, %v649, %v657
    %v664 = vsel %vm660, %v651, %v659
    %v665 = vsel %vm660, %v637, %v645
    %v666 = vsel %vm660, %v639, %v647
    %v667 = vsel %vm660, %v641, %v649
    %v668 = vsel %vm660, %v643, %v651
    %v669 = vsel %vm660, %v629, %v637
    %v670 = vsel %vm660, %v631, %v639
    %v671 = vsel %vm660, %v633, %v641
    %v672 = vsel %vm660, %v635, %v643
    %v673 = vsel %vm660, %v653, %v629
    %v674 = vsel %vm660, %v655, %v631
    %v675 = vsel %vm660, %v657, %v633
    %v676 = vsel %vm660, %v659, %v635
    %s677 = scalar_lea.vmem %s1, 7
    %v678 = vld [vmem:[%s677] ss:$8 sm:$0xf]
    %v680 = vperm.slane %v678, 0
    %v681 = vperm.slane %v678, 1
    %v682 = vperm.slane %v678, 2
    %v683 = vperm.slane %v678, 3
    %v688 = vmul.f32 %v669, %v680
    %v689 = vmul.f32 %v665, %v681
    %v690 = vmul.f32 %v661, %v682
    %v691 = vmul.f32 %v673, %v683
    %v692 = vmul.f32 %v670, %v680
    %v693 = vmul.f32 %v666, %v681
    %v694 = vmul.f32 %v662, %v682
    %v695 = vmul.f32 %v674, %v683
    %v696 = vmul.f32 %v671, %v680
    %v697 = vmul.f32 %v667, %v681
    %v698 = vmul.f32 %v663, %v682
    %v699 = vmul.f32 %v675, %v683
    %v700 = vmul.f32 %v672, %v680
    %v701 = vmul.f32 %v668, %v681
    %v702 = vmul.f32 %v664, %v682
    %v703 = vmul.f32 %v676, %v683
    %v704 = vpack.c.bf16 %v689, %v688
    %v705 = vpack.c.bf16 %v691, %v690
    %v706 = vpack.c.bf16 %v693, %v692
    %v707 = vpack.c.bf16 %v695, %v694
    %v708 = vpack.c.bf16 %v697, %v696
    %v709 = vpack.c.bf16 %v699, %v698
    %v710 = vpack.c.bf16 %v701, %v700
    %v711 = vpack.c.bf16 %v703, %v702
    %712 = vst [vmem:[#allocation2 + $0x1c0] sm:$0xff] %v704
    %713 = vst [vmem:[#allocation2 + $0x1c8] sm:$0xff] %v705
    %714 = vst [vmem:[#allocation2 + $0x1d0] sm:$0xff] %v706
    %715 = vst [vmem:[#allocation2 + $0x1d8] sm:$0xff] %v707
    %716 = vst [vmem:[#allocation2 + $0x1e0] sm:$0xff] %v708
    %717 = vst [vmem:[#allocation2 + $0x1e8] sm:$0xff] %v709
    %718 = vst [vmem:[#allocation2 + $0x1f0] sm:$0xff] %v710
    %719 = vst [vmem:[#allocation2 + $0x1f8] sm:$0xff] %v711
    %720 = vrot.lane.b32.xlu0 %v43, 111
    %v721 = vpop.permute.xlu0 %720
    %722 = vrot.lane.b32.xlu0 %v47, 111
    %v723 = vpop.permute.xlu0 %722
    %724 = vrot.lane.b32.xlu0 %v51, 111
    %v725 = vpop.permute.xlu0 %724
    %726 = vrot.lane.b32.xlu0 %v55, 111
    %v727 = vpop.permute.xlu0 %726
    %728 = vrot.lane.b32.xlu0 %v44, 111
    %v729 = vpop.permute.xlu0 %728
    %730 = vrot.lane.b32.xlu0 %v48, 111
    %v731 = vpop.permute.xlu0 %730
    %732 = vrot.lane.b32.xlu0 %v52, 111
    %v733 = vpop.permute.xlu0 %732
    %734 = vrot.lane.b32.xlu0 %v56, 111
    %v735 = vpop.permute.xlu0 %734
    %736 = vrot.lane.b32.xlu0 %v45, 111
    %v737 = vpop.permute.xlu0 %736
    %738 = vrot.lane.b32.xlu0 %v49, 111
    %v739 = vpop.permute.xlu0 %738
    %740 = vrot.lane.b32.xlu0 %v53, 111
    %v741 = vpop.permute.xlu0 %740
    %742 = vrot.lane.b32.xlu0 %v57, 111
    %v743 = vpop.permute.xlu0 %742
    %744 = vrot.lane.b32.xlu0 %v46, 111
    %v745 = vpop.permute.xlu0 %744
    %746 = vrot.lane.b32.xlu0 %v50, 111
    %v747 = vpop.permute.xlu0 %746
    %748 = vrot.lane.b32.xlu0 %v54, 111
    %v749 = vpop.permute.xlu0 %748
    %750 = vrot.lane.b32.xlu0 %v58, 111
    %v751 = vpop.permute.xlu0 %750
    %vm752 = vcmp.lt.s32.totalorder %v92, 111
    %v753 = vsel %vm752, %v737, %v745
    %v754 = vsel %vm752, %v739, %v747
    %v755 = vsel %vm752, %v741, %v749
    %v756 = vsel %vm752, %v743, %v751
    %v757 = vsel %vm752, %v729, %v737
    %v758 = vsel %vm752, %v731, %v739
    %v759 = vsel %vm752, %v733, %v741
    %v760 = vsel %vm752, %v735, %v743
    %v761 = vsel %vm752, %v721, %v729
    %v762 = vsel %vm752, %v723, %v731
    %v763 = vsel %vm752, %v725, %v733
    %v764 = vsel %vm752, %v727, %v735
    %v765 = vsel %vm752, %v745, %v721
    %v766 = vsel %vm752, %v747, %v723
    %v767 = vsel %vm752, %v749, %v725
    %v768 = vsel %vm752, %v751, %v727
    %s769 = scalar_lea.vmem %s1, 32
    %v770 = vld [vmem:[%s769] ss:$8 sm:$0xf]
    %v772 = vperm.slane %v770, 0
    %v773 = vperm.slane %v770, 1
    %v774 = vperm.slane %v770, 2
    %v775 = vperm.slane %v770, 3
    %v780 = vmul.f32 %v761, %v772
    %v781 = vmul.f32 %v757, %v773
    %v782 = vmul.f32 %v753, %v774
    %v783 = vmul.f32 %v765, %v775
    %v784 = vmul.f32 %v762, %v772
    %v785 = vmul.f32 %v758, %v773
    %v786 = vmul.f32 %v754, %v774
    %v787 = vmul.f32 %v766, %v775
    %v788 = vmul.f32 %v763, %v772
    %v789 = vmul.f32 %v759, %v773
    %v790 = vmul.f32 %v755, %v774
    %v791 = vmul.f32 %v767, %v775
    %v792 = vmul.f32 %v764, %v772
    %v793 = vmul.f32 %v760, %v773
    %v794 = vmul.f32 %v756, %v774
    %v795 = vmul.f32 %v768, %v775
    %v796 = vpack.c.bf16 %v781, %v780
    %v797 = vpack.c.bf16 %v783, %v782
    %v798 = vpack.c.bf16 %v785, %v784
    %v799 = vpack.c.bf16 %v787, %v786
    %v800 = vpack.c.bf16 %v789, %v788
    %v801 = vpack.c.bf16 %v791, %v790
    %v802 = vpack.c.bf16 %v793, %v792
    %v803 = vpack.c.bf16 %v795, %v794
    %804 = vst [vmem:[#allocation2 + $0x200] sm:$0xff] %v796
    %805 = vst [vmem:[#allocation2 + $0x208] sm:$0xff] %v797
    %806 = vst [vmem:[#allocation2 + $0x210] sm:$0xff] %v798
    %807 = vst [vmem:[#allocation2 + $0x218] sm:$0xff] %v799
    %808 = vst [vmem:[#allocation2 + $0x220] sm:$0xff] %v800
    %809 = vst [vmem:[#allocation2 + $0x228] sm:$0xff] %v801
    %810 = vst [vmem:[#allocation2 + $0x230] sm:$0xff] %v802
    %811 = vst [vmem:[#allocation2 + $0x238] sm:$0xff] %v803
    %v812 = vld [vmem:[%s4] sm:$0xff]
    %v813 = vld [vmem:[%s4 + $0x8] sm:$0xf]
    %v814 = vld [vmem:[%s4 + $0xc] sm:$0xff]
    %v815 = vld [vmem:[%s4 + $0x14] sm:$0xf]
    %v816 = vld [vmem:[%s4 + $0x18] sm:$0xff]
    %v817 = vld [vmem:[%s4 + $0x20] sm:$0xf]
    %v818 = vld [vmem:[%s4 + $0x24] sm:$0xff]
    %v819 = vld [vmem:[%s4 + $0x2c] sm:$0xf]
    %v820 = vld [vmem:[#allocation2] sm:$0xff]
    %v821 = vld [vmem:[#allocation2 + $0x8] sm:$0xff]
    %v822 = vld [vmem:[#allocation2 + $0x10] sm:$0xff]
    %v823 = vld [vmem:[#allocation2 + $0x18] sm:$0xff]
    %v824 = vld [vmem:[#allocation2 + $0x20] sm:$0xff]
    %v825 = vld [vmem:[#allocation2 + $0x28] sm:$0xff]
    %v826 = vld [vmem:[#allocation2 + $0x30] sm:$0xff]
    %v827 = vld [vmem:[#allocation2 + $0x38] sm:$0xff]
    %v828 = vld [vmem:[#allocation2 + $0x40] sm:$0xff]
    %v829 = vld [vmem:[#allocation2 + $0x48] sm:$0xff]
    %v830 = vld [vmem:[#allocation2 + $0x50] sm:$0xff]
    %v831 = vld [vmem:[#allocation2 + $0x58] sm:$0xff]
    %v832 = vld [vmem:[#allocation2 + $0x60] sm:$0xff]
    %v833 = vld [vmem:[#allocation2 + $0x68] sm:$0xff]
    %v834 = vld [vmem:[#allocation2 + $0x70] sm:$0xff]
    %v835 = vld [vmem:[#allocation2 + $0x78] sm:$0xff]
    %v836 = vld [vmem:[#allocation2 + $0x80] sm:$0xff]
    %v837 = vld [vmem:[#allocation2 + $0x88] sm:$0xff]
    %v838 = vld [vmem:[#allocation2 + $0x90] sm:$0xff]
    %v839 = vld [vmem:[#allocation2 + $0x98] sm:$0xff]
    %v840 = vld [vmem:[#allocation2 + $0xa0] sm:$0xff]
    %v841 = vld [vmem:[#allocation2 + $0xa8] sm:$0xff]
    %v842 = vld [vmem:[#allocation2 + $0xb0] sm:$0xff]
    %v843 = vld [vmem:[#allocation2 + $0xb8] sm:$0xff]
    %v844 = vld [vmem:[#allocation2 + $0xc0] sm:$0xff]
    %v845 = vld [vmem:[#allocation2 + $0xc8] sm:$0xff]
    %v846 = vld [vmem:[#allocation2 + $0xd0] sm:$0xff]
    %v847 = vld [vmem:[#allocation2 + $0xd8] sm:$0xff]
    %v848 = vld [vmem:[#allocation2 + $0xe0] sm:$0xff]
    %v849 = vld [vmem:[#allocation2 + $0xe8] sm:$0xff]
    %v850 = vld [vmem:[#allocation2 + $0xf0] sm:$0xff]
    %v851 = vld [vmem:[#allocation2 + $0xf8] sm:$0xff]
    %v852 = vld [vmem:[#allocation2 + $0x100] sm:$0xff]
    %v853 = vld [vmem:[#allocation2 + $0x108] sm:$0xff]
    %v854 = vld [vmem:[#allocation2 + $0x110] sm:$0xff]
    %v855 = vld [vmem:[#allocation2 + $0x118] sm:$0xff]
    %v856 = vld [vmem:[#allocation2 + $0x120] sm:$0xff]
    %v857 = vld [vmem:[#allocation2 + $0x128] sm:$0xff]
    %v858 = vld [vmem:[#allocation2 + $0x130] sm:$0xff]
    %v859 = vld [vmem:[#allocation2 + $0x138] sm:$0xff]
    %v860 = vld [vmem:[#allocation2 + $0x140] sm:$0xff]
    %v861 = vld [vmem:[#allocation2 + $0x148] sm:$0xff]
    %v862 = vld [vmem:[#allocation2 + $0x150] sm:$0xff]
    %v863 = vld [vmem:[#allocation2 + $0x158] sm:$0xff]
    %v864 = vld [vmem:[#allocation2 + $0x160] sm:$0xff]
    %v865 = vld [vmem:[#allocation2 + $0x168] sm:$0xff]
    %v866 = vld [vmem:[#allocation2 + $0x170] sm:$0xff]
    %v867 = vld [vmem:[#allocation2 + $0x178] sm:$0xff]
    %v868 = vld [vmem:[#allocation2 + $0x180] sm:$0xff]
    %v869 = vld [vmem:[#allocation2 + $0x188] sm:$0xff]
    %v870 = vld [vmem:[#allocation2 + $0x190] sm:$0xff]
    %v871 = vld [vmem:[#allocation2 + $0x198] sm:$0xff]
    %v872 = vld [vmem:[#allocation2 + $0x1a0] sm:$0xff]
    %v873 = vld [vmem:[#allocation2 + $0x1a8] sm:$0xff]
    %v874 = vld [vmem:[#allocation2 + $0x1b0] sm:$0xff]
    %v875 = vld [vmem:[#allocation2 + $0x1b8] sm:$0xff]
    %v876 = vld [vmem:[#allocation2 + $0x1c0] sm:$0xff]
    %v877 = vld [vmem:[#allocation2 + $0x1c8] sm:$0xff]
    %v878 = vld [vmem:[#allocation2 + $0x1d0] sm:$0xff]
    %v879 = vld [vmem:[#allocation2 + $0x1d8] sm:$0xff]
    %v880 = vld [vmem:[#allocation2 + $0x1e0] sm:$0xff]
    %v881 = vld [vmem:[#allocation2 + $0x1e8] sm:$0xff]
    %v882 = vld [vmem:[#allocation2 + $0x1f0] sm:$0xff]
    %v883 = vld [vmem:[#allocation2 + $0x1f8] sm:$0xff]
    %v884 = vld [vmem:[#allocation2 + $0x200] sm:$0xff]
    %v885 = vld [vmem:[#allocation2 + $0x208] sm:$0xff]
    %v886 = vld [vmem:[#allocation2 + $0x210] sm:$0xff]
    %v887 = vld [vmem:[#allocation2 + $0x218] sm:$0xff]
    %v888 = vld [vmem:[#allocation2 + $0x220] sm:$0xff]
    %v889 = vld [vmem:[#allocation2 + $0x228] sm:$0xff]
    %v890 = vld [vmem:[#allocation2 + $0x230] sm:$0xff]
    %v891 = vld [vmem:[#allocation2 + $0x238] sm:$0xff]
    %v892 = vld [vmem:[%s5] sm:$0xff]
    %v893 = vld [vmem:[%s5 + $0x8] sm:$0xff]
    %v894 = vld [vmem:[%s5 + $0x10] sm:$0xff]
    %v895 = vld [vmem:[%s5 + $0x18] sm:$0xff]
    %897 = vset.pattern.permute.xlu0 0
    %898 = vperm.xlu0 %897, %v892
    %v899 = vpop.permute.xlu0 %898
    %902 = vset.pattern.permute.xlu0 0
    %903 = vperm.xlu0 %902, %v893
    %v904 = vpop.permute.xlu0 %903
    %907 = vset.pattern.permute.xlu0 0
    %908 = vperm.xlu0 %907, %v894
    %v909 = vpop.permute.xlu0 %908
    %912 = vset.pattern.permute.xlu0 0
    %913 = vperm.xlu0 %912, %v895
    %v914 = vpop.permute.xlu0 %913
    %v924 = vunpack.c.l.b16 %v812
    %v925 = vunpack.c.h.b16 %v812
    %v926 = vunpack.c.l.b16 %v813
    %v927 = vunpack.c.l.b16 %v814
    %v928 = vunpack.c.h.b16 %v814
    %v929 = vunpack.c.l.b16 %v815
    %v930 = vunpack.c.l.b16 %v816
    %v931 = vunpack.c.h.b16 %v816
    %v932 = vunpack.c.l.b16 %v817
    %v933 = vunpack.c.l.b16 %v818
    %v934 = vunpack.c.h.b16 %v818
    %v935 = vunpack.c.l.b16 %v819
    %v936 = vpack.c.b16 %v927, %v924
    %v937 = vpack.c.b16 %v928, %v925
    %v938 = vpack.c.b16 %v929, %v926
    %v939 = vpack.c.b16 %v933, %v930
    %v940 = vpack.c.b16 %v934, %v931
    %v941 = vpack.c.b16 %v935, %v932
    %v1018 = vunpack.c.l.b16 %v820
    %v1019 = vunpack.c.h.b16 %v820
    %v1020 = vunpack.c.l.b16 %v821
    %v1021 = vunpack.c.h.b16 %v821
    %v1022 = vunpack.c.l.b16 %v822
    %v1023 = vunpack.c.h.b16 %v822
    %v1024 = vunpack.c.l.b16 %v823
    %v1025 = vunpack.c.h.b16 %v823
    %v1026 = vunpack.c.l.b16 %v824
    %v1027 = vunpack.c.h.b16 %v824
    %v1028 = vunpack.c.l.b16 %v825
    %v1029 = vunpack.c.h.b16 %v825
    %v1030 = vunpack.c.l.b16 %v826
    %v1031 = vunpack.c.h.b16 %v826
    %v1032 = vunpack.c.l.b16 %v827
    %v1033 = vunpack.c.h.b16 %v827
    %v1034 = vunpack.c.l.b16 %v828
    %v1035 = vunpack.c.h.b16 %v828
    %v1036 = vunpack.c.l.b16 %v829
    %v1037 = vunpack.c.h.b16 %v829
    %v1038 = vunpack.c.l.b16 %v830
    %v1039 = vunpack.c.h.b16 %v830
    %v1040 = vunpack.c.l.b16 %v831
    %v1041 = vunpack.c.h.b16 %v831
    %v1042 = vunpack.c.l.b16 %v832
    %v1043 = vunpack.c.h.b16 %v832
    %v1044 = vunpack.c.l.b16 %v833
    %v1045 = vunpack.c.h.b16 %v833
    %v1046 = vunpack.c.l.b16 %v834
    %v1047 = vunpack.c.h.b16 %v834
    %v1048 = vunpack.c.l.b16 %v835
    %v1049 = vunpack.c.h.b16 %v835
    %v1050 = vunpack.c.l.b16 %v836
    %v1051 = vunpack.c.h.b16 %v836
    %v1052 = vunpack.c.l.b16 %v837
    %v1053 = vunpack.c.h.b16 %v837
    %v1054 = vunpack.c.l.b16 %v838
    %v1055 = vunpack.c.h.b16 %v838
    %v1056 = vunpack.c.l.b16 %v839
    %v1057 = vunpack.c.h.b16 %v839
    %v1058 = vunpack.c.l.b16 %v840
    %v1059 = vunpack.c.h.b16 %v840
    %v1060 = vunpack.c.l.b16 %v841
    %v1061 = vunpack.c.h.b16 %v841
    %v1062 = vunpack.c.l.b16 %v842
    %v1063 = vunpack.c.h.b16 %v842
    %v1064 = vunpack.c.l.b16 %v843
    %v1065 = vunpack.c.h.b16 %v843
    %v1066 = vunpack.c.l.b16 %v844
    %v1067 = vunpack.c.h.b16 %v844
    %v1068 = vunpack.c.l.b16 %v845
    %v1069 = vunpack.c.h.b16 %v845
    %v1070 = vunpack.c.l.b16 %v846
    %v1071 = vunpack.c.h.b16 %v846
    %v1072 = vunpack.c.l.b16 %v847
    %v1073 = vunpack.c.h.b16 %v847
    %v1074 = vunpack.c.l.b16 %v848
    %v1075 = vunpack.c.h.b16 %v848
    %v1076 = vunpack.c.l.b16 %v849
    %v1077 = vunpack.c.h.b16 %v849
    %v1078 = vunpack.c.l.b16 %v850
    %v1079 = vunpack.c.h.b16 %v850
    %v1080 = vunpack.c.l.b16 %v851
    %v1081 = vunpack.c.h.b16 %v851
    %v1082 = vunpack.c.l.b16 %v852
    %v1083 = vunpack.c.h.b16 %v852
    %v1084 = vunpack.c.l.b16 %v853
    %v1085 = vunpack.c.h.b16 %v853
    %v1086 = vunpack.c.l.b16 %v854
    %v1087 = vunpack.c.h.b16 %v854
    %v1088 = vunpack.c.l.b16 %v855
    %v1089 = vunpack.c.h.b16 %v855
    %v1090 = vunpack.c.l.b16 %v856
    %v1091 = vunpack.c.h.b16 %v856
    %v1092 = vunpack.c.l.b16 %v857
    %v1093 = vunpack.c.h.b16 %v857
    %v1094 = vunpack.c.l.b16 %v858
    %v1095 = vunpack.c.h.b16 %v858
    %v1096 = vunpack.c.l.b16 %v859
    %v1097 = vunpack.c.h.b16 %v859
    %v1098 = vunpack.c.l.b16 %v860
    %v1099 = vunpack.c.h.b16 %v860
    %v1100 = vunpack.c.l.b16 %v861
    %v1101 = vunpack.c.h.b16 %v861
    %v1102 = vunpack.c.l.b16 %v862
    %v1103 = vunpack.c.h.b16 %v862
    %v1104 = vunpack.c.l.b16 %v863
    %v1105 = vunpack.c.h.b16 %v863
    %v1106 = vunpack.c.l.b16 %v864
    %v1107 = vunpack.c.h.b16 %v864
    %v1108 = vunpack.c.l.b16 %v865
    %v1109 = vunpack.c.h.b16 %v865
    %v1110 = vunpack.c.l.b16 %v866
    %v1111 = vunpack.c.h.b16 %v866
    %v1112 = vunpack.c.l.b16 %v867
    %v1113 = vunpack.c.h.b16 %v867
    %v1114 = vunpack.c.l.b16 %v868
    %v1115 = vunpack.c.h.b16 %v868
    %v1116 = vunpack.c.l.b16 %v869
    %v1117 = vunpack.c.h.b16 %v869
    %v1118 = vunpack.c.l.b16 %v870
    %v1119 = vunpack.c.h.b16 %v870
    %v1120 = vunpack.c.l.b16 %v871
    %v1121 = vunpack.c.h.b16 %v871
    %v1122 = vunpack.c.l.b16 %v872
    %v1123 = vunpack.c.h.b16 %v872
    %v1124 = vunpack.c.l.b16 %v873
    %v1125 = vunpack.c.h.b16 %v873
    %v1126 = vunpack.c.l.b16 %v874
    %v1127 = vunpack.c.h.b16 %v874
    %v1128 = vunpack.c.l.b16 %v875
    %v1129 = vunpack.c.h.b16 %v875
    %v1130 = vunpack.c.l.b16 %v876
    %v1131 = vunpack.c.h.b16 %v876
    %v1132 = vunpack.c.l.b16 %v877
    %v1133 = vunpack.c.h.b16 %v877
    %v1134 = vunpack.c.l.b16 %v878
    %v1135 = vunpack.c.h.b16 %v878
    %v1136 = vunpack.c.l.b16 %v879
    %v1137 = vunpack.c.h.b16 %v879
    %v1138 = vunpack.c.l.b16 %v880
    %v1139 = vunpack.c.h.b16 %v880
    %v1140 = vunpack.c.l.b16 %v881
    %v1141 = vunpack.c.h.b16 %v881
    %v1142 = vunpack.c.l.b16 %v882
    %v1143 = vunpack.c.h.b16 %v882
    %v1144 = vunpack.c.l.b16 %v883
    %v1145 = vunpack.c.h.b16 %v883
    %v1146 = vunpack.c.l.b16 %v884
    %v1147 = vunpack.c.h.b16 %v884
    %v1148 = vunpack.c.l.b16 %v885
    %v1149 = vunpack.c.h.b16 %v885
    %v1150 = vunpack.c.l.b16 %v886
    %v1151 = vunpack.c.h.b16 %v886
    %v1152 = vunpack.c.l.b16 %v887
    %v1153 = vunpack.c.h.b16 %v887
    %v1154 = vunpack.c.l.b16 %v888
    %v1155 = vunpack.c.h.b16 %v888
    %v1156 = vunpack.c.l.b16 %v889
    %v1157 = vunpack.c.h.b16 %v889
    %v1158 = vunpack.c.l.b16 %v890
    %v1159 = vunpack.c.h.b16 %v890
    %v1160 = vunpack.c.l.b16 %v891
    %v1161 = vunpack.c.h.b16 %v891
    %v1162 = vpack.c.b16 %v1022, %v1018
    %v1163 = vpack.c.b16 %v1023, %v1019
    %v1164 = vpack.c.b16 %v1024, %v1020
    %v1165 = vpack.c.b16 %v1025, %v1021
    %v1166 = vpack.c.b16 %v1030, %v1026
    %v1167 = vpack.c.b16 %v1031, %v1027
    %v1168 = vpack.c.b16 %v1032, %v1028
    %v1169 = vpack.c.b16 %v1033, %v1029
    %v1170 = vpack.c.b16 %v1038, %v1034
    %v1171 = vpack.c.b16 %v1039, %v1035
    %v1172 = vpack.c.b16 %v1040, %v1036
    %v1173 = vpack.c.b16 %v1041, %v1037
    %v1174 = vpack.c.b16 %v1046, %v1042
    %v1175 = vpack.c.b16 %v1047, %v1043
    %v1176 = vpack.c.b16 %v1048, %v1044
    %v1177 = vpack.c.b16 %v1049, %v1045
    %v1178 = vpack.c.b16 %v1054, %v1050
    %v1179 = vpack.c.b16 %v1055, %v1051
    %v1180 = vpack.c.b16 %v1056, %v1052
    %v1181 = vpack.c.b16 %v1057, %v1053
    %v1182 = vpack.c.b16 %v1062, %v1058
    %v1183 = vpack.c.b16 %v1063, %v1059
    %v1184 = vpack.c.b16 %v1064, %v1060
    %v1185 = vpack.c.b16 %v1065, %v1061
    %v1186 = vpack.c.b16 %v1070, %v1066
    %v1187 = vpack.c.b16 %v1071, %v1067
    %v1188 = vpack.c.b16 %v1072, %v1068
    %v1189 = vpack.c.b16 %v1073, %v1069
    %v1190 = vpack.c.b16 %v1078, %v1074
    %v1191 = vpack.c.b16 %v1079, %v1075
    %v1192 = vpack.c.b16 %v1080, %v1076
    %v1193 = vpack.c.b16 %v1081, %v1077
    %v1194 = vpack.c.b16 %v1086, %v1082
    %v1195 = vpack.c.b16 %v1087, %v1083
    %v1196 = vpack.c.b16 %v1088, %v1084
    %v1197 = vpack.c.b16 %v1089, %v1085
    %v1198 = vpack.c.b16 %v1094, %v1090
    %v1199 = vpack.c.b16 %v1095, %v1091
    %v1200 = vpack.c.b16 %v1096, %v1092
    %v1201 = vpack.c.b16 %v1097, %v1093
    %v1202 = vpack.c.b16 %v1102, %v1098
    %v1203 = vpack.c.b16 %v1103, %v1099
    %v1204 = vpack.c.b16 %v1104, %v1100
    %v1205 = vpack.c.b16 %v1105, %v1101
    %v1206 = vpack.c.b16 %v1110, %v1106
    %v1207 = vpack.c.b16 %v1111, %v1107
    %v1208 = vpack.c.b16 %v1112, %v1108
    %v1209 = vpack.c.b16 %v1113, %v1109
    %v1210 = vpack.c.b16 %v1118, %v1114
    %v1211 = vpack.c.b16 %v1119, %v1115
    %v1212 = vpack.c.b16 %v1120, %v1116
    %v1213 = vpack.c.b16 %v1121, %v1117
    %v1214 = vpack.c.b16 %v1126, %v1122
    %v1215 = vpack.c.b16 %v1127, %v1123
    %v1216 = vpack.c.b16 %v1128, %v1124
    %v1217 = vpack.c.b16 %v1129, %v1125
    %v1218 = vpack.c.b16 %v1134, %v1130
    %v1219 = vpack.c.b16 %v1135, %v1131
    %v1220 = vpack.c.b16 %v1136, %v1132
    %v1221 = vpack.c.b16 %v1137, %v1133
    %v1222 = vpack.c.b16 %v1142, %v1138
    %v1223 = vpack.c.b16 %v1143, %v1139
    %v1224 = vpack.c.b16 %v1144, %v1140
    %v1225 = vpack.c.b16 %v1145, %v1141
    %v1226 = vpack.c.b16 %v1150, %v1146
    %v1227 = vpack.c.b16 %v1151, %v1147
    %v1228 = vpack.c.b16 %v1152, %v1148
    %v1229 = vpack.c.b16 %v1153, %v1149
    %v1230 = vpack.c.b16 %v1158, %v1154
    %v1231 = vpack.c.b16 %v1159, %v1155
    %v1232 = vpack.c.b16 %v1160, %v1156
    %v1233 = vpack.c.b16 %v1161, %v1157
    %vm1306 = vcmask 261120
    %v1308 = vsel %vm1306, %v938, 0
    %v1311 = vsel %vm1306, %v941, 0
    %1313 = vmatpush.bf16.msra.mxu0 %v1190
    %1314 = vmatpush.bf16.msra.mxu0 %v1186
    %1315 = vmatpush.bf16.msra.mxu0 %v1182
    %1316 = vmatpush.bf16.msra.mxu0 %v1178
    %1317 = vmatpush.bf16.msra.mxu0 %v1174
    %1318 = vmatpush.bf16.msra.mxu0 %v1170
    %1319 = vmatpush.bf16.msra.mxu0 %v1166
    %1320 = vmatpush.bf16.msra.mxu0 %v1162
    %1321 = vmatmul.bf16.gmra.mxu0 %v936
    %v1322 = vpop.f32.mrf.mxu0
    %v1323 = vadd.f32 %v899, %v1322
    %v1324 = vpop.f32.mrf.mxu0
    %v1325 = vadd.f32 %v904, %v1324
    %1326 = vmatmul.bf16.gmra.mxu0 %v939
    %v1327 = vpop.f32.mrf.mxu0
    %v1328 = vadd.f32 %v909, %v1327
    %v1329 = vpop.f32.mrf.mxu0
    %v1330 = vadd.f32 %v914, %v1329
    %1331 = vdwg.mxu0
    %1332 = vmatpush.bf16.msra.mxu0 %v1222
    %1333 = vmatpush.bf16.msra.mxu0 %v1218
    %1334 = vmatpush.bf16.msra.mxu0 %v1214
    %1335 = vmatpush.bf16.msra.mxu0 %v1210
    %1336 = vmatpush.bf16.msra.mxu0 %v1206
    %1337 = vmatpush.bf16.msra.mxu0 %v1202
    %1338 = vmatpush.bf16.msra.mxu0 %v1198
    %1339 = vmatpush.bf16.msra.mxu0 %v1194
    %1340 = vmatmul.bf16.gmra.mxu0 %v937
    %v1341 = vpop.f32.mrf.mxu0
    %v1342 = vadd.f32 %v1323, %v1341
    %v1343 = vpop.f32.mrf.mxu0
    %v1344 = vadd.f32 %v1325, %v1343
    %1345 = vmatmul.bf16.gmra.mxu0 %v940
    %v1346 = vpop.f32.mrf.mxu0
    %v1347 = vadd.f32 %v1328, %v1346
    %v1348 = vpop.f32.mrf.mxu0
    %v1349 = vadd.f32 %v1330, %v1348
    %1350 = vdwg.mxu0
    %1351 = vmatpush.bf16.msra.mxu0 0
    %1352 = vmatpush.bf16.msra.mxu0 0
    %1353 = vmatpush.bf16.msra.mxu0 0
    %1354 = vmatpush.bf16.msra.mxu0 0
    %1355 = vmatpush.bf16.msra.mxu0 0
    %1356 = vmatpush.bf16.msra.mxu0 0
    %1357 = vmatpush.bf16.msra.mxu0 %v1230
    %1358 = vmatpush.bf16.msra.mxu0 %v1226
    %1359 = vmatmul.bf16.gmra.mxu0 %v1308
    %v1360 = vpop.f32.mrf.mxu0
    %v1361 = vadd.f32 %v1342, %v1360
    %v1362 = vpop.f32.mrf.mxu0
    %v1363 = vadd.f32 %v1344, %v1362
    %1364 = vmatmul.bf16.gmra.mxu0 %v1311
    %v1365 = vpop.f32.mrf.mxu0
    %v1366 = vadd.f32 %v1347, %v1365
    %v1367 = vpop.f32.mrf.mxu0
    %v1368 = vadd.f32 %v1349, %v1367
    %1369 = vdwg.mxu0
    %1370 = vmatpush.bf16.msra.mxu0 %v1191
    %1371 = vmatpush.bf16.msra.mxu0 %v1187
    %1372 = vmatpush.bf16.msra.mxu0 %v1183
    %1373 = vmatpush.bf16.msra.mxu0 %v1179
    %1374 = vmatpush.bf16.msra.mxu0 %v1175
    %1375 = vmatpush.bf16.msra.mxu0 %v1171
    %1376 = vmatpush.bf16.msra.mxu0 %v1167
    %1377 = vmatpush.bf16.msra.mxu0 %v1163
    %1378 = vmatmul.bf16.gmra.mxu0 %v936
    %v1379 = vpop.f32.mrf.mxu0
    %v1380 = vadd.f32 %v899, %v1379
    %v1381 = vpop.f32.mrf.mxu0
    %v1382 = vadd.f32 %v904, %v1381
    %1383 = vmatmul.bf16.gmra.mxu0 %v939
    %v1384 = vpop.f32.mrf.mxu0
    %v1385 = vadd.f32 %v909, %v1384
    %v1386 = vpop.f32.mrf.mxu0
    %v1387 = vadd.f32 %v914, %v1386
    %1388 = vdwg.mxu0
    %1389 = vmatpush.bf16.msra.mxu0 %v1223
    %1390 = vmatpush.bf16.msra.mxu0 %v1219
    %1391 = vmatpush.bf16.msra.mxu0 %v1215
    %1392 = vmatpush.bf16.msra.mxu0 %v1211
    %1393 = vmatpush.bf16.msra.mxu0 %v1207
    %1394 = vmatpush.bf16.msra.mxu0 %v1203
    %1395 = vmatpush.bf16.msra.mxu0 %v1199
    %1396 = vmatpush.bf16.msra.mxu0 %v1195
    %1397 = vmatmul.bf16.gmra.mxu0 %v937
    %v1398 = vpop.f32.mrf.mxu0
    %v1399 = vadd.f32 %v1380, %v1398
    %v1400 = vpop.f32.mrf.mxu0
    %v1401 = vadd.f32 %v1382, %v1400
    %1402 = vmatmul.bf16.gmra.mxu0 %v940
    %v1403 = vpop.f32.mrf.mxu0
    %v1404 = vadd.f32 %v1385, %v1403
    %v1405 = vpop.f32.mrf.mxu0
    %v1406 = vadd.f32 %v1387, %v1405
    %1407 = vdwg.mxu0
    %1408 = vmatpush.bf16.msra.mxu0 0
    %1409 = vmatpush.bf16.msra.mxu0 0
    %1410 = vmatpush.bf16.msra.mxu0 0
    %1411 = vmatpush.bf16.msra.mxu0 0
    %1412 = vmatpush.bf16.msra.mxu0 0
    %1413 = vmatpush.bf16.msra.mxu0 0
    %1414 = vmatpush.bf16.msra.mxu0 %v1231
    %1415 = vmatpush.bf16.msra.mxu0 %v1227
    %1416 = vmatmul.bf16.gmra.mxu0 %v1308
    %v1417 = vpop.f32.mrf.mxu0
    %v1418 = vadd.f32 %v1399, %v1417
    %v1419 = vpop.f32.mrf.mxu0
    %v1420 = vadd.f32 %v1401, %v1419
    %1421 = vmatmul.bf16.gmra.mxu0 %v1311
    %v1422 = vpop.f32.mrf.mxu0
    %v1423 = vadd.f32 %v1404, %v1422
    %v1424 = vpop.f32.mrf.mxu0
    %v1425 = vadd.f32 %v1406, %v1424
    %1426 = vdwg.mxu0
    %1427 = vmatpush.bf16.msra.mxu0 %v1192
    %1428 = vmatpush.bf16.msra.mxu0 %v1188
    %1429 = vmatpush.bf16.msra.mxu0 %v1184
    %1430 = vmatpush.bf16.msra.mxu0 %v1180
    %1431 = vmatpush.bf16.msra.mxu0 %v1176
    %1432 = vmatpush.bf16.msra.mxu0 %v1172
    %1433 = vmatpush.bf16.msra.mxu0 %v1168
    %1434 = vmatpush.bf16.msra.mxu0 %v1164
    %1435 = vmatmul.bf16.gmra.mxu0 %v936
    %v1436 = vpop.f32.mrf.mxu0
    %v1437 = vadd.f32 %v899, %v1436
    %v1438 = vpop.f32.mrf.mxu0
    %v1439 = vadd.f32 %v904, %v1438
    %1440 = vmatmul.bf16.gmra.mxu0 %v939
    %v1441 = vpop.f32.mrf.mxu0
    %v1442 = vadd.f32 %v909, %v1441
    %v1443 = vpop.f32.mrf.mxu0
    %v1444 = vadd.f32 %v914, %v1443
    %1445 = vdwg.mxu0
    %1446 = vmatpush.bf16.msra.mxu0 %v1224
    %1447 = vmatpush.bf16.msra.mxu0 %v1220
    %1448 = vmatpush.bf16.msra.mxu0 %v1216
    %1449 = vmatpush.bf16.msra.mxu0 %v1212
    %1450 = vmatpush.bf16.msra.mxu0 %v1208
    %1451 = vmatpush.bf16.msra.mxu0 %v1204
    %1452 = vmatpush.bf16.msra.mxu0 %v1200
    %1453 = vmatpush.bf16.msra.mxu0 %v1196
    %1454 = vmatmul.bf16.gmra.mxu0 %v937
    %v1455 = vpop.f32.mrf.mxu0
    %v1456 = vadd.f32 %v1437, %v1455
    %v1457 = vpop.f32.mrf.mxu0
    %v1458 = vadd.f32 %v1439, %v1457
    %1459 = vmatmul.bf16.gmra.mxu0 %v940
    %v1460 = vpop.f32.mrf.mxu0
    %v1461 = vadd.f32 %v1442, %v1460
    %v1462 = vpop.f32.mrf.mxu0
    %v1463 = vadd.f32 %v1444, %v1462
    %1464 = vdwg.mxu0
    %1465 = vmatpush.bf16.msra.mxu0 0
    %1466 = vmatpush.bf16.msra.mxu0 0
    %1467 = vmatpush.bf16.msra.mxu0 0
    %1468 = vmatpush.bf16.msra.mxu0 0
    %1469 = vmatpush.bf16.msra.mxu0 0
    %1470 = vmatpush.bf16.msra.mxu0 0
    %1471 = vmatpush.bf16.msra.mxu0 %v1232
    %1472 = vmatpush.bf16.msra.mxu0 %v1228
    %1473 = vmatmul.bf16.gmra.mxu0 %v1308
    %v1474 = vpop.f32.mrf.mxu0
    %v1475 = vadd.f32 %v1456, %v1474
    %v1476 = vpop.f32.mrf.mxu0
    %v1477 = vadd.f32 %v1458, %v1476
    %1478 = vmatmul.bf16.gmra.mxu0 %v1311
    %v1479 = vpop.f32.mrf.mxu0
    %v1480 = vadd.f32 %v1461, %v1479
    %v1481 = vpop.f32.mrf.mxu0
    %v1482 = vadd.f32 %v1463, %v1481
    %1483 = vdwg.mxu0
    %1484 = vmatpush.bf16.msra.mxu0 %v1193
    %1485 = vmatpush.bf16.msra.mxu0 %v1189
    %1486 = vmatpush.bf16.msra.mxu0 %v1185
    %1487 = vmatpush.bf16.msra.mxu0 %v1181
    %1488 = vmatpush.bf16.msra.mxu0 %v1177
    %1489 = vmatpush.bf16.msra.mxu0 %v1173
    %1490 = vmatpush.bf16.msra.mxu0 %v1169
    %1491 = vmatpush.bf16.msra.mxu0 %v1165
    %1492 = vmatmul.bf16.gmra.mxu0 %v936
    %v1493 = vpop.f32.mrf.mxu0
    %v1494 = vadd.f32 %v899, %v1493
    %v1495 = vpop.f32.mrf.mxu0
    %v1496 = vadd.f32 %v904, %v1495
    %1497 = vmatmul.bf16.gmra.mxu0 %v939
    %v1498 = vpop.f32.mrf.mxu0
    %v1499 = vadd.f32 %v909, %v1498
    %v1500 = vpop.f32.mrf.mxu0
    %v1501 = vadd.f32 %v914, %v1500
    %1502 = vdwg.mxu0
    %1503 = vmatpush.bf16.msra.mxu0 %v1225
    %1504 = vmatpush.bf16.msra.mxu0 %v1221
    %1505 = vmatpush.bf16.msra.mxu0 %v1217
    %1506 = vmatpush.bf16.msra.mxu0 %v1213
    %1507 = vmatpush.bf16.msra.mxu0 %v1209
    %1508 = vmatpush.bf16.msra.mxu0 %v1205
    %1509 = vmatpush.bf16.msra.mxu0 %v1201
    %1510 = vmatpush.bf16.msra.mxu0 %v1197
    %1511 = vmatmul.bf16.gmra.mxu0 %v937
    %v1512 = vpop.f32.mrf.mxu0
    %v1513 = vadd.f32 %v1494, %v1512
    %v1514 = vpop.f32.mrf.mxu0
    %v1515 = vadd.f32 %v1496, %v1514
    %1516 = vmatmul.bf16.gmra.mxu0 %v940
    %v1517 = vpop.f32.mrf.mxu0
    %v1518 = vadd.f32 %v1499, %v1517
    %v1519 = vpop.f32.mrf.mxu0
    %v1520 = vadd.f32 %v1501, %v1519
    %1521 = vdwg.mxu0
    %1522 = vmatpush.bf16.msra.mxu0 0
    %1523 = vmatpush.bf16.msra.mxu0 0
    %1524 = vmatpush.bf16.msra.mxu0 0
    %1525 = vmatpush.bf16.msra.mxu0 0
    %1526 = vmatpush.bf16.msra.mxu0 0
    %1527 = vmatpush.bf16.msra.mxu0 0
    %1528 = vmatpush.bf16.msra.mxu0 %v1233
    %1529 = vmatpush.bf16.msra.mxu0 %v1229
    %1530 = vmatmul.bf16.gmra.mxu0 %v1308
    %v1531 = vpop.f32.mrf.mxu0
    %v1532 = vadd.f32 %v1513, %v1531
    %v1533 = vpop.f32.mrf.mxu0
    %v1534 = vadd.f32 %v1515, %v1533
    %1535 = vmatmul.bf16.gmra.mxu0 %v1311
    %v1536 = vpop.f32.mrf.mxu0
    %v1537 = vadd.f32 %v1518, %v1536
    %v1538 = vpop.f32.mrf.mxu0
    %v1539 = vadd.f32 %v1520, %v1538
    %1540 = vdwg.mxu0
    %v1541 = vmax.f32 %v1361, 0.0
    %v1542 = vmax.f32 %v1418, 0.0
    %v1543 = vmax.f32 %v1475, 0.0
    %v1544 = vmax.f32 %v1532, 0.0
    %v1545 = vmax.f32 %v1363, 0.0
    %v1546 = vmax.f32 %v1420, 0.0
    %v1547 = vmax.f32 %v1477, 0.0
    %v1548 = vmax.f32 %v1534, 0.0
    %v1549 = vmax.f32 %v1366, 0.0
    %v1550 = vmax.f32 %v1423, 0.0
    %v1551 = vmax.f32 %v1480, 0.0
    %v1552 = vmax.f32 %v1537, 0.0
    %v1553 = vmax.f32 %v1368, 0.0
    %v1554 = vmax.f32 %v1425, 0.0
    %v1555 = vmax.f32 %v1482, 0.0
    %v1556 = vmax.f32 %v1539, 0.0
    %1557 = vrot.lane.b32.xlu0 %v1541, 17
    %v1558 = vpop.permute.xlu0 %1557
    %1559 = vrot.lane.b32.xlu0 %v1545, 17
    %v1560 = vpop.permute.xlu0 %1559
    %1561 = vrot.lane.b32.xlu0 %v1549, 17
    %v1562 = vpop.permute.xlu0 %1561
    %1563 = vrot.lane.b32.xlu0 %v1553, 17
    %v1564 = vpop.permute.xlu0 %1563
    %1565 = vrot.lane.b32.xlu0 %v1542, 17
    %v1566 = vpop.permute.xlu0 %1565
    %1567 = vrot.lane.b32.xlu0 %v1546, 17
    %v1568 = vpop.permute.xlu0 %1567
    %1569 = vrot.lane.b32.xlu0 %v1550, 17
    %v1570 = vpop.permute.xlu0 %1569
    %1571 = vrot.lane.b32.xlu0 %v1554, 17
    %v1572 = vpop.permute.xlu0 %1571
    %1573 = vrot.lane.b32.xlu0 %v1543, 17
    %v1574 = vpop.permute.xlu0 %1573
    %1575 = vrot.lane.b32.xlu0 %v1547, 17
    %v1576 = vpop.permute.xlu0 %1575
    %1577 = vrot.lane.b32.xlu0 %v1551, 17
    %v1578 = vpop.permute.xlu0 %1577
    %1579 = vrot.lane.b32.xlu0 %v1555, 17
    %v1580 = vpop.permute.xlu0 %1579
    %1581 = vrot.lane.b32.xlu0 %v1544, 17
    %v1582 = vpop.permute.xlu0 %1581
    %1583 = vrot.lane.b32.xlu0 %v1548, 17
    %v1584 = vpop.permute.xlu0 %1583
    %1585 = vrot.lane.b32.xlu0 %v1552, 17
    %v1586 = vpop.permute.xlu0 %1585
    %1587 = vrot.lane.b32.xlu0 %v1556, 17
    %v1588 = vpop.permute.xlu0 %1587
    %v1589 = vsel %vm93, %v1574, %v1582
    %v1590 = vsel %vm93, %v1576, %v1584
    %v1591 = vsel %vm93, %v1578, %v1586
    %v1592 = vsel %vm93, %v1580, %v1588
    %v1593 = vsel %vm93, %v1566, %v1574
    %v1594 = vsel %vm93, %v1568, %v1576
    %v1595 = vsel %vm93, %v1570, %v1578
    %v1596 = vsel %vm93, %v1572, %v1580
    %v1597 = vsel %vm93, %v1558, %v1566
    %v1598 = vsel %vm93, %v1560, %v1568
    %v1599 = vsel %vm93, %v1562, %v1570
    %v1600 = vsel %vm93, %v1564, %v1572
    %v1601 = vsel %vm93, %v1582, %v1558
    %v1602 = vsel %vm93, %v1584, %v1560
    %v1603 = vsel %vm93, %v1586, %v1562
    %v1604 = vsel %vm93, %v1588, %v1564
    %v1605 = vld [vmem:[%s1] ss:$8 sm:$0xf]
    %v1607 = vperm.slane %v1605, 0
    %v1608 = vperm.slane %v1605, 1
    %v1609 = vperm.slane %v1605, 2
    %v1610 = vperm.slane %v1605, 3
    %v1615 = vmul.f32 %v1601, %v1607
    %v1616 = vmul.f32 %v1597, %v1608
    %v1617 = vmul.f32 %v1593, %v1609
    %v1618 = vmul.f32 %v1589, %v1610
    %v1619 = vmul.f32 %v1602, %v1607
    %v1620 = vmul.f32 %v1598, %v1608
    %v1621 = vmul.f32 %v1594, %v1609
    %v1622 = vmul.f32 %v1590, %v1610
    %v1623 = vmul.f32 %v1603, %v1607
    %v1624 = vmul.f32 %v1599, %v1608
    %v1625 = vmul.f32 %v1595, %v1609
    %v1626 = vmul.f32 %v1591, %v1610
    %v1627 = vmul.f32 %v1604, %v1607
    %v1628 = vmul.f32 %v1600, %v1608
    %v1629 = vmul.f32 %v1596, %v1609
    %v1630 = vmul.f32 %v1592, %v1610
    %v1631 = vpack.c.bf16 %v1616, %v1615
    %v1632 = vpack.c.bf16 %v1618, %v1617
    %v1633 = vpack.c.bf16 %v1620, %v1619
    %v1634 = vpack.c.bf16 %v1622, %v1621
    %v1635 = vpack.c.bf16 %v1624, %v1623
    %v1636 = vpack.c.bf16 %v1626, %v1625
    %v1637 = vpack.c.bf16 %v1628, %v1627
    %v1638 = vpack.c.bf16 %v1630, %v1629
    %1639 = vst [vmem:[#allocation2] sm:$0xff] %v1631
    %1640 = vst [vmem:[#allocation2 + $0x8] sm:$0xff] %v1632
    %1641 = vst [vmem:[#allocation2 + $0x10] sm:$0xff] %v1633
    %1642 = vst [vmem:[#allocation2 + $0x18] sm:$0xff] %v1634
    %1643 = vst [vmem:[#allocation2 + $0x20] sm:$0xff] %v1635
    %1644 = vst [vmem:[#allocation2 + $0x28] sm:$0xff] %v1636
    %1645 = vst [vmem:[#allocation2 + $0x30] sm:$0xff] %v1637
    %1646 = vst [vmem:[#allocation2 + $0x38] sm:$0xff] %v1638
    %1647 = vrot.lane.b32.xlu0 %v1541, 16
    %v1648 = vpop.permute.xlu0 %1647
    %1649 = vrot.lane.b32.xlu0 %v1545, 16
    %v1650 = vpop.permute.xlu0 %1649
    %1651 = vrot.lane.b32.xlu0 %v1549, 16
    %v1652 = vpop.permute.xlu0 %1651
    %1653 = vrot.lane.b32.xlu0 %v1553, 16
    %v1654 = vpop.permute.xlu0 %1653
    %1655 = vrot.lane.b32.xlu0 %v1542, 16
    %v1656 = vpop.permute.xlu0 %1655
    %1657 = vrot.lane.b32.xlu0 %v1546, 16
    %v1658 = vpop.permute.xlu0 %1657
    %1659 = vrot.lane.b32.xlu0 %v1550, 16
    %v1660 = vpop.permute.xlu0 %1659
    %1661 = vrot.lane.b32.xlu0 %v1554, 16
    %v1662 = vpop.permute.xlu0 %1661
    %1663 = vrot.lane.b32.xlu0 %v1543, 16
    %v1664 = vpop.permute.xlu0 %1663
    %1665 = vrot.lane.b32.xlu0 %v1547, 16
    %v1666 = vpop.permute.xlu0 %1665
    %1667 = vrot.lane.b32.xlu0 %v1551, 16
    %v1668 = vpop.permute.xlu0 %1667
    %1669 = vrot.lane.b32.xlu0 %v1555, 16
    %v1670 = vpop.permute.xlu0 %1669
    %1671 = vrot.lane.b32.xlu0 %v1544, 16
    %v1672 = vpop.permute.xlu0 %1671
    %1673 = vrot.lane.b32.xlu0 %v1548, 16
    %v1674 = vpop.permute.xlu0 %1673
    %1675 = vrot.lane.b32.xlu0 %v1552, 16
    %v1676 = vpop.permute.xlu0 %1675
    %1677 = vrot.lane.b32.xlu0 %v1556, 16
    %v1678 = vpop.permute.xlu0 %1677
    %v1679 = vsel %vm184, %v1664, %v1672
    %v1680 = vsel %vm184, %v1666, %v1674
    %v1681 = vsel %vm184, %v1668, %v1676
    %v1682 = vsel %vm184, %v1670, %v1678
    %v1683 = vsel %vm184, %v1656, %v1664
    %v1684 = vsel %vm184, %v1658, %v1666
    %v1685 = vsel %vm184, %v1660, %v1668
    %v1686 = vsel %vm184, %v1662, %v1670
    %v1687 = vsel %vm184, %v1648, %v1656
    %v1688 = vsel %vm184, %v1650, %v1658
    %v1689 = vsel %vm184, %v1652, %v1660
    %v1690 = vsel %vm184, %v1654, %v1662
    %v1691 = vsel %vm184, %v1672, %v1648
    %v1692 = vsel %vm184, %v1674, %v1650
    %v1693 = vsel %vm184, %v1676, %v1652
    %v1694 = vsel %vm184, %v1678, %v1654
    %v1695 = vld [vmem:[%s201] ss:$8 sm:$0xf]
    %v1697 = vperm.slane %v1695, 0
    %v1698 = vperm.slane %v1695, 1
    %v1699 = vperm.slane %v1695, 2
    %v1700 = vperm.slane %v1695, 3
    %v1705 = vmul.f32 %v1691, %v1697
    %v1706 = vmul.f32 %v1687, %v1698
    %v1707 = vmul.f32 %v1683, %v1699
    %v1708 = vmul.f32 %v1679, %v1700
    %v1709 = vmul.f32 %v1692, %v1697
    %v1710 = vmul.f32 %v1688, %v1698
    %v1711 = vmul.f32 %v1684, %v1699
    %v1712 = vmul.f32 %v1680, %v1700
    %v1713 = vmul.f32 %v1693, %v1697
    %v1714 = vmul.f32 %v1689, %v1698
    %v1715 = vmul.f32 %v1685, %v1699
    %v1716 = vmul.f32 %v1681, %v1700
    %v1717 = vmul.f32 %v1694, %v1697
    %v1718 = vmul.f32 %v1690, %v1698
    %v1719 = vmul.f32 %v1686, %v1699
    %v1720 = vmul.f32 %v1682, %v1700
    %v1721 = vpack.c.bf16 %v1706, %v1705
    %v1722 = vpack.c.bf16 %v1708, %v1707
    %v1723 = vpack.c.bf16 %v1710, %v1709
    %v1724 = vpack.c.bf16 %v1712, %v1711
    %v1725 = vpack.c.bf16 %v1714, %v1713
    %v1726 = vpack.c.bf16 %v1716, %v1715
    %v1727 = vpack.c.bf16 %v1718, %v1717
    %v1728 = vpack.c.bf16 %v1720, %v1719
    %1729 = vst [vmem:[#allocation2 + $0x40] sm:$0xff] %v1721
    %1730 = vst [vmem:[#allocation2 + $0x48] sm:$0xff] %v1722
    %1731 = vst [vmem:[#allocation2 + $0x50] sm:$0xff] %v1723
    %1732 = vst [vmem:[#allocation2 + $0x58] sm:$0xff] %v1724
    %1733 = vst [vmem:[#allocation2 + $0x60] sm:$0xff] %v1725
    %1734 = vst [vmem:[#allocation2 + $0x68] sm:$0xff] %v1726
    %1735 = vst [vmem:[#allocation2 + $0x70] sm:$0xff] %v1727
    %1736 = vst [vmem:[#allocation2 + $0x78] sm:$0xff] %v1728
    %1737 = vrot.lane.b32.xlu0 %v1541, 15
    %v1738 = vpop.permute.xlu0 %1737
    %1739 = vrot.lane.b32.xlu0 %v1545, 15
    %v1740 = vpop.permute.xlu0 %1739
    %1741 = vrot.lane.b32.xlu0 %v1549, 15
    %v1742 = vpop.permute.xlu0 %1741
    %1743 = vrot.lane.b32.xlu0 %v1553, 15
    %v1744 = vpop.permute.xlu0 %1743
    %1745 = vrot.lane.b32.xlu0 %v1542, 15
    %v1746 = vpop.permute.xlu0 %1745
    %1747 = vrot.lane.b32.xlu0 %v1546, 15
    %v1748 = vpop.permute.xlu0 %1747
    %1749 = vrot.lane.b32.xlu0 %v1550, 15
    %v1750 = vpop.permute.xlu0 %1749
    %1751 = vrot.lane.b32.xlu0 %v1554, 15
    %v1752 = vpop.permute.xlu0 %1751
    %1753 = vrot.lane.b32.xlu0 %v1543, 15
    %v1754 = vpop.permute.xlu0 %1753
    %1755 = vrot.lane.b32.xlu0 %v1547, 15
    %v1756 = vpop.permute.xlu0 %1755
    %1757 = vrot.lane.b32.xlu0 %v1551, 15
    %v1758 = vpop.permute.xlu0 %1757
    %1759 = vrot.lane.b32.xlu0 %v1555, 15
    %v1760 = vpop.permute.xlu0 %1759
    %1761 = vrot.lane.b32.xlu0 %v1544, 15
    %v1762 = vpop.permute.xlu0 %1761
    %1763 = vrot.lane.b32.xlu0 %v1548, 15
    %v1764 = vpop.permute.xlu0 %1763
    %1765 = vrot.lane.b32.xlu0 %v1552, 15
    %v1766 = vpop.permute.xlu0 %1765
    %1767 = vrot.lane.b32.xlu0 %v1556, 15
    %v1768 = vpop.permute.xlu0 %1767
    %v1769 = vsel %vm276, %v1754, %v1762
    %v1770 = vsel %vm276, %v1756, %v1764
    %v1771 = vsel %vm276, %v1758, %v1766
    %v1772 = vsel %vm276, %v1760, %v1768
    %v1773 = vsel %vm276, %v1746, %v1754
    %v1774 = vsel %vm276, %v1748, %v1756
    %v1775 = vsel %vm276, %v1750, %v1758
    %v1776 = vsel %vm276, %v1752, %v1760
    %v1777 = vsel %vm276, %v1738, %v1746
    %v1778 = vsel %vm276, %v1740, %v1748
    %v1779 = vsel %vm276, %v1742, %v1750
    %v1780 = vsel %vm276, %v1744, %v1752
    %v1781 = vsel %vm276, %v1762, %v1738
    %v1782 = vsel %vm276, %v1764, %v1740
    %v1783 = vsel %vm276, %v1766, %v1742
    %v1784 = vsel %vm276, %v1768, %v1744
    %v1785 = vld [vmem:[%s293] ss:$8 sm:$0xf]
    %v1787 = vperm.slane %v1785, 0
    %v1788 = vperm.slane %v1785, 1
    %v1789 = vperm.slane %v1785, 2
    %v1790 = vperm.slane %v1785, 3
    %v1795 = vmul.f32 %v1781, %v1787
    %v1796 = vmul.f32 %v1777, %v1788
    %v1797 = vmul.f32 %v1773, %v1789
    %v1798 = vmul.f32 %v1769, %v1790
    %v1799 = vmul.f32 %v1782, %v1787
    %v1800 = vmul.f32 %v1778, %v1788
    %v1801 = vmul.f32 %v1774, %v1789
    %v1802 = vmul.f32 %v1770, %v1790
    %v1803 = vmul.f32 %v1783, %v1787
    %v1804 = vmul.f32 %v1779, %v1788
    %v1805 = vmul.f32 %v1775, %v1789
    %v1806 = vmul.f32 %v1771, %v1790
    %v1807 = vmul.f32 %v1784, %v1787
    %v1808 = vmul.f32 %v1780, %v1788
    %v1809 = vmul.f32 %v1776, %v1789
    %v1810 = vmul.f32 %v1772, %v1790
    %v1811 = vpack.c.bf16 %v1796, %v1795
    %v1812 = vpack.c.bf16 %v1798, %v1797
    %v1813 = vpack.c.bf16 %v1800, %v1799
    %v1814 = vpack.c.bf16 %v1802, %v1801
    %v1815 = vpack.c.bf16 %v1804, %v1803
    %v1816 = vpack.c.bf16 %v1806, %v1805
    %v1817 = vpack.c.bf16 %v1808, %v1807
    %v1818 = vpack.c.bf16 %v1810, %v1809
    %1819 = vst [vmem:[#allocation2 + $0x80] sm:$0xff] %v1811
    %1820 = vst [vmem:[#allocation2 + $0x88] sm:$0xff] %v1812
    %1821 = vst [vmem:[#allocation2 + $0x90] sm:$0xff] %v1813
    %1822 = vst [vmem:[#allocation2 + $0x98] sm:$0xff] %v1814
    %1823 = vst [vmem:[#allocation2 + $0xa0] sm:$0xff] %v1815
    %1824 = vst [vmem:[#allocation2 + $0xa8] sm:$0xff] %v1816
    %1825 = vst [vmem:[#allocation2 + $0xb0] sm:$0xff] %v1817
    %1826 = vst [vmem:[#allocation2 + $0xb8] sm:$0xff] %v1818
    %1827 = vrot.lane.b32.xlu0 %v1541, 1
    %v1828 = vpop.permute.xlu0 %1827
    %1829 = vrot.lane.b32.xlu0 %v1545, 1
    %v1830 = vpop.permute.xlu0 %1829
    %1831 = vrot.lane.b32.xlu0 %v1549, 1
    %v1832 = vpop.permute.xlu0 %1831
    %1833 = vrot.lane.b32.xlu0 %v1553, 1
    %v1834 = vpop.permute.xlu0 %1833
    %1835 = vrot.lane.b32.xlu0 %v1542, 1
    %v1836 = vpop.permute.xlu0 %1835
    %1837 = vrot.lane.b32.xlu0 %v1546, 1
    %v1838 = vpop.permute.xlu0 %1837
    %1839 = vrot.lane.b32.xlu0 %v1550, 1
    %v1840 = vpop.permute.xlu0 %1839
    %1841 = vrot.lane.b32.xlu0 %v1554, 1
    %v1842 = vpop.permute.xlu0 %1841
    %1843 = vrot.lane.b32.xlu0 %v1543, 1
    %v1844 = vpop.permute.xlu0 %1843
    %1845 = vrot.lane.b32.xlu0 %v1547, 1
    %v1846 = vpop.permute.xlu0 %1845
    %1847 = vrot.lane.b32.xlu0 %v1551, 1
    %v1848 = vpop.permute.xlu0 %1847
    %1849 = vrot.lane.b32.xlu0 %v1555, 1
    %v1850 = vpop.permute.xlu0 %1849
    %1851 = vrot.lane.b32.xlu0 %v1544, 1
    %v1852 = vpop.permute.xlu0 %1851
    %1853 = vrot.lane.b32.xlu0 %v1548, 1
    %v1854 = vpop.permute.xlu0 %1853
    %1855 = vrot.lane.b32.xlu0 %v1552, 1
    %v1856 = vpop.permute.xlu0 %1855
    %1857 = vrot.lane.b32.xlu0 %v1556, 1
    %v1858 = vpop.permute.xlu0 %1857
    %v1859 = vsel %vm368, %v1844, %v1852
    %v1860 = vsel %vm368, %v1846, %v1854
    %v1861 = vsel %vm368, %v1848, %v1856
    %v1862 = vsel %vm368, %v1850, %v1858
    %v1863 = vsel %vm368, %v1836, %v1844
    %v1864 = vsel %vm368, %v1838, %v1846
    %v1865 = vsel %vm368, %v1840, %v1848
    %v1866 = vsel %vm368, %v1842, %v1850
    %v1867 = vsel %vm368, %v1828, %v1836
    %v1868 = vsel %vm368, %v1830, %v1838
    %v1869 = vsel %vm368, %v1832, %v1840
    %v1870 = vsel %vm368, %v1834, %v1842
    %v1871 = vsel %vm368, %v1852, %v1828
    %v1872 = vsel %vm368, %v1854, %v1830
    %v1873 = vsel %vm368, %v1856, %v1832
    %v1874 = vsel %vm368, %v1858, %v1834
    %v1875 = vld [vmem:[%s385] ss:$8 sm:$0xf]
    %v1877 = vperm.slane %v1875, 0
    %v1878 = vperm.slane %v1875, 1
    %v1879 = vperm.slane %v1875, 2
    %v1880 = vperm.slane %v1875, 3
    %v1885 = vmul.f32 %v1871, %v1877
    %v1886 = vmul.f32 %v1867, %v1878
    %v1887 = vmul.f32 %v1863, %v1879
    %v1888 = vmul.f32 %v1859, %v1880
    %v1889 = vmul.f32 %v1872, %v1877
    %v1890 = vmul.f32 %v1868, %v1878
    %v1891 = vmul.f32 %v1864, %v1879
    %v1892 = vmul.f32 %v1860, %v1880
    %v1893 = vmul.f32 %v1873, %v1877
    %v1894 = vmul.f32 %v1869, %v1878
    %v1895 = vmul.f32 %v1865, %v1879
    %v1896 = vmul.f32 %v1861, %v1880
    %v1897 = vmul.f32 %v1874, %v1877
    %v1898 = vmul.f32 %v1870, %v1878
    %v1899 = vmul.f32 %v1866, %v1879
    %v1900 = vmul.f32 %v1862, %v1880
    %v1901 = vpack.c.bf16 %v1886, %v1885
    %v1902 = vpack.c.bf16 %v1888, %v1887
    %v1903 = vpack.c.bf16 %v1890, %v1889
    %v1904 = vpack.c.bf16 %v1892, %v1891
    %v1905 = vpack.c.bf16 %v1894, %v1893
    %v1906 = vpack.c.bf16 %v1896, %v1895
    %v1907 = vpack.c.bf16 %v1898, %v1897
    %v1908 = vpack.c.bf16 %v1900, %v1899
    %1909 = vst [vmem:[#allocation2 + $0xc0] sm:$0xff] %v1901
    %1910 = vst [vmem:[#allocation2 + $0xc8] sm:$0xff] %v1902
    %1911 = vst [vmem:[#allocation2 + $0xd0] sm:$0xff] %v1903
    %1912 = vst [vmem:[#allocation2 + $0xd8] sm:$0xff] %v1904
    %1913 = vst [vmem:[#allocation2 + $0xe0] sm:$0xff] %v1905
    %1914 = vst [vmem:[#allocation2 + $0xe8] sm:$0xff] %v1906
    %1915 = vst [vmem:[#allocation2 + $0xf0] sm:$0xff] %v1907
    %1916 = vst [vmem:[#allocation2 + $0xf8] sm:$0xff] %v1908
    %v1917 = vpack.c.bf16 %v1542, %v1541
    %v1918 = vpack.c.bf16 %v1544, %v1543
    %v1919 = vpack.c.bf16 %v1546, %v1545
    %v1920 = vpack.c.bf16 %v1548, %v1547
    %v1921 = vpack.c.bf16 %v1550, %v1549
    %v1922 = vpack.c.bf16 %v1552, %v1551
    %v1923 = vpack.c.bf16 %v1554, %v1553
    %v1924 = vpack.c.bf16 %v1556, %v1555
    %1925 = vst [vmem:[#allocation2 + $0x100] sm:$0xff] %v1917
    %1926 = vst [vmem:[#allocation2 + $0x108] sm:$0xff] %v1918
    %1927 = vst [vmem:[#allocation2 + $0x110] sm:$0xff] %v1919
    %1928 = vst [vmem:[#allocation2 + $0x118] sm:$0xff] %v1920
    %1929 = vst [vmem:[#allocation2 + $0x120] sm:$0xff] %v1921
    %1930 = vst [vmem:[#allocation2 + $0x128] sm:$0xff] %v1922
    %1931 = vst [vmem:[#allocation2 + $0x130] sm:$0xff] %v1923
    %1932 = vst [vmem:[#allocation2 + $0x138] sm:$0xff] %v1924
    %1933 = vrot.lane.b32.xlu0 %v1541, 127
    %v1934 = vpop.permute.xlu0 %1933
    %1935 = vrot.lane.b32.xlu0 %v1545, 127
    %v1936 = vpop.permute.xlu0 %1935
    %1937 = vrot.lane.b32.xlu0 %v1549, 127
    %v1938 = vpop.permute.xlu0 %1937
    %1939 = vrot.lane.b32.xlu0 %v1553, 127
    %v1940 = vpop.permute.xlu0 %1939
    %1941 = vrot.lane.b32.xlu0 %v1542, 127
    %v1942 = vpop.permute.xlu0 %1941
    %1943 = vrot.lane.b32.xlu0 %v1546, 127
    %v1944 = vpop.permute.xlu0 %1943
    %1945 = vrot.lane.b32.xlu0 %v1550, 127
    %v1946 = vpop.permute.xlu0 %1945
    %1947 = vrot.lane.b32.xlu0 %v1554, 127
    %v1948 = vpop.permute.xlu0 %1947
    %1949 = vrot.lane.b32.xlu0 %v1543, 127
    %v1950 = vpop.permute.xlu0 %1949
    %1951 = vrot.lane.b32.xlu0 %v1547, 127
    %v1952 = vpop.permute.xlu0 %1951
    %1953 = vrot.lane.b32.xlu0 %v1551, 127
    %v1954 = vpop.permute.xlu0 %1953
    %1955 = vrot.lane.b32.xlu0 %v1555, 127
    %v1956 = vpop.permute.xlu0 %1955
    %1957 = vrot.lane.b32.xlu0 %v1544, 127
    %v1958 = vpop.permute.xlu0 %1957
    %1959 = vrot.lane.b32.xlu0 %v1548, 127
    %v1960 = vpop.permute.xlu0 %1959
    %1961 = vrot.lane.b32.xlu0 %v1552, 127
    %v1962 = vpop.permute.xlu0 %1961
    %1963 = vrot.lane.b32.xlu0 %v1556, 127
    %v1964 = vpop.permute.xlu0 %1963
    %v1965 = vsel %vm476, %v1950, %v1958
    %v1966 = vsel %vm476, %v1952, %v1960
    %v1967 = vsel %vm476, %v1954, %v1962
    %v1968 = vsel %vm476, %v1956, %v1964
    %v1969 = vsel %vm476, %v1942, %v1950
    %v1970 = vsel %vm476, %v1944, %v1952
    %v1971 = vsel %vm476, %v1946, %v1954
    %v1972 = vsel %vm476, %v1948, %v1956
    %v1973 = vsel %vm476, %v1934, %v1942
    %v1974 = vsel %vm476, %v1936, %v1944
    %v1975 = vsel %vm476, %v1938, %v1946
    %v1976 = vsel %vm476, %v1940, %v1948
    %v1977 = vsel %vm476, %v1958, %v1934
    %v1978 = vsel %vm476, %v1960, %v1936
    %v1979 = vsel %vm476, %v1962, %v1938
    %v1980 = vsel %vm476, %v1964, %v1940
    %v1981 = vld [vmem:[%s493] ss:$8 sm:$0xf]
    %v1983 = vperm.slane %v1981, 0
    %v1984 = vperm.slane %v1981, 1
    %v1985 = vperm.slane %v1981, 2
    %v1986 = vperm.slane %v1981, 3
    %v1991 = vmul.f32 %v1973, %v1983
    %v1992 = vmul.f32 %v1969, %v1984
    %v1993 = vmul.f32 %v1965, %v1985
    %v1994 = vmul.f32 %v1977, %v1986
    %v1995 = vmul.f32 %v1974, %v1983
    %v1996 = vmul.f32 %v1970, %v1984
    %v1997 = vmul.f32 %v1966, %v1985
    %v1998 = vmul.f32 %v1978, %v1986
    %v1999 = vmul.f32 %v1975, %v1983
    %v2000 = vmul.f32 %v1971, %v1984
    %v2001 = vmul.f32 %v1967, %v1985
    %v2002 = vmul.f32 %v1979, %v1986
    %v2003 = vmul.f32 %v1976, %v1983
    %v2004 = vmul.f32 %v1972, %v1984
    %v2005 = vmul.f32 %v1968, %v1985
    %v2006 = vmul.f32 %v1980, %v1986
    %v2007 = vpack.c.bf16 %v1992, %v1991
    %v2008 = vpack.c.bf16 %v1994, %v1993
    %v2009 = vpack.c.bf16 %v1996, %v1995
    %v2010 = vpack.c.bf16 %v1998, %v1997
    %v2011 = vpack.c.bf16 %v2000, %v1999
    %v2012 = vpack.c.bf16 %v2002, %v2001
    %v2013 = vpack.c.bf16 %v2004, %v2003
    %v2014 = vpack.c.bf16 %v2006, %v2005
    %2015 = vst [vmem:[#allocation2 + $0x140] sm:$0xff] %v2007
    %2016 = vst [vmem:[#allocation2 + $0x148] sm:$0xff] %v2008
    %2017 = vst [vmem:[#allocation2 + $0x150] sm:$0xff] %v2009
    %2018 = vst [vmem:[#allocation2 + $0x158] sm:$0xff] %v2010
    %2019 = vst [vmem:[#allocation2 + $0x160] sm:$0xff] %v2011
    %2020 = vst [vmem:[#allocation2 + $0x168] sm:$0xff] %v2012
    %2021 = vst [vmem:[#allocation2 + $0x170] sm:$0xff] %v2013
    %2022 = vst [vmem:[#allocation2 + $0x178] sm:$0xff] %v2014
    %2023 = vrot.lane.b32.xlu0 %v1541, 113
    %v2024 = vpop.permute.xlu0 %2023
    %2025 = vrot.lane.b32.xlu0 %v1545, 113
    %v2026 = vpop.permute.xlu0 %2025
    %2027 = vrot.lane.b32.xlu0 %v1549, 113
    %v2028 = vpop.permute.xlu0 %2027
    %2029 = vrot.lane.b32.xlu0 %v1553, 113
    %v2030 = vpop.permute.xlu0 %2029
    %2031 = vrot.lane.b32.xlu0 %v1542, 113
    %v2032 = vpop.permute.xlu0 %2031
    %2033 = vrot.lane.b32.xlu0 %v1546, 113
    %v2034 = vpop.permute.xlu0 %2033
    %2035 = vrot.lane.b32.xlu0 %v1550, 113
    %v2036 = vpop.permute.xlu0 %2035
    %2037 = vrot.lane.b32.xlu0 %v1554, 113
    %v2038 = vpop.permute.xlu0 %2037
    %2039 = vrot.lane.b32.xlu0 %v1543, 113
    %v2040 = vpop.permute.xlu0 %2039
    %2041 = vrot.lane.b32.xlu0 %v1547, 113
    %v2042 = vpop.permute.xlu0 %2041
    %2043 = vrot.lane.b32.xlu0 %v1551, 113
    %v2044 = vpop.permute.xlu0 %2043
    %2045 = vrot.lane.b32.xlu0 %v1555, 113
    %v2046 = vpop.permute.xlu0 %2045
    %2047 = vrot.lane.b32.xlu0 %v1544, 113
    %v2048 = vpop.permute.xlu0 %2047
    %2049 = vrot.lane.b32.xlu0 %v1548, 113
    %v2050 = vpop.permute.xlu0 %2049
    %2051 = vrot.lane.b32.xlu0 %v1552, 113
    %v2052 = vpop.permute.xlu0 %2051
    %2053 = vrot.lane.b32.xlu0 %v1556, 113
    %v2054 = vpop.permute.xlu0 %2053
    %v2055 = vsel %vm568, %v2040, %v2048
    %v2056 = vsel %vm568, %v2042, %v2050
    %v2057 = vsel %vm568, %v2044, %v2052
    %v2058 = vsel %vm568, %v2046, %v2054
    %v2059 = vsel %vm568, %v2032, %v2040
    %v2060 = vsel %vm568, %v2034, %v2042
    %v2061 = vsel %vm568, %v2036, %v2044
    %v2062 = vsel %vm568, %v2038, %v2046
    %v2063 = vsel %vm568, %v2024, %v2032
    %v2064 = vsel %vm568, %v2026, %v2034
    %v2065 = vsel %vm568, %v2028, %v2036
    %v2066 = vsel %vm568, %v2030, %v2038
    %v2067 = vsel %vm568, %v2048, %v2024
    %v2068 = vsel %vm568, %v2050, %v2026
    %v2069 = vsel %vm568, %v2052, %v2028
    %v2070 = vsel %vm568, %v2054, %v2030
    %v2071 = vld [vmem:[%s585] ss:$8 sm:$0xf]
    %v2073 = vperm.slane %v2071, 0
    %v2074 = vperm.slane %v2071, 1
    %v2075 = vperm.slane %v2071, 2
    %v2076 = vperm.slane %v2071, 3
    %v2081 = vmul.f32 %v2063, %v2073
    %v2082 = vmul.f32 %v2059, %v2074
    %v2083 = vmul.f32 %v2055, %v2075
    %v2084 = vmul.f32 %v2067, %v2076
    %v2085 = vmul.f32 %v2064, %v2073
    %v2086 = vmul.f32 %v2060, %v2074
    %v2087 = vmul.f32 %v2056, %v2075
    %v2088 = vmul.f32 %v2068, %v2076
    %v2089 = vmul.f32 %v2065, %v2073
    %v2090 = vmul.f32 %v2061, %v2074
    %v2091 = vmul.f32 %v2057, %v2075
    %v2092 = vmul.f32 %v2069, %v2076
    %v2093 = vmul.f32 %v2066, %v2073
    %v2094 = vmul.f32 %v2062, %v2074
    %v2095 = vmul.f32 %v2058, %v2075
    %v2096 = vmul.f32 %v2070, %v2076
    %v2097 = vpack.c.bf16 %v2082, %v2081
    %v2098 = vpack.c.bf16 %v2084, %v2083
    %v2099 = vpack.c.bf16 %v2086, %v2085
    %v2100 = vpack.c.bf16 %v2088, %v2087
    %v2101 = vpack.c.bf16 %v2090, %v2089
    %v2102 = vpack.c.bf16 %v2092, %v2091
    %v2103 = vpack.c.bf16 %v2094, %v2093
    %v2104 = vpack.c.bf16 %v2096, %v2095
    %2105 = vst [vmem:[#allocation2 + $0x180] sm:$0xff] %v2097
    %2106 = vst [vmem:[#allocation2 + $0x188] sm:$0xff] %v2098
    %2107 = vst [vmem:[#allocation2 + $0x190] sm:$0xff] %v2099
    %2108 = vst [vmem:[#allocation2 + $0x198] sm:$0xff] %v2100
    %2109 = vst [vmem:[#allocation2 + $0x1a0] sm:$0xff] %v2101
    %2110 = vst [vmem:[#allocation2 + $0x1a8] sm:$0xff] %v2102
    %2111 = vst [vmem:[#allocation2 + $0x1b0] sm:$0xff] %v2103
    %2112 = vst [vmem:[#allocation2 + $0x1b8] sm:$0xff] %v2104
    %2113 = vrot.lane.b32.xlu0 %v1541, 112
    %v2114 = vpop.permute.xlu0 %2113
    %2115 = vrot.lane.b32.xlu0 %v1545, 112
    %v2116 = vpop.permute.xlu0 %2115
    %2117 = vrot.lane.b32.xlu0 %v1549, 112
    %v2118 = vpop.permute.xlu0 %2117
    %2119 = vrot.lane.b32.xlu0 %v1553, 112
    %v2120 = vpop.permute.xlu0 %2119
    %2121 = vrot.lane.b32.xlu0 %v1542, 112
    %v2122 = vpop.permute.xlu0 %2121
    %2123 = vrot.lane.b32.xlu0 %v1546, 112
    %v2124 = vpop.permute.xlu0 %2123
    %2125 = vrot.lane.b32.xlu0 %v1550, 112
    %v2126 = vpop.permute.xlu0 %2125
    %2127 = vrot.lane.b32.xlu0 %v1554, 112
    %v2128 = vpop.permute.xlu0 %2127
    %2129 = vrot.lane.b32.xlu0 %v1543, 112
    %v2130 = vpop.permute.xlu0 %2129
    %2131 = vrot.lane.b32.xlu0 %v1547, 112
    %v2132 = vpop.permute.xlu0 %2131
    %2133 = vrot.lane.b32.xlu0 %v1551, 112
    %v2134 = vpop.permute.xlu0 %2133
    %2135 = vrot.lane.b32.xlu0 %v1555, 112
    %v2136 = vpop.permute.xlu0 %2135
    %2137 = vrot.lane.b32.xlu0 %v1544, 112
    %v2138 = vpop.permute.xlu0 %2137
    %2139 = vrot.lane.b32.xlu0 %v1548, 112
    %v2140 = vpop.permute.xlu0 %2139
    %2141 = vrot.lane.b32.xlu0 %v1552, 112
    %v2142 = vpop.permute.xlu0 %2141
    %2143 = vrot.lane.b32.xlu0 %v1556, 112
    %v2144 = vpop.permute.xlu0 %2143
    %v2145 = vsel %vm660, %v2130, %v2138
    %v2146 = vsel %vm660, %v2132, %v2140
    %v2147 = vsel %vm660, %v2134, %v2142
    %v2148 = vsel %vm660, %v2136, %v2144
    %v2149 = vsel %vm660, %v2122, %v2130
    %v2150 = vsel %vm660, %v2124, %v2132
    %v2151 = vsel %vm660, %v2126, %v2134
    %v2152 = vsel %vm660, %v2128, %v2136
    %v2153 = vsel %vm660, %v2114, %v2122
    %v2154 = vsel %vm660, %v2116, %v2124
    %v2155 = vsel %vm660, %v2118, %v2126
    %v2156 = vsel %vm660, %v2120, %v2128
    %v2157 = vsel %vm660, %v2138, %v2114
    %v2158 = vsel %vm660, %v2140, %v2116
    %v2159 = vsel %vm660, %v2142, %v2118
    %v2160 = vsel %vm660, %v2144, %v2120
    %v2161 = vld [vmem:[%s677] ss:$8 sm:$0xf]
    %v2163 = vperm.slane %v2161, 0
    %v2164 = vperm.slane %v2161, 1
    %v2165 = vperm.slane %v2161, 2
    %v2166 = vperm.slane %v2161, 3
    %v2171 = vmul.f32 %v2153, %v2163
    %v2172 = vmul.f32 %v2149, %v2164
    %v2173 = vmul.f32 %v2145, %v2165
    %v2174 = vmul.f32 %v2157, %v2166
    %v2175 = vmul.f32 %v2154, %v2163
    %v2176 = vmul.f32 %v2150, %v2164
    %v2177 = vmul.f32 %v2146, %v2165
    %v2178 = vmul.f32 %v2158, %v2166
    %v2179 = vmul.f32 %v2155, %v2163
    %v2180 = vmul.f32 %v2151, %v2164
    %v2181 = vmul.f32 %v2147, %v2165
    %v2182 = vmul.f32 %v2159, %v2166
    %v2183 = vmul.f32 %v2156, %v2163
    %v2184 = vmul.f32 %v2152, %v2164
    %v2185 = vmul.f32 %v2148, %v2165
    %v2186 = vmul.f32 %v2160, %v2166
    %v2187 = vpack.c.bf16 %v2172, %v2171
    %v2188 = vpack.c.bf16 %v2174, %v2173
    %v2189 = vpack.c.bf16 %v2176, %v2175
    %v2190 = vpack.c.bf16 %v2178, %v2177
    %v2191 = vpack.c.bf16 %v2180, %v2179
    %v2192 = vpack.c.bf16 %v2182, %v2181
    %v2193 = vpack.c.bf16 %v2184, %v2183
    %v2194 = vpack.c.bf16 %v2186, %v2185
    %2195 = vst [vmem:[#allocation2 + $0x1c0] sm:$0xff] %v2187
    %2196 = vst [vmem:[#allocation2 + $0x1c8] sm:$0xff] %v2188
    %2197 = vst [vmem:[#allocation2 + $0x1d0] sm:$0xff] %v2189
    %2198 = vst [vmem:[#allocation2 + $0x1d8] sm:$0xff] %v2190
    %2199 = vst [vmem:[#allocation2 + $0x1e0] sm:$0xff] %v2191
    %2200 = vst [vmem:[#allocation2 + $0x1e8] sm:$0xff] %v2192
    %2201 = vst [vmem:[#allocation2 + $0x1f0] sm:$0xff] %v2193
    %2202 = vst [vmem:[#allocation2 + $0x1f8] sm:$0xff] %v2194
    %2203 = vrot.lane.b32.xlu0 %v1541, 111
    %v2204 = vpop.permute.xlu0 %2203
    %2205 = vrot.lane.b32.xlu0 %v1545, 111
    %v2206 = vpop.permute.xlu0 %2205
    %2207 = vrot.lane.b32.xlu0 %v1549, 111
    %v2208 = vpop.permute.xlu0 %2207
    %2209 = vrot.lane.b32.xlu0 %v1553, 111
    %v2210 = vpop.permute.xlu0 %2209
    %2211 = vrot.lane.b32.xlu0 %v1542, 111
    %v2212 = vpop.permute.xlu0 %2211
    %2213 = vrot.lane.b32.xlu0 %v1546, 111
    %v2214 = vpop.permute.xlu0 %2213
    %2215 = vrot.lane.b32.xlu0 %v1550, 111
    %v2216 = vpop.permute.xlu0 %2215
    %2217 = vrot.lane.b32.xlu0 %v1554, 111
    %v2218 = vpop.permute.xlu0 %2217
    %2219 = vrot.lane.b32.xlu0 %v1543, 111
    %v2220 = vpop.permute.xlu0 %2219
    %2221 = vrot.lane.b32.xlu0 %v1547, 111
    %v2222 = vpop.permute.xlu0 %2221
    %2223 = vrot.lane.b32.xlu0 %v1551, 111
    %v2224 = vpop.permute.xlu0 %2223
    %2225 = vrot.lane.b32.xlu0 %v1555, 111
    %v2226 = vpop.permute.xlu0 %2225
    %2227 = vrot.lane.b32.xlu0 %v1544, 111
    %v2228 = vpop.permute.xlu0 %2227
    %2229 = vrot.lane.b32.xlu0 %v1548, 111
    %v2230 = vpop.permute.xlu0 %2229
    %2231 = vrot.lane.b32.xlu0 %v1552, 111
    %v2232 = vpop.permute.xlu0 %2231
    %2233 = vrot.lane.b32.xlu0 %v1556, 111
    %v2234 = vpop.permute.xlu0 %2233
    %v2235 = vsel %vm752, %v2220, %v2228
    %v2236 = vsel %vm752, %v2222, %v2230
    %v2237 = vsel %vm752, %v2224, %v2232
    %v2238 = vsel %vm752, %v2226, %v2234
    %v2239 = vsel %vm752, %v2212, %v2220
    %v2240 = vsel %vm752, %v2214, %v2222
    %v2241 = vsel %vm752, %v2216, %v2224
    %v2242 = vsel %vm752, %v2218, %v2226
    %v2243 = vsel %vm752, %v2204, %v2212
    %v2244 = vsel %vm752, %v2206, %v2214
    %v2245 = vsel %vm752, %v2208, %v2216
    %v2246 = vsel %vm752, %v2210, %v2218
    %v2247 = vsel %vm752, %v2228, %v2204
    %v2248 = vsel %vm752, %v2230, %v2206
    %v2249 = vsel %vm752, %v2232, %v2208
    %v2250 = vsel %vm752, %v2234, %v2210
    %v2251 = vld [vmem:[%s769] ss:$8 sm:$0xf]
    %v2253 = vperm.slane %v2251, 0
    %v2254 = vperm.slane %v2251, 1
    %v2255 = vperm.slane %v2251, 2
    %v2256 = vperm.slane %v2251, 3
    %v2261 = vmul.f32 %v2243, %v2253
    %v2262 = vmul.f32 %v2239, %v2254
    %v2263 = vmul.f32 %v2235, %v2255
    %v2264 = vmul.f32 %v2247, %v2256
    %v2265 = vmul.f32 %v2244, %v2253
    %v2266 = vmul.f32 %v2240, %v2254
    %v2267 = vmul.f32 %v2236, %v2255
    %v2268 = vmul.f32 %v2248, %v2256
    %v2269 = vmul.f32 %v2245, %v2253
    %v2270 = vmul.f32 %v2241, %v2254
    %v2271 = vmul.f32 %v2237, %v2255
    %v2272 = vmul.f32 %v2249, %v2256
    %v2273 = vmul.f32 %v2246, %v2253
    %v2274 = vmul.f32 %v2242, %v2254
    %v2275 = vmul.f32 %v2238, %v2255
    %v2276 = vmul.f32 %v2250, %v2256
    %v2277 = vpack.c.bf16 %v2262, %v2261
    %v2278 = vpack.c.bf16 %v2264, %v2263
    %v2279 = vpack.c.bf16 %v2266, %v2265
    %v2280 = vpack.c.bf16 %v2268, %v2267
    %v2281 = vpack.c.bf16 %v2270, %v2269
    %v2282 = vpack.c.bf16 %v2272, %v2271
    %v2283 = vpack.c.bf16 %v2274, %v2273
    %v2284 = vpack.c.bf16 %v2276, %v2275
    %2285 = vst [vmem:[#allocation2 + $0x200] sm:$0xff] %v2277
    %2286 = vst [vmem:[#allocation2 + $0x208] sm:$0xff] %v2278
    %2287 = vst [vmem:[#allocation2 + $0x210] sm:$0xff] %v2279
    %2288 = vst [vmem:[#allocation2 + $0x218] sm:$0xff] %v2280
    %2289 = vst [vmem:[#allocation2 + $0x220] sm:$0xff] %v2281
    %2290 = vst [vmem:[#allocation2 + $0x228] sm:$0xff] %v2282
    %2291 = vst [vmem:[#allocation2 + $0x230] sm:$0xff] %v2283
    %2292 = vst [vmem:[#allocation2 + $0x238] sm:$0xff] %v2284
    %v2293 = vld [vmem:[%s6] sm:$0xff]
    %v2294 = vld [vmem:[%s6 + $0x8] sm:$0xf]
    %v2295 = vld [vmem:[%s6 + $0xc] sm:$0xff]
    %v2296 = vld [vmem:[%s6 + $0x14] sm:$0xf]
    %v2297 = vld [vmem:[%s6 + $0x18] sm:$0xff]
    %v2298 = vld [vmem:[%s6 + $0x20] sm:$0xf]
    %v2299 = vld [vmem:[%s6 + $0x24] sm:$0xff]
    %v2300 = vld [vmem:[%s6 + $0x2c] sm:$0xf]
    %v2301 = vld [vmem:[#allocation2] sm:$0xff]
    %v2302 = vld [vmem:[#allocation2 + $0x8] sm:$0xff]
    %v2303 = vld [vmem:[#allocation2 + $0x10] sm:$0xff]
    %v2304 = vld [vmem:[#allocation2 + $0x18] sm:$0xff]
    %v2305 = vld [vmem:[#allocation2 + $0x20] sm:$0xff]
    %v2306 = vld [vmem:[#allocation2 + $0x28] sm:$0xff]
    %v2307 = vld [vmem:[#allocation2 + $0x30] sm:$0xff]
    %v2308 = vld [vmem:[#allocation2 + $0x38] sm:$0xff]
    %v2309 = vld [vmem:[#allocation2 + $0x40] sm:$0xff]
    %v2310 = vld [vmem:[#allocation2 + $0x48] sm:$0xff]
    %v2311 = vld [vmem:[#allocation2 + $0x50] sm:$0xff]
    %v2312 = vld [vmem:[#allocation2 + $0x58] sm:$0xff]
    %v2313 = vld [vmem:[#allocation2 + $0x60] sm:$0xff]
    %v2314 = vld [vmem:[#allocation2 + $0x68] sm:$0xff]
    %v2315 = vld [vmem:[#allocation2 + $0x70] sm:$0xff]
    %v2316 = vld [vmem:[#allocation2 + $0x78] sm:$0xff]
    %v2317 = vld [vmem:[#allocation2 + $0x80] sm:$0xff]
    %v2318 = vld [vmem:[#allocation2 + $0x88] sm:$0xff]
    %v2319 = vld [vmem:[#allocation2 + $0x90] sm:$0xff]
    %v2320 = vld [vmem:[#allocation2 + $0x98] sm:$0xff]
    %v2321 = vld [vmem:[#allocation2 + $0xa0] sm:$0xff]
    %v2322 = vld [vmem:[#allocation2 + $0xa8] sm:$0xff]
    %v2323 = vld [vmem:[#allocation2 + $0xb0] sm:$0xff]
    %v2324 = vld [vmem:[#allocation2 + $0xb8] sm:$0xff]
    %v2325 = vld [vmem:[#allocation2 + $0xc0] sm:$0xff]
    %v2326 = vld [vmem:[#allocation2 + $0xc8] sm:$0xff]
    %v2327 = vld [vmem:[#allocation2 + $0xd0] sm:$0xff]
    %v2328 = vld [vmem:[#allocation2 + $0xd8] sm:$0xff]
    %v2329 = vld [vmem:[#allocation2 + $0xe0] sm:$0xff]
    %v2330 = vld [vmem:[#allocation2 + $0xe8] sm:$0xff]
    %v2331 = vld [vmem:[#allocation2 + $0xf0] sm:$0xff]
    %v2332 = vld [vmem:[#allocation2 + $0xf8] sm:$0xff]
    %v2333 = vld [vmem:[#allocation2 + $0x100] sm:$0xff]
    %v2334 = vld [vmem:[#allocation2 + $0x108] sm:$0xff]
    %v2335 = vld [vmem:[#allocation2 + $0x110] sm:$0xff]
    %v2336 = vld [vmem:[#allocation2 + $0x118] sm:$0xff]
    %v2337 = vld [vmem:[#allocation2 + $0x120] sm:$0xff]
    %v2338 = vld [vmem:[#allocation2 + $0x128] sm:$0xff]
    %v2339 = vld [vmem:[#allocation2 + $0x130] sm:$0xff]
    %v2340 = vld [vmem:[#allocation2 + $0x138] sm:$0xff]
    %v2341 = vld [vmem:[#allocation2 + $0x140] sm:$0xff]
    %v2342 = vld [vmem:[#allocation2 + $0x148] sm:$0xff]
    %v2343 = vld [vmem:[#allocation2 + $0x150] sm:$0xff]
    %v2344 = vld [vmem:[#allocation2 + $0x158] sm:$0xff]
    %v2345 = vld [vmem:[#allocation2 + $0x160] sm:$0xff]
    %v2346 = vld [vmem:[#allocation2 + $0x168] sm:$0xff]
    %v2347 = vld [vmem:[#allocation2 + $0x170] sm:$0xff]
    %v2348 = vld [vmem:[#allocation2 + $0x178] sm:$0xff]
    %v2349 = vld [vmem:[#allocation2 + $0x180] sm:$0xff]
    %v2350 = vld [vmem:[#allocation2 + $0x188] sm:$0xff]
    %v2351 = vld [vmem:[#allocation2 + $0x190] sm:$0xff]
    %v2352 = vld [vmem:[#allocation2 + $0x198] sm:$0xff]
    %v2353 = vld [vmem:[#allocation2 + $0x1a0] sm:$0xff]
    %v2354 = vld [vmem:[#allocation2 + $0x1a8] sm:$0xff]
    %v2355 = vld [vmem:[#allocation2 + $0x1b0] sm:$0xff]
    %v2356 = vld [vmem:[#allocation2 + $0x1b8] sm:$0xff]
    %v2357 = vld [vmem:[#allocation2 + $0x1c0] sm:$0xff]
    %v2358 = vld [vmem:[#allocation2 + $0x1c8] sm:$0xff]
    %v2359 = vld [vmem:[#allocation2 + $0x1d0] sm:$0xff]
    %v2360 = vld [vmem:[#allocation2 + $0x1d8] sm:$0xff]
    %v2361 = vld [vmem:[#allocation2 + $0x1e0] sm:$0xff]
    %v2362 = vld [vmem:[#allocation2 + $0x1e8] sm:$0xff]
    %v2363 = vld [vmem:[#allocation2 + $0x1f0] sm:$0xff]
    %v2364 = vld [vmem:[#allocation2 + $0x1f8] sm:$0xff]
    %v2365 = vld [vmem:[#allocation2 + $0x200] sm:$0xff]
    %v2366 = vld [vmem:[#allocation2 + $0x208] sm:$0xff]
    %v2367 = vld [vmem:[#allocation2 + $0x210] sm:$0xff]
    %v2368 = vld [vmem:[#allocation2 + $0x218] sm:$0xff]
    %v2369 = vld [vmem:[#allocation2 + $0x220] sm:$0xff]
    %v2370 = vld [vmem:[#allocation2 + $0x228] sm:$0xff]
    %v2371 = vld [vmem:[#allocation2 + $0x230] sm:$0xff]
    %v2372 = vld [vmem:[#allocation2 + $0x238] sm:$0xff]
    %v2373 = vld [vmem:[%s7] sm:$0xff]
    %v2374 = vld [vmem:[%s7 + $0x8] sm:$0xff]
    %v2375 = vld [vmem:[%s7 + $0x10] sm:$0xff]
    %v2376 = vld [vmem:[%s7 + $0x18] sm:$0xff]
    %2378 = vset.pattern.permute.xlu0 0
    %2379 = vperm.xlu0 %2378, %v2373
    %v2380 = vpop.permute.xlu0 %2379
    %2383 = vset.pattern.permute.xlu0 0
    %2384 = vperm.xlu0 %2383, %v2374
    %v2385 = vpop.permute.xlu0 %2384
    %2388 = vset.pattern.permute.xlu0 0
    %2389 = vperm.xlu0 %2388, %v2375
    %v2390 = vpop.permute.xlu0 %2389
    %2393 = vset.pattern.permute.xlu0 0
    %2394 = vperm.xlu0 %2393, %v2376
    %v2395 = vpop.permute.xlu0 %2394
    %v2405 = vunpack.c.l.b16 %v2293
    %v2406 = vunpack.c.h.b16 %v2293
    %v2407 = vunpack.c.l.b16 %v2294
    %v2408 = vunpack.c.l.b16 %v2295
    %v2409 = vunpack.c.h.b16 %v2295
    %v2410 = vunpack.c.l.b16 %v2296
    %v2411 = vunpack.c.l.b16 %v2297
    %v2412 = vunpack.c.h.b16 %v2297
    %v2413 = vunpack.c.l.b16 %v2298
    %v2414 = vunpack.c.l.b16 %v2299
    %v2415 = vunpack.c.h.b16 %v2299
    %v2416 = vunpack.c.l.b16 %v2300
    %v2417 = vpack.c.b16 %v2408, %v2405
    %v2418 = vpack.c.b16 %v2409, %v2406
    %v2419 = vpack.c.b16 %v2410, %v2407
    %v2420 = vpack.c.b16 %v2414, %v2411
    %v2421 = vpack.c.b16 %v2415, %v2412
    %v2422 = vpack.c.b16 %v2416, %v2413
    %v2499 = vunpack.c.l.b16 %v2301
    %v2500 = vunpack.c.h.b16 %v2301
    %v2501 = vunpack.c.l.b16 %v2302
    %v2502 = vunpack.c.h.b16 %v2302
    %v2503 = vunpack.c.l.b16 %v2303
    %v2504 = vunpack.c.h.b16 %v2303
    %v2505 = vunpack.c.l.b16 %v2304
    %v2506 = vunpack.c.h.b16 %v2304
    %v2507 = vunpack.c.l.b16 %v2305
    %v2508 = vunpack.c.h.b16 %v2305
    %v2509 = vunpack.c.l.b16 %v2306
    %v2510 = vunpack.c.h.b16 %v2306
    %v2511 = vunpack.c.l.b16 %v2307
    %v2512 = vunpack.c.h.b16 %v2307
    %v2513 = vunpack.c.l.b16 %v2308
    %v2514 = vunpack.c.h.b16 %v2308
    %v2515 = vunpack.c.l.b16 %v2309
    %v2516 = vunpack.c.h.b16 %v2309
    %v2517 = vunpack.c.l.b16 %v2310
    %v2518 = vunpack.c.h.b16 %v2310
    %v2519 = vunpack.c.l.b16 %v2311
    %v2520 = vunpack.c.h.b16 %v2311
    %v2521 = vunpack.c.l.b16 %v2312
    %v2522 = vunpack.c.h.b16 %v2312
    %v2523 = vunpack.c.l.b16 %v2313
    %v2524 = vunpack.c.h.b16 %v2313
    %v2525 = vunpack.c.l.b16 %v2314
    %v2526 = vunpack.c.h.b16 %v2314
    %v2527 = vunpack.c.l.b16 %v2315
    %v2528 = vunpack.c.h.b16 %v2315
    %v2529 = vunpack.c.l.b16 %v2316
    %v2530 = vunpack.c.h.b16 %v2316
    %v2531 = vunpack.c.l.b16 %v2317
    %v2532 = vunpack.c.h.b16 %v2317
    %v2533 = vunpack.c.l.b16 %v2318
    %v2534 = vunpack.c.h.b16 %v2318
    %v2535 = vunpack.c.l.b16 %v2319
    %v2536 = vunpack.c.h.b16 %v2319
    %v2537 = vunpack.c.l.b16 %v2320
    %v2538 = vunpack.c.h.b16 %v2320
    %v2539 = vunpack.c.l.b16 %v2321
    %v2540 = vunpack.c.h.b16 %v2321
    %v2541 = vunpack.c.l.b16 %v2322
    %v2542 = vunpack.c.h.b16 %v2322
    %v2543 = vunpack.c.l.b16 %v2323
    %v2544 = vunpack.c.h.b16 %v2323
    %v2545 = vunpack.c.l.b16 %v2324
    %v2546 = vunpack.c.h.b16 %v2324
    %v2547 = vunpack.c.l.b16 %v2325
    %v2548 = vunpack.c.h.b16 %v2325
    %v2549 = vunpack.c.l.b16 %v2326
    %v2550 = vunpack.c.h.b16 %v2326
    %v2551 = vunpack.c.l.b16 %v2327
    %v2552 = vunpack.c.h.b16 %v2327
    %v2553 = vunpack.c.l.b16 %v2328
    %v2554 = vunpack.c.h.b16 %v2328
    %v2555 = vunpack.c.l.b16 %v2329
    %v2556 = vunpack.c.h.b16 %v2329
    %v2557 = vunpack.c.l.b16 %v2330
    %v2558 = vunpack.c.h.b16 %v2330
    %v2559 = vunpack.c.l.b16 %v2331
    %v2560 = vunpack.c.h.b16 %v2331
    %v2561 = vunpack.c.l.b16 %v2332
    %v2562 = vunpack.c.h.b16 %v2332
    %v2563 = vunpack.c.l.b16 %v2333
    %v2564 = vunpack.c.h.b16 %v2333
    %v2565 = vunpack.c.l.b16 %v2334
    %v2566 = vunpack.c.h.b16 %v2334
    %v2567 = vunpack.c.l.b16 %v2335
    %v2568 = vunpack.c.h.b16 %v2335
    %v2569 = vunpack.c.l.b16 %v2336
    %v2570 = vunpack.c.h.b16 %v2336
    %v2571 = vunpack.c.l.b16 %v2337
    %v2572 = vunpack.c.h.b16 %v2337
    %v2573 = vunpack.c.l.b16 %v2338
    %v2574 = vunpack.c.h.b16 %v2338
    %v2575 = vunpack.c.l.b16 %v2339
    %v2576 = vunpack.c.h.b16 %v2339
    %v2577 = vunpack.c.l.b16 %v2340
    %v2578 = vunpack.c.h.b16 %v2340
    %v2579 = vunpack.c.l.b16 %v2341
    %v2580 = vunpack.c.h.b16 %v2341
    %v2581 = vunpack.c.l.b16 %v2342
    %v2582 = vunpack.c.h.b16 %v2342
    %v2583 = vunpack.c.l.b16 %v2343
    %v2584 = vunpack.c.h.b16 %v2343
    %v2585 = vunpack.c.l.b16 %v2344
    %v2586 = vunpack.c.h.b16 %v2344
    %v2587 = vunpack.c.l.b16 %v2345
    %v2588 = vunpack.c.h.b16 %v2345
    %v2589 = vunpack.c.l.b16 %v2346
    %v2590 = vunpack.c.h.b16 %v2346
    %v2591 = vunpack.c.l.b16 %v2347
    %v2592 = vunpack.c.h.b16 %v2347
    %v2593 = vunpack.c.l.b16 %v2348
    %v2594 = vunpack.c.h.b16 %v2348
    %v2595 = vunpack.c.l.b16 %v2349
    %v2596 = vunpack.c.h.b16 %v2349
    %v2597 = vunpack.c.l.b16 %v2350
    %v2598 = vunpack.c.h.b16 %v2350
    %v2599 = vunpack.c.l.b16 %v2351
    %v2600 = vunpack.c.h.b16 %v2351
    %v2601 = vunpack.c.l.b16 %v2352
    %v2602 = vunpack.c.h.b16 %v2352
    %v2603 = vunpack.c.l.b16 %v2353
    %v2604 = vunpack.c.h.b16 %v2353
    %v2605 = vunpack.c.l.b16 %v2354
    %v2606 = vunpack.c.h.b16 %v2354
    %v2607 = vunpack.c.l.b16 %v2355
    %v2608 = vunpack.c.h.b16 %v2355
    %v2609 = vunpack.c.l.b16 %v2356
    %v2610 = vunpack.c.h.b16 %v2356
    %v2611 = vunpack.c.l.b16 %v2357
    %v2612 = vunpack.c.h.b16 %v2357
    %v2613 = vunpack.c.l.b16 %v2358
    %v2614 = vunpack.c.h.b16 %v2358
    %v2615 = vunpack.c.l.b16 %v2359
    %v2616 = vunpack.c.h.b16 %v2359
    %v2617 = vunpack.c.l.b16 %v2360
    %v2618 = vunpack.c.h.b16 %v2360
    %v2619 = vunpack.c.l.b16 %v2361
    %v2620 = vunpack.c.h.b16 %v2361
    %v2621 = vunpack.c.l.b16 %v2362
    %v2622 = vunpack.c.h.b16 %v2362
    %v2623 = vunpack.c.l.b16 %v2363
    %v2624 = vunpack.c.h.b16 %v2363
    %v2625 = vunpack.c.l.b16 %v2364
    %v2626 = vunpack.c.h.b16 %v2364
    %v2627 = vunpack.c.l.b16 %v2365
    %v2628 = vunpack.c.h.b16 %v2365
    %v2629 = vunpack.c.l.b16 %v2366
    %v2630 = vunpack.c.h.b16 %v2366
    %v2631 = vunpack.c.l.b16 %v2367
    %v2632 = vunpack.c.h.b16 %v2367
    %v2633 = vunpack.c.l.b16 %v2368
    %v2634 = vunpack.c.h.b16 %v2368
    %v2635 = vunpack.c.l.b16 %v2369
    %v2636 = vunpack.c.h.b16 %v2369
    %v2637 = vunpack.c.l.b16 %v2370
    %v2638 = vunpack.c.h.b16 %v2370
    %v2639 = vunpack.c.l.b16 %v2371
    %v2640 = vunpack.c.h.b16 %v2371
    %v2641 = vunpack.c.l.b16 %v2372
    %v2642 = vunpack.c.h.b16 %v2372
    %v2643 = vpack.c.b16 %v2503, %v2499
    %v2644 = vpack.c.b16 %v2504, %v2500
    %v2645 = vpack.c.b16 %v2505, %v2501
    %v2646 = vpack.c.b16 %v2506, %v2502
    %v2647 = vpack.c.b16 %v2511, %v2507
    %v2648 = vpack.c.b16 %v2512, %v2508
    %v2649 = vpack.c.b16 %v2513, %v2509
    %v2650 = vpack.c.b16 %v2514, %v2510
    %v2651 = vpack.c.b16 %v2519, %v2515
    %v2652 = vpack.c.b16 %v2520, %v2516
    %v2653 = vpack.c.b16 %v2521, %v2517
    %v2654 = vpack.c.b16 %v2522, %v2518
    %v2655 = vpack.c.b16 %v2527, %v2523
    %v2656 = vpack.c.b16 %v2528, %v2524
    %v2657 = vpack.c.b16 %v2529, %v2525
    %v2658 = vpack.c.b16 %v2530, %v2526
    %v2659 = vpack.c.b16 %v2535, %v2531
    %v2660 = vpack.c.b16 %v2536, %v2532
    %v2661 = vpack.c.b16 %v2537, %v2533
    %v2662 = vpack.c.b16 %v2538, %v2534
    %v2663 = vpack.c.b16 %v2543, %v2539
    %v2664 = vpack.c.b16 %v2544, %v2540
    %v2665 = vpack.c.b16 %v2545, %v2541
    %v2666 = vpack.c.b16 %v2546, %v2542
    %v2667 = vpack.c.b16 %v2551, %v2547
    %v2668 = vpack.c.b16 %v2552, %v2548
    %v2669 = vpack.c.b16 %v2553, %v2549
    %v2670 = vpack.c.b16 %v2554, %v2550
    %v2671 = vpack.c.b16 %v2559, %v2555
    %v2672 = vpack.c.b16 %v2560, %v2556
    %v2673 = vpack.c.b16 %v2561, %v2557
    %v2674 = vpack.c.b16 %v2562, %v2558
    %v2675 = vpack.c.b16 %v2567, %v2563
    %v2676 = vpack.c.b16 %v2568, %v2564
    %v2677 = vpack.c.b16 %v2569, %v2565
    %v2678 = vpack.c.b16 %v2570, %v2566
    %v2679 = vpack.c.b16 %v2575, %v2571
    %v2680 = vpack.c.b16 %v2576, %v2572
    %v2681 = vpack.c.b16 %v2577, %v2573
    %v2682 = vpack.c.b16 %v2578, %v2574
    %v2683 = vpack.c.b16 %v2583, %v2579
    %v2684 = vpack.c.b16 %v2584, %v2580
    %v2685 = vpack.c.b16 %v2585, %v2581
    %v2686 = vpack.c.b16 %v2586, %v2582
    %v2687 = vpack.c.b16 %v2591, %v2587
    %v2688 = vpack.c.b16 %v2592, %v2588
    %v2689 = vpack.c.b16 %v2593, %v2589
    %v2690 = vpack.c.b16 %v2594, %v2590
    %v2691 = vpack.c.b16 %v2599, %v2595
    %v2692 = vpack.c.b16 %v2600, %v2596
    %v2693 = vpack.c.b16 %v2601, %v2597
    %v2694 = vpack.c.b16 %v2602, %v2598
    %v2695 = vpack.c.b16 %v2607, %v2603
    %v2696 = vpack.c.b16 %v2608, %v2604
    %v2697 = vpack.c.b16 %v2609, %v2605
    %v2698 = vpack.c.b16 %v2610, %v2606
    %v2699 = vpack.c.b16 %v2615, %v2611
    %v2700 = vpack.c.b16 %v2616, %v2612
    %v2701 = vpack.c.b16 %v2617, %v2613
    %v2702 = vpack.c.b16 %v2618, %v2614
    %v2703 = vpack.c.b16 %v2623, %v2619
    %v2704 = vpack.c.b16 %v2624, %v2620
    %v2705 = vpack.c.b16 %v2625, %v2621
    %v2706 = vpack.c.b16 %v2626, %v2622
    %v2707 = vpack.c.b16 %v2631, %v2627
    %v2708 = vpack.c.b16 %v2632, %v2628
    %v2709 = vpack.c.b16 %v2633, %v2629
    %v2710 = vpack.c.b16 %v2634, %v2630
    %v2711 = vpack.c.b16 %v2639, %v2635
    %v2712 = vpack.c.b16 %v2640, %v2636
    %v2713 = vpack.c.b16 %v2641, %v2637
    %v2714 = vpack.c.b16 %v2642, %v2638
    %v2788 = vsel %vm1306, %v2419, 0
    %v2791 = vsel %vm1306, %v2422, 0
    %2793 = vmatpush.bf16.msra.mxu0 %v2671
    %2794 = vmatpush.bf16.msra.mxu0 %v2667
    %2795 = vmatpush.bf16.msra.mxu0 %v2663
    %2796 = vmatpush.bf16.msra.mxu0 %v2659
    %2797 = vmatpush.bf16.msra.mxu0 %v2655
    %2798 = vmatpush.bf16.msra.mxu0 %v2651
    %2799 = vmatpush.bf16.msra.mxu0 %v2647
    %2800 = vmatpush.bf16.msra.mxu0 %v2643
    %2801 = vmatmul.bf16.gmra.mxu0 %v2417
    %v2802 = vpop.f32.mrf.mxu0
    %v2803 = vadd.f32 %v2380, %v2802
    %v2804 = vpop.f32.mrf.mxu0
    %v2805 = vadd.f32 %v2385, %v2804
    %2806 = vmatmul.bf16.gmra.mxu0 %v2420
    %v2807 = vpop.f32.mrf.mxu0
    %v2808 = vadd.f32 %v2390, %v2807
    %v2809 = vpop.f32.mrf.mxu0
    %v2810 = vadd.f32 %v2395, %v2809
    %2811 = vdwg.mxu0
    %2812 = vmatpush.bf16.msra.mxu0 %v2703
    %2813 = vmatpush.bf16.msra.mxu0 %v2699
    %2814 = vmatpush.bf16.msra.mxu0 %v2695
    %2815 = vmatpush.bf16.msra.mxu0 %v2691
    %2816 = vmatpush.bf16.msra.mxu0 %v2687
    %2817 = vmatpush.bf16.msra.mxu0 %v2683
    %2818 = vmatpush.bf16.msra.mxu0 %v2679
    %2819 = vmatpush.bf16.msra.mxu0 %v2675
    %2820 = vmatmul.bf16.gmra.mxu0 %v2418
    %v2821 = vpop.f32.mrf.mxu0
    %v2822 = vadd.f32 %v2803, %v2821
    %v2823 = vpop.f32.mrf.mxu0
    %v2824 = vadd.f32 %v2805, %v2823
    %2825 = vmatmul.bf16.gmra.mxu0 %v2421
    %v2826 = vpop.f32.mrf.mxu0
    %v2827 = vadd.f32 %v2808, %v2826
    %v2828 = vpop.f32.mrf.mxu0
    %v2829 = vadd.f32 %v2810, %v2828
    %2830 = vdwg.mxu0
    %2831 = vmatpush.bf16.msra.mxu0 0
    %2832 = vmatpush.bf16.msra.mxu0 0
    %2833 = vmatpush.bf16.msra.mxu0 0
    %2834 = vmatpush.bf16.msra.mxu0 0
    %2835 = vmatpush.bf16.msra.mxu0 0
    %2836 = vmatpush.bf16.msra.mxu0 0
    %2837 = vmatpush.bf16.msra.mxu0 %v2711
    %2838 = vmatpush.bf16.msra.mxu0 %v2707
    %2839 = vmatmul.bf16.gmra.mxu0 %v2788
    %v2840 = vpop.f32.mrf.mxu0
    %v2841 = vadd.f32 %v2822, %v2840
    %v2842 = vpop.f32.mrf.mxu0
    %v2843 = vadd.f32 %v2824, %v2842
    %2844 = vmatmul.bf16.gmra.mxu0 %v2791
    %v2845 = vpop.f32.mrf.mxu0
    %v2846 = vadd.f32 %v2827, %v2845
    %v2847 = vpop.f32.mrf.mxu0
    %v2848 = vadd.f32 %v2829, %v2847
    %2849 = vdwg.mxu0
    %2850 = vmatpush.bf16.msra.mxu0 %v2672
    %2851 = vmatpush.bf16.msra.mxu0 %v2668
    %2852 = vmatpush.bf16.msra.mxu0 %v2664
    %2853 = vmatpush.bf16.msra.mxu0 %v2660
    %2854 = vmatpush.bf16.msra.mxu0 %v2656
    %2855 = vmatpush.bf16.msra.mxu0 %v2652
    %2856 = vmatpush.bf16.msra.mxu0 %v2648
    %2857 = vmatpush.bf16.msra.mxu0 %v2644
    %2858 = vmatmul.bf16.gmra.mxu0 %v2417
    %v2859 = vpop.f32.mrf.mxu0
    %v2860 = vadd.f32 %v2380, %v2859
    %v2861 = vpop.f32.mrf.mxu0
    %v2862 = vadd.f32 %v2385, %v2861
    %2863 = vmatmul.bf16.gmra.mxu0 %v2420
    %v2864 = vpop.f32.mrf.mxu0
    %v2865 = vadd.f32 %v2390, %v2864
    %v2866 = vpop.f32.mrf.mxu0
    %v2867 = vadd.f32 %v2395, %v2866
    %2868 = vdwg.mxu0
    %2869 = vmatpush.bf16.msra.mxu0 %v2704
    %2870 = vmatpush.bf16.msra.mxu0 %v2700
    %2871 = vmatpush.bf16.msra.mxu0 %v2696
    %2872 = vmatpush.bf16.msra.mxu0 %v2692
    %2873 = vmatpush.bf16.msra.mxu0 %v2688
    %2874 = vmatpush.bf16.msra.mxu0 %v2684
    %2875 = vmatpush.bf16.msra.mxu0 %v2680
    %2876 = vmatpush.bf16.msra.mxu0 %v2676
    %2877 = vmatmul.bf16.gmra.mxu0 %v2418
    %v2878 = vpop.f32.mrf.mxu0
    %v2879 = vadd.f32 %v2860, %v2878
    %v2880 = vpop.f32.mrf.mxu0
    %v2881 = vadd.f32 %v2862, %v2880
    %2882 = vmatmul.bf16.gmra.mxu0 %v2421
    %v2883 = vpop.f32.mrf.mxu0
    %v2884 = vadd.f32 %v2865, %v2883
    %v2885 = vpop.f32.mrf.mxu0
    %v2886 = vadd.f32 %v2867, %v2885
    %2887 = vdwg.mxu0
    %2888 = vmatpush.bf16.msra.mxu0 0
    %2889 = vmatpush.bf16.msra.mxu0 0
    %2890 = vmatpush.bf16.msra.mxu0 0
    %2891 = vmatpush.bf16.msra.mxu0 0
    %2892 = vmatpush.bf16.msra.mxu0 0
    %2893 = vmatpush.bf16.msra.mxu0 0
    %2894 = vmatpush.bf16.msra.mxu0 %v2712
    %2895 = vmatpush.bf16.msra.mxu0 %v2708
    %2896 = vmatmul.bf16.gmra.mxu0 %v2788
    %v2897 = vpop.f32.mrf.mxu0
    %v2898 = vadd.f32 %v2879, %v2897
    %v2899 = vpop.f32.mrf.mxu0
    %v2900 = vadd.f32 %v2881, %v2899
    %2901 = vmatmul.bf16.gmra.mxu0 %v2791
    %v2902 = vpop.f32.mrf.mxu0
    %v2903 = vadd.f32 %v2884, %v2902
    %v2904 = vpop.f32.mrf.mxu0
    %v2905 = vadd.f32 %v2886, %v2904
    %2906 = vdwg.mxu0
    %2907 = vmatpush.bf16.msra.mxu0 %v2673
    %2908 = vmatpush.bf16.msra.mxu0 %v2669
    %2909 = vmatpush.bf16.msra.mxu0 %v2665
    %2910 = vmatpush.bf16.msra.mxu0 %v2661
    %2911 = vmatpush.bf16.msra.mxu0 %v2657
    %2912 = vmatpush.bf16.msra.mxu0 %v2653
    %2913 = vmatpush.bf16.msra.mxu0 %v2649
    %2914 = vmatpush.bf16.msra.mxu0 %v2645
    %2915 = vmatmul.bf16.gmra.mxu0 %v2417
    %v2916 = vpop.f32.mrf.mxu0
    %v2917 = vadd.f32 %v2380, %v2916
    %v2918 = vpop.f32.mrf.mxu0
    %v2919 = vadd.f32 %v2385, %v2918
    %2920 = vmatmul.bf16.gmra.mxu0 %v2420
    %v2921 = vpop.f32.mrf.mxu0
    %v2922 = vadd.f32 %v2390, %v2921
    %v2923 = vpop.f32.mrf.mxu0
    %v2924 = vadd.f32 %v2395, %v2923
    %2925 = vdwg.mxu0
    %2926 = vmatpush.bf16.msra.mxu0 %v2705
    %2927 = vmatpush.bf16.msra.mxu0 %v2701
    %2928 = vmatpush.bf16.msra.mxu0 %v2697
    %2929 = vmatpush.bf16.msra.mxu0 %v2693
    %2930 = vmatpush.bf16.msra.mxu0 %v2689
    %2931 = vmatpush.bf16.msra.mxu0 %v2685
    %2932 = vmatpush.bf16.msra.mxu0 %v2681
    %2933 = vmatpush.bf16.msra.mxu0 %v2677
    %2934 = vmatmul.bf16.gmra.mxu0 %v2418
    %v2935 = vpop.f32.mrf.mxu0
    %v2936 = vadd.f32 %v2917, %v2935
    %v2937 = vpop.f32.mrf.mxu0
    %v2938 = vadd.f32 %v2919, %v2937
    %2939 = vmatmul.bf16.gmra.mxu0 %v2421
    %v2940 = vpop.f32.mrf.mxu0
    %v2941 = vadd.f32 %v2922, %v2940
    %v2942 = vpop.f32.mrf.mxu0
    %v2943 = vadd.f32 %v2924, %v2942
    %2944 = vdwg.mxu0
    %2945 = vmatpush.bf16.msra.mxu0 0
    %2946 = vmatpush.bf16.msra.mxu0 0
    %2947 = vmatpush.bf16.msra.mxu0 0
    %2948 = vmatpush.bf16.msra.mxu0 0
    %2949 = vmatpush.bf16.msra.mxu0 0
    %2950 = vmatpush.bf16.msra.mxu0 0
    %2951 = vmatpush.bf16.msra.mxu0 %v2713
    %2952 = vmatpush.bf16.msra.mxu0 %v2709
    %2953 = vmatmul.bf16.gmra.mxu0 %v2788
    %v2954 = vpop.f32.mrf.mxu0
    %v2955 = vadd.f32 %v2936, %v2954
    %v2956 = vpop.f32.mrf.mxu0
    %v2957 = vadd.f32 %v2938, %v2956
    %2958 = vmatmul.bf16.gmra.mxu0 %v2791
    %v2959 = vpop.f32.mrf.mxu0
    %v2960 = vadd.f32 %v2941, %v2959
    %v2961 = vpop.f32.mrf.mxu0
    %v2962 = vadd.f32 %v2943, %v2961
    %2963 = vdwg.mxu0
    %2964 = vmatpush.bf16.msra.mxu0 %v2674
    %2965 = vmatpush.bf16.msra.mxu0 %v2670
    %2966 = vmatpush.bf16.msra.mxu0 %v2666
    %2967 = vmatpush.bf16.msra.mxu0 %v2662
    %2968 = vmatpush.bf16.msra.mxu0 %v2658
    %2969 = vmatpush.bf16.msra.mxu0 %v2654
    %2970 = vmatpush.bf16.msra.mxu0 %v2650
    %2971 = vmatpush.bf16.msra.mxu0 %v2646
    %2972 = vmatmul.bf16.gmra.mxu0 %v2417
    %v2973 = vpop.f32.mrf.mxu0
    %v2974 = vadd.f32 %v2380, %v2973
    %v2975 = vpop.f32.mrf.mxu0
    %v2976 = vadd.f32 %v2385, %v2975
    %2977 = vmatmul.bf16.gmra.mxu0 %v2420
    %v2978 = vpop.f32.mrf.mxu0
    %v2979 = vadd.f32 %v2390, %v2978
    %v2980 = vpop.f32.mrf.mxu0
    %v2981 = vadd.f32 %v2395, %v2980
    %2982 = vdwg.mxu0
    %2983 = vmatpush.bf16.msra.mxu0 %v2706
    %2984 = vmatpush.bf16.msra.mxu0 %v2702
    %2985 = vmatpush.bf16.msra.mxu0 %v2698
    %2986 = vmatpush.bf16.msra.mxu0 %v2694
    %2987 = vmatpush.bf16.msra.mxu0 %v2690
    %2988 = vmatpush.bf16.msra.mxu0 %v2686
    %2989 = vmatpush.bf16.msra.mxu0 %v2682
    %2990 = vmatpush.bf16.msra.mxu0 %v2678
    %2991 = vmatmul.bf16.gmra.mxu0 %v2418
    %v2992 = vpop.f32.mrf.mxu0
    %v2993 = vadd.f32 %v2974, %v2992
    %v2994 = vpop.f32.mrf.mxu0
    %v2995 = vadd.f32 %v2976, %v2994
    %2996 = vmatmul.bf16.gmra.mxu0 %v2421
    %v2997 = vpop.f32.mrf.mxu0
    %v2998 = vadd.f32 %v2979, %v2997
    %v2999 = vpop.f32.mrf.mxu0
    %v3000 = vadd.f32 %v2981, %v2999
    %3001 = vdwg.mxu0
    %3002 = vmatpush.bf16.msra.mxu0 0
    %3003 = vmatpush.bf16.msra.mxu0 0
    %3004 = vmatpush.bf16.msra.mxu0 0
    %3005 = vmatpush.bf16.msra.mxu0 0
    %3006 = vmatpush.bf16.msra.mxu0 0
    %3007 = vmatpush.bf16.msra.mxu0 0
    %3008 = vmatpush.bf16.msra.mxu0 %v2714
    %3009 = vmatpush.bf16.msra.mxu0 %v2710
    %3010 = vmatmul.bf16.gmra.mxu0 %v2788
    %v3011 = vpop.f32.mrf.mxu0
    %v3012 = vadd.f32 %v2993, %v3011
    %v3013 = vpop.f32.mrf.mxu0
    %v3014 = vadd.f32 %v2995, %v3013
    %3015 = vmatmul.bf16.gmra.mxu0 %v2791
    %v3016 = vpop.f32.mrf.mxu0
    %v3017 = vadd.f32 %v2998, %v3016
    %v3018 = vpop.f32.mrf.mxu0
    %v3019 = vadd.f32 %v3000, %v3018
    %3020 = vdwg.mxu0
    %v3021 = vld [vmem:[%s2] sm:$0xff]
    %v3022 = vld [vmem:[%s2 + $0x8] sm:$0xff]
    %v3023 = vld [vmem:[%s2 + $0x10] sm:$0xff]
    %v3024 = vld [vmem:[%s2 + $0x18] sm:$0xff]
    %v3025 = vld [vmem:[%s2 + $0x20] sm:$0xff]
    %v3026 = vld [vmem:[%s2 + $0x28] sm:$0xff]
    %v3027 = vld [vmem:[%s2 + $0x30] sm:$0xff]
    %v3028 = vld [vmem:[%s2 + $0x38] sm:$0xff]
    %v3029 = vld [vmem:[%s2 + $0x40] sm:$0xff]
    %v3030 = vld [vmem:[%s2 + $0x48] sm:$0xff]
    %v3031 = vld [vmem:[%s2 + $0x50] sm:$0xff]
    %v3032 = vld [vmem:[%s2 + $0x58] sm:$0xff]
    %v3033 = vld [vmem:[%s2 + $0x60] sm:$0xff]
    %v3034 = vld [vmem:[%s2 + $0x68] sm:$0xff]
    %v3035 = vld [vmem:[%s2 + $0x70] sm:$0xff]
    %v3036 = vld [vmem:[%s2 + $0x78] sm:$0xff]
    %v3037 = vld [vmem:[%s2 + $0x80] sm:$0xff]
    %v3038 = vld [vmem:[%s2 + $0x88] sm:$0xff]
    %v3039 = vld [vmem:[%s2 + $0x90] sm:$0xff]
    %v3040 = vld [vmem:[%s2 + $0x98] sm:$0xff]
    %v3041 = vld [vmem:[%s2 + $0xa0] sm:$0xff]
    %v3042 = vld [vmem:[%s2 + $0xa8] sm:$0xff]
    %v3043 = vld [vmem:[%s2 + $0xb0] sm:$0xff]
    %v3044 = vld [vmem:[%s2 + $0xb8] sm:$0xff]
    %v3045 = vld [vmem:[%s2 + $0xc0] sm:$0xff]
    %v3046 = vld [vmem:[%s2 + $0xc8] sm:$0xff]
    %v3047 = vld [vmem:[%s2 + $0xd0] sm:$0xff]
    %v3048 = vld [vmem:[%s2 + $0xd8] sm:$0xff]
    %v3049 = vld [vmem:[%s2 + $0xe0] sm:$0xff]
    %v3050 = vld [vmem:[%s2 + $0xe8] sm:$0xff]
    %v3051 = vld [vmem:[%s2 + $0xf0] sm:$0xff]
    %v3052 = vld [vmem:[%s2 + $0xf8] sm:$0xff]
    %v3053 = vld [vmem:[%s2 + $0x100] sm:$0xff]
    %v3054 = vld [vmem:[%s2 + $0x108] sm:$0xff]
    %v3055 = vld [vmem:[%s2 + $0x110] sm:$0xff]
    %v3056 = vld [vmem:[%s2 + $0x118] sm:$0xff]
    %v3057 = vld [vmem:[%s2 + $0x120] sm:$0xff]
    %v3058 = vld [vmem:[%s2 + $0x128] sm:$0xff]
    %v3059 = vld [vmem:[%s2 + $0x130] sm:$0xff]
    %v3060 = vld [vmem:[%s2 + $0x138] sm:$0xff]
    %v3061 = vld [vmem:[%s2 + $0x140] sm:$0xff]
    %v3062 = vld [vmem:[%s2 + $0x148] sm:$0xff]
    %v3063 = vld [vmem:[%s2 + $0x150] sm:$0xff]
    %v3064 = vld [vmem:[%s2 + $0x158] sm:$0xff]
    %v3065 = vld [vmem:[%s2 + $0x160] sm:$0xff]
    %v3066 = vld [vmem:[%s2 + $0x168] sm:$0xff]
    %v3067 = vld [vmem:[%s2 + $0x170] sm:$0xff]
    %v3068 = vld [vmem:[%s2 + $0x178] sm:$0xff]
    %v3069 = vld [vmem:[%s2 + $0x180] sm:$0xff]
    %v3070 = vld [vmem:[%s2 + $0x188] sm:$0xff]
    %v3071 = vld [vmem:[%s2 + $0x190] sm:$0xff]
    %v3072 = vld [vmem:[%s2 + $0x198] sm:$0xff]
    %v3073 = vld [vmem:[%s2 + $0x1a0] sm:$0xff]
    %v3074 = vld [vmem:[%s2 + $0x1a8] sm:$0xff]
    %v3075 = vld [vmem:[%s2 + $0x1b0] sm:$0xff]
    %v3076 = vld [vmem:[%s2 + $0x1b8] sm:$0xff]
    %v3077 = vld [vmem:[%s2 + $0x1c0] sm:$0xff]
    %v3078 = vld [vmem:[%s2 + $0x1c8] sm:$0xff]
    %v3079 = vld [vmem:[%s2 + $0x1d0] sm:$0xff]
    %v3080 = vld [vmem:[%s2 + $0x1d8] sm:$0xff]
    %v3081 = vld [vmem:[%s2 + $0x1e0] sm:$0xff]
    %v3082 = vld [vmem:[%s2 + $0x1e8] sm:$0xff]
    %v3083 = vld [vmem:[%s2 + $0x1f0] sm:$0xff]
    %v3084 = vld [vmem:[%s2 + $0x1f8] sm:$0xff]
    %3085 = vmatpush.msra.mxu0 %v3036
    %3086 = vmatpush.msra.mxu0 %v3035
    %3087 = vmatpush.msra.mxu0 %v3034
    %3088 = vmatpush.msra.mxu0 %v3033
    %3089 = vmatpush.msra.mxu0 %v3032
    %3090 = vmatpush.msra.mxu0 %v3031
    %3091 = vmatpush.msra.mxu0 %v3030
    %3092 = vmatpush.msra.mxu0 %v3029
    %3093 = vmatpush.msra.mxu0 %v3028
    %3094 = vmatpush.msra.mxu0 %v3027
    %3095 = vmatpush.msra.mxu0 %v3026
    %3096 = vmatpush.msra.mxu0 %v3025
    %3097 = vmatpush.msra.mxu0 %v3024
    %3098 = vmatpush.msra.mxu0 %v3023
    %3099 = vmatpush.msra.mxu0 %v3022
    %3100 = vmatpush.msra.mxu0 %v3021
    %3101 = vmatmul.f32.gmra.mxu0 %v2841
    %v3102 = vpop.f32.mrf.mxu0
    %v3103 = vadd.f32 0.0, %v3102
    %3104 = vmatmul.f32.gmra.mxu0 %v2843
    %v3105 = vpop.f32.mrf.mxu0
    %v3106 = vadd.f32 0.0, %v3105
    %3107 = vmatmul.f32.gmra.mxu0 %v2846
    %v3108 = vpop.f32.mrf.mxu0
    %v3109 = vadd.f32 0.0, %v3108
    %3110 = vmatmul.f32.gmra.mxu0 %v2848
    %v3111 = vpop.f32.mrf.mxu0
    %v3112 = vadd.f32 0.0, %v3111
    %3113 = vdwg.mxu0
    %3114 = vmatpush.msra.mxu0 %v3052
    %3115 = vmatpush.msra.mxu0 %v3051
    %3116 = vmatpush.msra.mxu0 %v3050
    %3117 = vmatpush.msra.mxu0 %v3049
    %3118 = vmatpush.msra.mxu0 %v3048
    %3119 = vmatpush.msra.mxu0 %v3047
    %3120 = vmatpush.msra.mxu0 %v3046
    %3121 = vmatpush.msra.mxu0 %v3045
    %3122 = vmatpush.msra.mxu0 %v3044
    %3123 = vmatpush.msra.mxu0 %v3043
    %3124 = vmatpush.msra.mxu0 %v3042
    %3125 = vmatpush.msra.mxu0 %v3041
    %3126 = vmatpush.msra.mxu0 %v3040
    %3127 = vmatpush.msra.mxu0 %v3039
    %3128 = vmatpush.msra.mxu0 %v3038
    %3129 = vmatpush.msra.mxu0 %v3037
    %3130 = vmatmul.f32.gmra.mxu0 %v2898
    %v3131 = vpop.f32.mrf.mxu0
    %v3132 = vadd.f32 %v3103, %v3131
    %3133 = vmatmul.f32.gmra.mxu0 %v2900
    %v3134 = vpop.f32.mrf.mxu0
    %v3135 = vadd.f32 %v3106, %v3134
    %3136 = vmatmul.f32.gmra.mxu0 %v2903
    %v3137 = vpop.f32.mrf.mxu0
    %v3138 = vadd.f32 %v3109, %v3137
    %3139 = vmatmul.f32.gmra.mxu0 %v2905
    %v3140 = vpop.f32.mrf.mxu0
    %v3141 = vadd.f32 %v3112, %v3140
    %3142 = vdwg.mxu0
    %3143 = vmatpush.msra.mxu0 %v3068
    %3144 = vmatpush.msra.mxu0 %v3067
    %3145 = vmatpush.msra.mxu0 %v3066
    %3146 = vmatpush.msra.mxu0 %v3065
    %3147 = vmatpush.msra.mxu0 %v3064
    %3148 = vmatpush.msra.mxu0 %v3063
    %3149 = vmatpush.msra.mxu0 %v3062
    %3150 = vmatpush.msra.mxu0 %v3061
    %3151 = vmatpush.msra.mxu0 %v3060
    %3152 = vmatpush.msra.mxu0 %v3059
    %3153 = vmatpush.msra.mxu0 %v3058
    %3154 = vmatpush.msra.mxu0 %v3057
    %3155 = vmatpush.msra.mxu0 %v3056
    %3156 = vmatpush.msra.mxu0 %v3055
    %3157 = vmatpush.msra.mxu0 %v3054
    %3158 = vmatpush.msra.mxu0 %v3053
    %3159 = vmatmul.f32.gmra.mxu0 %v2955
    %v3160 = vpop.f32.mrf.mxu0
    %v3161 = vadd.f32 %v3132, %v3160
    %3162 = vmatmul.f32.gmra.mxu0 %v2957
    %v3163 = vpop.f32.mrf.mxu0
    %v3164 = vadd.f32 %v3135, %v3163
    %3165 = vmatmul.f32.gmra.mxu0 %v2960
    %v3166 = vpop.f32.mrf.mxu0
    %v3167 = vadd.f32 %v3138, %v3166
    %3168 = vmatmul.f32.gmra.mxu0 %v2962
    %v3169 = vpop.f32.mrf.mxu0
    %v3170 = vadd.f32 %v3141, %v3169
    %3171 = vdwg.mxu0
    %3172 = vmatpush.msra.mxu0 %v3084
    %3173 = vmatpush.msra.mxu0 %v3083
    %3174 = vmatpush.msra.mxu0 %v3082
    %3175 = vmatpush.msra.mxu0 %v3081
    %3176 = vmatpush.msra.mxu0 %v3080
    %3177 = vmatpush.msra.mxu0 %v3079
    %3178 = vmatpush.msra.mxu0 %v3078
    %3179 = vmatpush.msra.mxu0 %v3077
    %3180 = vmatpush.msra.mxu0 %v3076
    %3181 = vmatpush.msra.mxu0 %v3075
    %3182 = vmatpush.msra.mxu0 %v3074
    %3183 = vmatpush.msra.mxu0 %v3073
    %3184 = vmatpush.msra.mxu0 %v3072
    %3185 = vmatpush.msra.mxu0 %v3071
    %3186 = vmatpush.msra.mxu0 %v3070
    %3187 = vmatpush.msra.mxu0 %v3069
    %3188 = vmatmul.f32.gmra.mxu0 %v3012
    %v3189 = vpop.f32.mrf.mxu0
    %v3190 = vadd.f32 %v3161, %v3189
    %3191 = vmatmul.f32.gmra.mxu0 %v3014
    %v3192 = vpop.f32.mrf.mxu0
    %v3193 = vadd.f32 %v3164, %v3192
    %3194 = vmatmul.f32.gmra.mxu0 %v3017
    %v3195 = vpop.f32.mrf.mxu0
    %v3196 = vadd.f32 %v3167, %v3195
    %3197 = vmatmul.f32.gmra.mxu0 %v3019
    %v3198 = vpop.f32.mrf.mxu0
    %v3199 = vadd.f32 %v3170, %v3198
    %3200 = vdwg.mxu0
    %v3201 = vld [vmem:[%s8] sm:$0x3]
    %v3202 = vld [vmem:[%s9] sm:$0x3]
    %3204 = vset.pattern.permute.xlu0 0
    %3205 = vperm.xlu0 %3204, %v3202
    %v3206 = vpop.permute.xlu0 %3205
    %v3209 = vsel %vm1306, %v3201, 0
    %3211 = vmatpush.msra.mxu0 0.0
    %3212 = vmatpush.msra.mxu0 0.0
    %3213 = vmatpush.msra.mxu0 0.0
    %3214 = vmatpush.msra.mxu0 0.0
    %3215 = vmatpush.msra.mxu0 0.0
    %3216 = vmatpush.msra.mxu0 0.0
    %3217 = vmatpush.msra.mxu0 0.0
    %3218 = vmatpush.msra.mxu0 0.0
    %3219 = vmatpush.msra.mxu0 0.0
    %3220 = vmatpush.msra.mxu0 0.0
    %3221 = vmatpush.msra.mxu0 0.0
    %3222 = vmatpush.msra.mxu0 0.0
    %3223 = vmatpush.msra.mxu0 %v3199
    %3224 = vmatpush.msra.mxu0 %v3196
    %3225 = vmatpush.msra.mxu0 %v3193
    %3226 = vmatpush.msra.mxu0 %v3190
    %3227 = vmatmul.f32.gmra.mxu0 %v3209
    %v3228 = vpop.f32.mrf.mxu0
    %v3229 = vadd.f32 %v3206, %v3228
    %3230 = vdwg.mxu0
    %v3231 = vmax.f32 %v3229, 0.0
    %v3232 = vld [vmem:[%s10] sm:$0xff]
    %v3233 = vld [vmem:[%s10 + $0x8] sm:$0xff]
    %v3234 = vld [vmem:[%s10 + $0x10] sm:$0xff]
    %v3235 = vld [vmem:[%s10 + $0x18] sm:$0xff]
    %v3236 = vld [vmem:[%s11] sm:$0xff]
    %v3237 = vld [vmem:[%s11 + $0x8] sm:$0xff]
    %v3238 = vld [vmem:[%s11 + $0x10] sm:$0xff]
    %v3239 = vld [vmem:[%s11 + $0x18] sm:$0xff]
    %3241 = vset.pattern.permute.xlu0 0
    %3242 = vperm.xlu0 %3241, %v3236
    %v3243 = vpop.permute.xlu0 %3242
    %3246 = vset.pattern.permute.xlu0 0
    %3247 = vperm.xlu0 %3246, %v3237
    %v3248 = vpop.permute.xlu0 %3247
    %3251 = vset.pattern.permute.xlu0 0
    %3252 = vperm.xlu0 %3251, %v3238
    %v3253 = vpop.permute.xlu0 %3252
    %3256 = vset.pattern.permute.xlu0 0
    %3257 = vperm.xlu0 %3256, %v3239
    %v3258 = vpop.permute.xlu0 %3257
    %vm3260 = vcmask 15360
    %v3262 = vsel %vm3260, %v3232, 0
    %v3265 = vsel %vm3260, %v3233, 0
    %v3268 = vsel %vm3260, %v3234, 0
    %v3271 = vsel %vm3260, %v3235, 0
    %vm3273 = vcmask 1041408
    %v3275 = vsel %vm3273, %v3231, 0
    %3277 = vmatpush.msra.mxu0 0.0
    %3278 = vmatpush.msra.mxu0 0.0
    %3279 = vmatpush.msra.mxu0 0.0
    %3280 = vmatpush.msra.mxu0 0.0
    %3281 = vmatpush.msra.mxu0 0.0
    %3282 = vmatpush.msra.mxu0 0.0
    %3283 = vmatpush.msra.mxu0 0.0
    %3284 = vmatpush.msra.mxu0 0.0
    %3285 = vmatpush.msra.mxu0 0.0
    %3286 = vmatpush.msra.mxu0 0.0
    %3287 = vmatpush.msra.mxu0 0.0
    %3288 = vmatpush.msra.mxu0 0.0
    %3289 = vmatpush.msra.mxu0 0.0
    %3290 = vmatpush.msra.mxu0 0.0
    %3291 = vmatpush.msra.mxu0 0.0
    %3292 = vmatpush.msra.mxu0 %v3275
    %3293 = vmatmul.f32.gmra.mxu0 %v3262
    %v3294 = vpop.f32.mrf.mxu0
    %v3295 = vadd.f32 %v3243, %v3294
    %3296 = vmatmul.f32.gmra.mxu0 %v3265
    %v3297 = vpop.f32.mrf.mxu0
    %v3298 = vadd.f32 %v3248, %v3297
    %3299 = vmatmul.f32.gmra.mxu0 %v3268
    %v3300 = vpop.f32.mrf.mxu0
    %v3301 = vadd.f32 %v3253, %v3300
    %3302 = vmatmul.f32.gmra.mxu0 %v3271
    %v3303 = vpop.f32.mrf.mxu0
    %v3304 = vadd.f32 %v3258, %v3303
    %3305 = vdwg.mxu0
    %v3306 = vxor.u32 %v3295, 2147483648
    %v3307 = vxor.u32 %v3298, 2147483648
    %v3308 = vxor.u32 %v3301, 2147483648
    %v3309 = vxor.u32 %v3304, 2147483648
    %v3310 = vmul.f32 %v3306, 1.442695
    %v3311 = vpow.pop %v3310
    %v3312 = vmul.f32 %v3307, 1.442695
    %v3313 = vpow.pop %v3312
    %v3314 = vmul.f32 %v3308, 1.442695
    %v3315 = vpow.pop %v3314
    %v3316 = vmul.f32 %v3309, 1.442695
    %v3317 = vpow.pop %v3316
    %v3318 = vadd.f32 %v3311, 1.0
    %v3319 = vadd.f32 %v3313, 1.0
    %v3320 = vadd.f32 %v3315, 1.0
    %v3321 = vadd.f32 %v3317, 1.0
    %v3322 = vrcp.pop %v3318
    %v3323 = vmul.f32 %v3318, %v3322
    %v3324 = vsub.f32 1.0, %v3323
    %v3325 = vmul.f32 %v3322, %v3324
    %v3326 = vadd.f32 %v3322, %v3325
    %vm3327 = vweird.f32 %v3318
    %vm3328 = vweird.f32 %v3322
    %vm3329 = vmor %vm3327, %vm3328
    %v3330 = vsel %vm3329, %v3322, %v3326
    %v3331 = vand.u32 2147483647, %v3318
    %vm3332 = vcmp.eq.f32.partialorder %v3331, 8.507059e+37
    %v3333 = vand.u32 %v3318, 2147483648
    %v3334 = vor.u32 1.1754944e-38, %v3333
    %v3335 = vsel %vm3332, %v3334, %v3330
    %v3336 = vmul.f32 1.0, %v3335
    %v3337 = vrcp.pop %v3319
    %v3338 = vmul.f32 %v3319, %v3337
    %v3339 = vsub.f32 1.0, %v3338
    %v3340 = vmul.f32 %v3337, %v3339
    %v3341 = vadd.f32 %v3337, %v3340
    %vm3342 = vweird.f32 %v3319
    %vm3343 = vweird.f32 %v3337
    %vm3344 = vmor %vm3342, %vm3343
    %v3345 = vsel %vm3344, %v3337, %v3341
    %v3346 = vand.u32 2147483647, %v3319
    %vm3347 = vcmp.eq.f32.partialorder %v3346, 8.507059e+37
    %v3348 = vand.u32 %v3319, 2147483648
    %v3349 = vor.u32 1.1754944e-38, %v3348
    %v3350 = vsel %vm3347, %v3349, %v3345
    %v3351 = vmul.f32 1.0, %v3350
    %v3352 = vrcp.pop %v3320
    %v3353 = vmul.f32 %v3320, %v3352
    %v3354 = vsub.f32 1.0, %v3353
    %v3355 = vmul.f32 %v3352, %v3354
    %v3356 = vadd.f32 %v3352, %v3355
    %vm3357 = vweird.f32 %v3320
    %vm3358 = vweird.f32 %v3352
    %vm3359 = vmor %vm3357, %vm3358
    %v3360 = vsel %vm3359, %v3352, %v3356
    %v3361 = vand.u32 2147483647, %v3320
    %vm3362 = vcmp.eq.f32.partialorder %v3361, 8.507059e+37
    %v3363 = vand.u32 %v3320, 2147483648
    %v3364 = vor.u32 1.1754944e-38, %v3363
    %v3365 = vsel %vm3362, %v3364, %v3360
    %v3366 = vmul.f32 1.0, %v3365
    %v3367 = vrcp.pop %v3321
    %v3368 = vmul.f32 %v3321, %v3367
    %v3369 = vsub.f32 1.0, %v3368
    %v3370 = vmul.f32 %v3367, %v3369
    %v3371 = vadd.f32 %v3367, %v3370
    %vm3372 = vweird.f32 %v3321
    %vm3373 = vweird.f32 %v3367
    %vm3374 = vmor %vm3372, %vm3373
    %v3375 = vsel %vm3374, %v3367, %v3371
    %v3376 = vand.u32 2147483647, %v3321
    %vm3377 = vcmp.eq.f32.partialorder %v3376, 8.507059e+37
    %v3378 = vand.u32 %v3321, 2147483648
    %v3379 = vor.u32 1.1754944e-38, %v3378
    %v3380 = vsel %vm3377, %v3379, %v3375
    %v3381 = vmul.f32 1.0, %v3380
    %v3382 = vld [vmem:[%s3] sm:$0xff]
    %3384 = vst [vmem:[#allocation1] ss:$4 sm:$0xff] %v3382
    %v3385 = vld.sshfl [vmem:[#allocation1] sm:$0xff pattern:$0x73625140]
    %v3386 = vld.sshfl [vmem:[#allocation1 + $0x8] sm:$0xff pattern:$0x73625140]
    %v3387 = vld.sshfl [vmem:[#allocation1 + $0x10] sm:$0xff pattern:$0x73625140]
    %v3388 = vld.sshfl [vmem:[#allocation1 + $0x18] sm:$0xff pattern:$0x73625140]
    %v3390 = vsel %vm3260, %v3336, 0
    %v3393 = vsel %vm3260, %v3351, 0
    %v3396 = vsel %vm3260, %v3366, 0
    %v3399 = vsel %vm3260, %v3381, 0
    %v3401 = vsel %vm3273, %v3385, 0
    %v3403 = vsel %vm3273, %v3386, 0
    %v3405 = vsel %vm3273, %v3387, 0
    %v3407 = vsel %vm3273, %v3388, 0
    %3409 = vmatpush.msra.mxu0 0.0
    %3410 = vmatpush.msra.mxu0 0.0
    %3411 = vmatpush.msra.mxu0 0.0
    %3412 = vmatpush.msra.mxu0 0.0
    %3413 = vmatpush.msra.mxu0 0.0
    %3414 = vmatpush.msra.mxu0 0.0
    %3415 = vmatpush.msra.mxu0 0.0
    %3416 = vmatpush.msra.mxu0 0.0
    %3417 = vmatpush.msra.mxu0 0.0
    %3418 = vmatpush.msra.mxu0 0.0
    %3419 = vmatpush.msra.mxu0 0.0
    %3420 = vmatpush.msra.mxu0 0.0
    %3421 = vmatpush.msra.mxu0 0.0
    %3422 = vmatpush.msra.mxu0 0.0
    %3423 = vmatpush.msra.mxu0 0.0
    %3424 = vmatpush.msra.mxu0 %v3401
    %3425 = vmatmul.f32.gmra.mxu0 %v3390
    %v3426 = vpop.f32.mrf.mxu0
    %v3427 = vadd.f32 0.0, %v3426
    %3428 = vmatmul.f32.gmra.mxu0 %v3393
    %v3429 = vpop.f32.mrf.mxu0
    %v3430 = vadd.f32 0.0, %v3429
    %3431 = vmatmul.f32.gmra.mxu0 %v3396
    %v3432 = vpop.f32.mrf.mxu0
    %v3433 = vadd.f32 0.0, %v3432
    %3434 = vmatmul.f32.gmra.mxu0 %v3399
    %v3435 = vpop.f32.mrf.mxu0
    %v3436 = vadd.f32 0.0, %v3435
    %3437 = vdwg.mxu0
    %3438 = vmatpush.msra.mxu0 0.0
    %3439 = vmatpush.msra.mxu0 0.0
    %3440 = vmatpush.msra.mxu0 0.0
    %3441 = vmatpush.msra.mxu0 0.0
    %3442 = vmatpush.msra.mxu0 0.0
    %3443 = vmatpush.msra.mxu0 0.0
    %3444 = vmatpush.msra.mxu0 0.0
    %3445 = vmatpush.msra.mxu0 0.0
    %3446 = vmatpush.msra.mxu0 0.0
    %3447 = vmatpush.msra.mxu0 0.0
    %3448 = vmatpush.msra.mxu0 0.0
    %3449 = vmatpush.msra.mxu0 0.0
    %3450 = vmatpush.msra.mxu0 0.0
    %3451 = vmatpush.msra.mxu0 0.0
    %3452 = vmatpush.msra.mxu0 0.0
    %3453 = vmatpush.msra.mxu0 %v3403
    %3454 = vmatmul.f32.gmra.mxu0 %v3390
    %v3455 = vpop.f32.mrf.mxu0
    %v3456 = vadd.f32 0.0, %v3455
    %3457 = vmatmul.f32.gmra.mxu0 %v3393
    %v3458 = vpop.f32.mrf.mxu0
    %v3459 = vadd.f32 0.0, %v3458
    %3460 = vmatmul.f32.gmra.mxu0 %v3396
    %v3461 = vpop.f32.mrf.mxu0
    %v3462 = vadd.f32 0.0, %v3461
    %3463 = vmatmul.f32.gmra.mxu0 %v3399
    %v3464 = vpop.f32.mrf.mxu0
    %v3465 = vadd.f32 0.0, %v3464
    %3466 = vdwg.mxu0
    %3467 = vmatpush.msra.mxu0 0.0
    %3468 = vmatpush.msra.mxu0 0.0
    %3469 = vmatpush.msra.mxu0 0.0
    %3470 = vmatpush.msra.mxu0 0.0
    %3471 = vmatpush.msra.mxu0 0.0
    %3472 = vmatpush.msra.mxu0 0.0
    %3473 = vmatpush.msra.mxu0 0.0
    %3474 = vmatpush.msra.mxu0 0.0
    %3475 = vmatpush.msra.mxu0 0.0
    %3476 = vmatpush.msra.mxu0 0.0
    %3477 = vmatpush.msra.mxu0 0.0
    %3478 = vmatpush.msra.mxu0 0.0
    %3479 = vmatpush.msra.mxu0 0.0
    %3480 = vmatpush.msra.mxu0 0.0
    %3481 = vmatpush.msra.mxu0 0.0
    %3482 = vmatpush.msra.mxu0 %v3405
    %3483 = vmatmul.f32.gmra.mxu0 %v3390
    %v3484 = vpop.f32.mrf.mxu0
    %v3485 = vadd.f32 0.0, %v3484
    %3486 = vmatmul.f32.gmra.mxu0 %v3393
    %v3487 = vpop.f32.mrf.mxu0
    %v3488 = vadd.f32 0.0, %v3487
    %3489 = vmatmul.f32.gmra.mxu0 %v3396
    %v3490 = vpop.f32.mrf.mxu0
    %v3491 = vadd.f32 0.0, %v3490
    %3492 = vmatmul.f32.gmra.mxu0 %v3399
    %v3493 = vpop.f32.mrf.mxu0
    %v3494 = vadd.f32 0.0, %v3493
    %3495 = vdwg.mxu0
    %3496 = vmatpush.msra.mxu0 0.0
    %3497 = vmatpush.msra.mxu0 0.0
    %3498 = vmatpush.msra.mxu0 0.0
    %3499 = vmatpush.msra.mxu0 0.0
    %3500 = vmatpush.msra.mxu0 0.0
    %3501 = vmatpush.msra.mxu0 0.0
    %3502 = vmatpush.msra.mxu0 0.0
    %3503 = vmatpush.msra.mxu0 0.0
    %3504 = vmatpush.msra.mxu0 0.0
    %3505 = vmatpush.msra.mxu0 0.0
    %3506 = vmatpush.msra.mxu0 0.0
    %3507 = vmatpush.msra.mxu0 0.0
    %3508 = vmatpush.msra.mxu0 0.0
    %3509 = vmatpush.msra.mxu0 0.0
    %3510 = vmatpush.msra.mxu0 0.0
    %3511 = vmatpush.msra.mxu0 %v3407
    %3512 = vmatmul.f32.gmra.mxu0 %v3390
    %v3513 = vpop.f32.mrf.mxu0
    %v3514 = vadd.f32 0.0, %v3513
    %3515 = vmatmul.f32.gmra.mxu0 %v3393
    %v3516 = vpop.f32.mrf.mxu0
    %v3517 = vadd.f32 0.0, %v3516
    %3518 = vmatmul.f32.gmra.mxu0 %v3396
    %v3519 = vpop.f32.mrf.mxu0
    %v3520 = vadd.f32 0.0, %v3519
    %3521 = vmatmul.f32.gmra.mxu0 %v3399
    %v3522 = vpop.f32.mrf.mxu0
    %v3523 = vadd.f32 0.0, %v3522
    %3524 = vdwg.mxu0
    %v3525 = vmul.f32 %v2841, %v3427
    %v3526 = vmul.f32 %v2898, %v3456
    %v3527 = vmul.f32 %v2955, %v3485
    %v3528 = vmul.f32 %v3012, %v3514
    %v3529 = vmul.f32 %v2843, %v3430
    %v3530 = vmul.f32 %v2900, %v3459
    %v3531 = vmul.f32 %v2957, %v3488
    %v3532 = vmul.f32 %v3014, %v3517
    %v3533 = vmul.f32 %v2846, %v3433
    %v3534 = vmul.f32 %v2903, %v3462
    %v3535 = vmul.f32 %v2960, %v3491
    %v3536 = vmul.f32 %v3017, %v3520
    %v3537 = vmul.f32 %v2848, %v3436
    %v3538 = vmul.f32 %v2905, %v3465
    %v3539 = vmul.f32 %v2962, %v3494
    %v3540 = vmul.f32 %v3019, %v3523
    %v3541 = vadd.f32 %v3525, %v43
    %v3542 = vadd.f32 %v3526, %v44
    %v3543 = vadd.f32 %v3527, %v45
    %v3544 = vadd.f32 %v3528, %v46
    %v3545 = vadd.f32 %v3529, %v47
    %v3546 = vadd.f32 %v3530, %v48
    %v3547 = vadd.f32 %v3531, %v49
    %v3548 = vadd.f32 %v3532, %v50
    %v3549 = vadd.f32 %v3533, %v51
    %v3550 = vadd.f32 %v3534, %v52
    %v3551 = vadd.f32 %v3535, %v53
    %v3552 = vadd.f32 %v3536, %v54
    %v3553 = vadd.f32 %v3537, %v55
    %v3554 = vadd.f32 %v3538, %v56
    %v3555 = vadd.f32 %v3539, %v57
    %v3556 = vadd.f32 %v3540, %v58
    %3557 = vst [vmem:[#allocation3] sm:$0xff] %v3541
    %3558 = vst [vmem:[#allocation3 + $0x8] sm:$0xff] %v3542
    %3559 = vst [vmem:[#allocation3 + $0x10] sm:$0xff] %v3543
    %3560 = vst [vmem:[#allocation3 + $0x18] sm:$0xff] %v3544
    %3561 = vst [vmem:[#allocation3 + $0x20] sm:$0xff] %v3545
    %3562 = vst [vmem:[#allocation3 + $0x28] sm:$0xff] %v3546
    %3563 = vst [vmem:[#allocation3 + $0x30] sm:$0xff] %v3547
    %3564 = vst [vmem:[#allocation3 + $0x38] sm:$0xff] %v3548
    %3565 = vst [vmem:[#allocation3 + $0x40] sm:$0xff] %v3549
    %3566 = vst [vmem:[#allocation3 + $0x48] sm:$0xff] %v3550
    %3567 = vst [vmem:[#allocation3 + $0x50] sm:$0xff] %v3551
    %3568 = vst [vmem:[#allocation3 + $0x58] sm:$0xff] %v3552
    %3569 = vst [vmem:[#allocation3 + $0x60] sm:$0xff] %v3553
    %3570 = vst [vmem:[#allocation3 + $0x68] sm:$0xff] %v3554
    %3571 = vst [vmem:[#allocation3 + $0x70] sm:$0xff] %v3555
    %3572 = vst [vmem:[#allocation3 + $0x78] sm:$0xff] %v3556
    // Predicated region
    $region50: #{tpu_custom_call.1} parent=1 // pred_check
      _
    $region51: #{tpu_custom_call.1} parent=1 // pred_check_branch
      %3574 = sbr.rel (0) target = $region53
    $region52: #{tpu_custom_call.1} parent=1 // pred_region
      %3576 = vsyncadd [#allocation4], 0
      %s3577 = sshll.u32 [#allocation3], 4
      %s3578 = int_to_ptr.vmem [resolvable:$true] %s3577
      %s3579 = sshll.u32 %s12, 4
      %s3580 = int_to_ptr.hbm [resolvable:$true] %s3579
      %3585 = dma.vmem_to_hbm [thread:$0]  %s3578, 2048, %s3580, [#allocation4], 512, 512, 32
    $region53: #{tpu_custom_call.1} parent=1 // pred_fallthru
      _
    // Predicated region
    $region54: #{tpu_custom_call.1} parent=1 // pred_check
      _
    $region55: #{tpu_custom_call.1} parent=1 // pred_check_branch
      %3587 = sbr.rel (0) target = $region57
    $region56: #{tpu_custom_call.1} parent=1 // pred_region
      %3589 = dma.done [#allocation4], 2048
    $region57: #{tpu_custom_call.1} parent=1 // pred_fallthru
      _
    %3590 = vsyncpa [#allocation4], 1

</llo_original>
